<compile_context>
chip_gen: v6e
topology: v6e:2x2x1
jax: 0.10.0
libtpu: 0.0.40
codegen_flags: <defaults>
</compile_context>

<pallas_src>
import functools

import jax
import jax.numpy as jnp
from jax import lax
from jax.experimental import pallas as pl
from jax.experimental.pallas import tpu as pltpu

HIDDEN = 512  # hard-coded by the module


def _round_up(v, m):
    return (v + m - 1) // m * m


def _decoder_chunk(u_pad):
    """Row-chunk size for the decoder matmul: bounds the [uc, tile_m] f32
    intermediate for large user counts; single chunk for small models."""
    if u_pad <= 512:
        return u_pad
    for c in (512, 384, 256, 128):
        if u_pad % c == 0:
            return c
    return u_pad  # unreachable: u_pad is a multiple of 128


def _ae_kernel(x_ref, w1_ref, b1_ref, w2_ref, b2_ref, w3_ref, b3_ref, o_ref,
               *, rating, uc):
    # x_ref: (u_pad, tile_m) column tile of x in its original layout
    # (bf16 if the wrapper already did an HBM pass, else f32 -> cast here).
    x = x_ref[...].astype(jnp.bfloat16)

    # encoder layer 1: h1T[h, t] = sum_u W1t[h, u] * x[u, t]
    # (the module's input transpose is fused by working in column layout)
    h1 = jnp.dot(w1_ref[...], x, preferred_element_type=jnp.float32)
    h1 = jnp.maximum(h1 + b1_ref[...], 0.0)            # (HIDDEN, tile_m)

    # encoder layer 2: Linear(512,512) -> Dropout (eval: identity) -> ReLU
    h2 = jnp.dot(w2_ref[...], h1.astype(jnp.bfloat16),
                 preferred_element_type=jnp.float32)
    h2 = jnp.maximum(h2 + b2_ref[...], 0.0)
    h2b = h2.astype(jnp.bfloat16)                       # (HIDDEN, tile_m)

    u_pad = o_ref.shape[0]
    n_uc = u_pad // uc

    def decode(w3_blk, b3_blk):
        # yT[u, t] = sum_h W3t[u, h] * h2T[h, t]  -> already output layout
        y = jnp.dot(w3_blk, h2b, preferred_element_type=jnp.float32) + b3_blk
        if rating == "binary":
            y = jnp.tanh(y)
        elif rating == "five-stars":
            # input rescale was folded into W1/b1; only the output affine remains
            y = 4.0 * jnp.clip(y, 0.0, 1.0) + 1.0
        return y.astype(o_ref.dtype)

    if n_uc == 1:
        o_ref[...] = decode(w3_ref[...], b3_ref[...])
    else:
        def body(c, carry):
            uo = pl.multiple_of(c * uc, 128)
            o_ref[pl.ds(uo, uc), :] = decode(w3_ref[pl.ds(uo, uc), :],
                                             b3_ref[pl.ds(uo, uc), :])
            return carry
        lax.fori_loop(0, n_uc, body, 0, unroll=False)


def prepare_params(params, rating, u_pad):
    """Fold the five-stars input rescale into layer 1, transpose weights to the
    kernel's column layout, pad the user axis to u_pad, cast weights to bf16
    (biases stay f32 column vectors)."""
    w1, b1, w2, b2, w3, b3 = [jnp.asarray(p, jnp.float32) for p in params]
    if rating == "five-stars":
        # relu(((x-1)/4) @ W1 + b1) == relu(x @ (W1/4) + b1 - sum(W1, 0)/4)
        b1 = b1 - jnp.sum(w1, axis=0, keepdims=True) / 4.0
        w1 = w1 / 4.0
    num_user = w1.shape[0]
    pad = u_pad - num_user

    w1t = w1.T                       # (HIDDEN, num_user)
    w2t = w2.T                       # (HIDDEN, HIDDEN)
    w3t = w3.T                       # (num_user, HIDDEN)
    b1t = b1.reshape(HIDDEN, 1)
    b2t = b2.reshape(HIDDEN, 1)
    b3t = b3.reshape(num_user, 1)
    if pad:
        w1t = jnp.pad(w1t, ((0, 0), (0, pad)))
        w3t = jnp.pad(w3t, ((0, pad), (0, 0)))
        b3t = jnp.pad(b3t, ((0, pad), (0, 0)))
    return (w1t.astype(jnp.bfloat16), b1t,
            w2t.astype(jnp.bfloat16), b2t,
            w3t.astype(jnp.bfloat16), b3t)


def _vmem_budget_bytes():
    """Usable per-core VMEM, queried from the hardware when possible."""
    cap = 64 << 20                      # conservative default (v7x per-TC VMEM)
    try:
        info = pltpu.get_tpu_info()
        cap = int(getattr(info, "vmem_capacity_bytes", cap) or cap)
    except Exception:
        pass
    return max(cap - (8 << 20), 16 << 20)   # headroom for compiler scratch


def _vmem_estimate(u_pad, tile_m, uc, x_bytes):
    """Conservative estimate: assume everything (even constant-index weight
    blocks) is double-buffered by the pipeline."""
    dbl = 2
    x_tile = dbl * u_pad * tile_m * x_bytes
    out_tile = dbl * u_pad * tile_m * 4
    weights = dbl * 2 * (HIDDEN * u_pad + HIDDEN * HIDDEN + u_pad * HIDDEN)
    biases = dbl * 4 * 128 * (2 * HIDDEN + u_pad)       # (N,1) cols lane-pad to 128
    interm = 4 * tile_m * (2 * HIDDEN + uc) + 2 * tile_m * (u_pad + HIDDEN)
    return x_tile + out_tile + weights + biases + interm + (2 << 20)


def ae_forward(x, params, rating, *, tile_m=512):
    """x: [num_user, num_item] float32. Returns [num_user, num_item] float32."""
    num_user, num_item = x.shape
    u_pad = _round_up(num_user, 128)

    # Item axis: no HBM padding unless narrower than one lane tile; ragged
    # tails are handled by Pallas edge-block masking (columns are independent).
    m_ext = max(num_item, 128)
    item_pad = m_ext - num_item

    tile_m = max(128, (tile_m // 128) * 128)
    tile_m = min(tile_m, (m_ext // 128) * 128)   # keep block <= array, 128-aligned

    uc = _decoder_chunk(u_pad)
    need_wrapper_pass = (u_pad != num_user) or (item_pad > 0)
    x_bytes = 2 if need_wrapper_pass else x.dtype.itemsize

    budget = _vmem_budget_bytes()
    while tile_m > 128 and _vmem_estimate(u_pad, tile_m, uc, x_bytes) > budget:
        tile_m -= 128
    grid_m = pl.cdiv(m_ext, tile_m)
    # NOTE: on v7x (2 TCs) an even grid_m balances the cores; left as-is here
    # since the chip generation is not reliably detectable at trace time.

    w1t, b1, w2t, b2, w3t, b3 = prepare_params(params, rating, u_pad)

    if need_wrapper_pass:
        # the pad already costs an HBM pass, so fuse the bf16 cast into it
        xp = jnp.pad(x.astype(jnp.bfloat16),
                     ((0, u_pad - num_user), (0, item_pad)))
    else:
        xp = x   # no extra HBM pass; cast to bf16 on the VPU inside the kernel

    kernel = functools.partial(_ae_kernel, rating=rating, uc=uc)
    full = lambda i: (0, 0)
    vmem_limit = int(min(budget,
                         max(_vmem_estimate(u_pad, tile_m, uc, x_bytes) + (4 << 20),
                             32 << 20)))

    out = pl.pallas_call(
        kernel,
        out_shape=jax.ShapeDtypeStruct((u_pad, m_ext), jnp.float32),
        grid_spec=pltpu.PrefetchScalarGridSpec(
            num_scalar_prefetch=0,
            grid=(grid_m,),
            in_specs=[
                pl.BlockSpec((u_pad, tile_m), lambda i: (0, i)),   # x column tile
                pl.BlockSpec((HIDDEN, u_pad), full),               # W1^T (bf16)
                pl.BlockSpec((HIDDEN, 1), full),                   # b1 col (f32)
                pl.BlockSpec((HIDDEN, HIDDEN), full),              # W2^T (bf16)
                pl.BlockSpec((HIDDEN, 1), full),                   # b2 col (f32)
                pl.BlockSpec((u_pad, HIDDEN), full),               # W3^T (bf16)
                pl.BlockSpec((u_pad, 1), full),                    # b3 col (f32)
            ],
            out_specs=pl.BlockSpec((u_pad, tile_m), lambda i: (0, i)),
        ),
        compiler_params=pltpu.CompilerParams(
            dimension_semantics=("parallel",),
            vmem_limit_bytes=vmem_limit),
    )(xp, w1t, b1, w2t, b2, w3t, b3)

    if u_pad != num_user or item_pad:
        out = out[:num_user, :num_item]
    return out


def init_params(num_user, key):
    """Deterministic init mimicking nn.Linear defaults (uniform +/-1/sqrt(fan_in)).
    Weights stored as [in_features, out_features], f32."""
    ks = jax.random.split(key, 6)

    def lin(kw, kb, fan_in, fan_out):
        bound = 1.0 / jnp.sqrt(fan_in)
        w = jax.random.uniform(kw, (fan_in, fan_out), jnp.float32, -bound, bound)
        b = jax.random.uniform(kb, (1, fan_out), jnp.float32, -bound, bound)
        return w, b

    w1, b1 = lin(ks[0], ks[1], num_user, HIDDEN)
    w2, b2 = lin(ks[2], ks[3], HIDDEN, HIDDEN)
    w3, b3 = lin(ks[4], ks[5], HIDDEN, num_user)
    return (w1, b1, w2, b2, w3, b3)


def ae_reference(x, params, rating):
    """Pure-JAX f32 reference faithful to the PyTorch module (eval mode)."""
    w1, b1, w2, b2, w3, b3 = params
    xt = x.T
    if rating == "five-stars":
        xt = (xt - 1.0) / 4.0
    h = jnp.maximum(xt @ w1 + b1, 0.0)
    h = jnp.maximum(h @ w2 + b2, 0.0)
    y = h @ w3 + b3
    if rating == "binary":
        y = jnp.tanh(y)
    elif rating == "five-stars":
        y = 4.0 * jnp.clip(y, 0.0, 1.0) + 1.0
    return y.T


if __name__ == "__main__":
    key = jax.random.PRNGKey(0)

    # (num_user, num_item):
    #   (256, 512): fully aligned, f32-x fast path, single grid step
    #   (200, 160): user-axis pad + ragged item edge block (tile 128, grid 2)
    #   (520, 384): user-axis pad + chunked decoder (u_pad=640, uc=128)
    for num_user, num_item in ((256, 512), (200, 160), (520, 384)):
        k_param, k_x = jax.random.split(jax.random.fold_in(key, num_user))
        params = init_params(num_user, k_param)
        # synthetic ratings in [1, 5]
        x = jax.random.uniform(k_x, (num_user, num_item), jnp.float32, 1.0, 5.0)

        for rating in ("binary", "five-stars"):
            out = jax.block_until_ready(ae_forward(x, params, rating))
            ref = ae_reference(x, params, rating)
            assert out.shape == (num_user, num_item)
            # bf16 weights/activations + f32 accumulation vs f32 reference;
            # quantization error grows with the contraction length (num_user).
            assert jnp.allclose(out, ref, atol=7.5e-2, rtol=5e-2), (
                f"mismatch rating={rating} shape=({num_user},{num_item}) "
                f"max_err={float(jnp.max(jnp.abs(out - ref)))}")

    print("KERNEL_OK")
</pallas_src>

<mosaic_0001>
module attributes {stable_mosaic.version = 11 : i64} {
  func.func @_ae_kernel(%arg0: i32, %arg1: memref<256x512xf32, #tpu.memory_space<vmem>>, %arg2: memref<512x256xbf16, #tpu.memory_space<vmem>>, %arg3: memref<512x1xf32, #tpu.memory_space<vmem>>, %arg4: memref<512x512xbf16, #tpu.memory_space<vmem>>, %arg5: memref<512x1xf32, #tpu.memory_space<vmem>>, %arg6: memref<256x512xbf16, #tpu.memory_space<vmem>>, %arg7: memref<256x1xf32, #tpu.memory_space<vmem>>, %arg8: memref<256x512xf32, #tpu.memory_space<vmem>>) attributes {dimension_semantics = [#tpu.dimension_semantics<parallel>], iteration_bounds = array<i64: 1>, scalar_prefetch = 0 : i64, scratch_operands = 0 : i64, tpu.core_type = #tpu.core_type<tc>, window_params = [{transform_indices = @transform_0, window_bounds = array<i64: 256, 512>}, {pipeline_mode = #tpu.pipeline_mode<synchronous>, transform_indices = @transform_1, window_bounds = array<i64: 512, 256>}, {pipeline_mode = #tpu.pipeline_mode<synchronous>, transform_indices = @transform_2, window_bounds = array<i64: 512, 1>}, {pipeline_mode = #tpu.pipeline_mode<synchronous>, transform_indices = @transform_3, window_bounds = array<i64: 512, 512>}, {pipeline_mode = #tpu.pipeline_mode<synchronous>, transform_indices = @transform_4, window_bounds = array<i64: 512, 1>}, {pipeline_mode = #tpu.pipeline_mode<synchronous>, transform_indices = @transform_5, window_bounds = array<i64: 256, 512>}, {pipeline_mode = #tpu.pipeline_mode<synchronous>, transform_indices = @transform_6, window_bounds = array<i64: 256, 1>}, {transform_indices = @transform_7, window_bounds = array<i64: 256, 512>}]} {
    %c0 = arith.constant 0 : index
    %c0_0 = arith.constant 0 : index
    %0 = vector.load %arg1[%c0, %c0_0] : memref<256x512xf32, #tpu.memory_space<vmem>>, vector<256x512xf32>
    %1 = arith.truncf %0 : vector<256x512xf32> to vector<256x512xbf16>
    %c0_1 = arith.constant 0 : index
    %c0_2 = arith.constant 0 : index
    %2 = vector.load %arg2[%c0_1, %c0_2] : memref<512x256xbf16, #tpu.memory_space<vmem>>, vector<512x256xbf16>
    %cst = arith.constant dense<0.000000e+00> : vector<512x512xf32>
    %3 = tpu.matmul %2, %1, %cst {dimension_numbers = #tpu.dot_dimension_numbers<[1], [0], [0], [1], [0, 0, 1, 1], [], []>} : vector<512x256xbf16>, vector<256x512xbf16>, vector<512x512xf32> -> vector<512x512xf32>
    %c0_3 = arith.constant 0 : index
    %c0_4 = arith.constant 0 : index
    %4 = vector.load %arg3[%c0_3, %c0_4] : memref<512x1xf32, #tpu.memory_space<vmem>>, vector<512x1xf32>
    %5 = vector.broadcast %4 : vector<512x1xf32> to vector<512x512xf32>
    %6 = arith.addf %3, %5 : vector<512x512xf32>
    %cst_5 = arith.constant 0.000000e+00 : f32
    %7 = vector.broadcast %cst_5 : f32 to vector<512x512xf32>
    %8 = arith.maximumf %6, %7 : vector<512x512xf32>
    %c0_6 = arith.constant 0 : index
    %c0_7 = arith.constant 0 : index
    %9 = vector.load %arg4[%c0_6, %c0_7] : memref<512x512xbf16, #tpu.memory_space<vmem>>, vector<512x512xbf16>
    %10 = arith.truncf %8 : vector<512x512xf32> to vector<512x512xbf16>
    %cst_8 = arith.constant dense<0.000000e+00> : vector<512x512xf32>
    %11 = tpu.matmul %9, %10, %cst_8 {dimension_numbers = #tpu.dot_dimension_numbers<[1], [0], [0], [1], [0, 0, 1, 1], [], []>} : vector<512x512xbf16>, vector<512x512xbf16>, vector<512x512xf32> -> vector<512x512xf32>
    %c0_9 = arith.constant 0 : index
    %c0_10 = arith.constant 0 : index
    %12 = vector.load %arg5[%c0_9, %c0_10] : memref<512x1xf32, #tpu.memory_space<vmem>>, vector<512x1xf32>
    %13 = vector.broadcast %12 : vector<512x1xf32> to vector<512x512xf32>
    %14 = arith.addf %11, %13 : vector<512x512xf32>
    %cst_11 = arith.constant 0.000000e+00 : f32
    %15 = vector.broadcast %cst_11 : f32 to vector<512x512xf32>
    %16 = arith.maximumf %14, %15 : vector<512x512xf32>
    %17 = arith.truncf %16 : vector<512x512xf32> to vector<512x512xbf16>
    %c0_12 = arith.constant 0 : index
    %c0_13 = arith.constant 0 : index
    %18 = vector.load %arg6[%c0_12, %c0_13] : memref<256x512xbf16, #tpu.memory_space<vmem>>, vector<256x512xbf16>
    %c0_14 = arith.constant 0 : index
    %c0_15 = arith.constant 0 : index
    %19 = vector.load %arg7[%c0_14, %c0_15] : memref<256x1xf32, #tpu.memory_space<vmem>>, vector<256x1xf32>
    %cst_16 = arith.constant dense<0.000000e+00> : vector<256x512xf32>
    %20 = tpu.matmul %18, %17, %cst_16 {dimension_numbers = #tpu.dot_dimension_numbers<[1], [0], [0], [1], [0, 0, 1, 1], [], []>} : vector<256x512xbf16>, vector<512x512xbf16>, vector<256x512xf32> -> vector<256x512xf32>
    %21 = vector.broadcast %19 : vector<256x1xf32> to vector<256x512xf32>
    %22 = arith.addf %20, %21 : vector<256x512xf32>
    %23 = math.tanh %22 : vector<256x512xf32>
    %c0_17 = arith.constant 0 : index
    %c0_18 = arith.constant 0 : index
    %24 = vector.load %arg8[%c0_17, %c0_18] : memref<256x512xf32, #tpu.memory_space<vmem>>, vector<256x512xf32>
    tpu.vector_store %arg8[%c0_17, %c0_18], %23 {strides = array<i32>} : memref<256x512xf32, #tpu.memory_space<vmem>>, vector<256x512xf32>,
    return
  }
  func.func @transform_0(%arg0: i32) -> (i32, i32) {
    %c0_i32 = arith.constant 0 : i32
    %c0_i32_0 = arith.constant 0 : i32
    return %c0_i32, %arg0 : i32, i32
  }
  func.func @transform_1(%arg0: i32) -> (i32, i32) {
    %c0_i32 = arith.constant 0 : i32
    %c0_i32_0 = arith.constant 0 : i32
    %c0_i32_1 = arith.constant 0 : i32
    return %c0_i32, %c0_i32_0 : i32, i32
  }
  func.func @transform_2(%arg0: i32) -> (i32, i32) {
    %c0_i32 = arith.constant 0 : i32
    %c0_i32_0 = arith.constant 0 : i32
    %c0_i32_1 = arith.constant 0 : i32
    return %c0_i32, %c0_i32_0 : i32, i32
  }
  func.func @transform_3(%arg0: i32) -> (i32, i32) {
    %c0_i32 = arith.constant 0 : i32
    %c0_i32_0 = arith.constant 0 : i32
    %c0_i32_1 = arith.constant 0 : i32
    return %c0_i32, %c0_i32_0 : i32, i32
  }
  func.func @transform_4(%arg0: i32) -> (i32, i32) {
    %c0_i32 = arith.constant 0 : i32
    %c0_i32_0 = arith.constant 0 : i32
    %c0_i32_1 = arith.constant 0 : i32
    return %c0_i32, %c0_i32_0 : i32, i32
  }
  func.func @transform_5(%arg0: i32) -> (i32, i32) {
    %c0_i32 = arith.constant 0 : i32
    %c0_i32_0 = arith.constant 0 : i32
    %c0_i32_1 = arith.constant 0 : i32
    return %c0_i32, %c0_i32_0 : i32, i32
  }
  func.func @transform_6(%arg0: i32) -> (i32, i32) {
    %c0_i32 = arith.constant 0 : i32
    %c0_i32_0 = arith.constant 0 : i32
    %c0_i32_1 = arith.constant 0 : i32
    return %c0_i32, %c0_i32_0 : i32, i32
  }
  func.func @transform_7(%arg0: i32) -> (i32, i32) {
    %c0_i32 = arith.constant 0 : i32
    %c0_i32_0 = arith.constant 0 : i32
    return %c0_i32, %arg0 : i32, i32
  }
}

</mosaic_0001>

<llo_original>
// kernel: tpu_custom_call.1
$region0: #{tpu_custom_call.1}
  #allocation0 [shape = 'u32[]', space=smem, size = 0x4, offset = 0x4, fixed_abs, tag = 'smem constant byte address 0x4 - core index']
  #allocation1 [shape = 'u32[144,128]{1,0:T(1,128)}', space=vmem, size = 0x12000, scoped, tag = 'internal scratch']
  %s0 = inlined_call_operand.vmem [shape: f32[256,512], index: 0, kind: input, shape index: {}]
  %s1 = inlined_call_operand.hbm [shape: bf16[512,256], index: 1, kind: input, shape index: {}]
  %s2 = inlined_call_operand.vmem [shape: f32[512,1], index: 2, kind: input, shape index: {}]
  %s3 = inlined_call_operand.hbm [shape: bf16[512,512], index: 3, kind: input, shape index: {}]
  %s4 = inlined_call_operand.vmem [shape: f32[512,1], index: 4, kind: input, shape index: {}]
  %s5 = inlined_call_operand.hbm [shape: bf16[256,512], index: 5, kind: input, shape index: {}]
  %s6 = inlined_call_operand.vmem [shape: f32[256,1], index: 6, kind: input, shape index: {}]
  %s7 = inlined_call_operand.hbm [shape: f32[256,512], index: 7, kind: output, shape index: {}]
  %s8 = sld [smem:[#allocation0]]
  $region50: #{tpu_custom_call.1} parent=0
    _
  %s10 = ssub.s32 1, %s8
  %s11 = scalar_select 0, %s10, %s8
  $region1: #{tpu_custom_call.1} parent=0
    #allocation2 [shape = 'u8[262144]{0}', space=vmem, size = 0x40000, scoped, tag = 'input window, operand 1, single buffered']
    #allocation3 [shape = 's32[1]{0}', space=sflag, size = 0x4, scoped, tag = 'scoped memory for tpu_custom_call.1']
    #allocation4 [shape = 's32[1]{0}', space=sflag, size = 0x4, scoped, tag = 'scoped memory for tpu_custom_call.1']
    #allocation5 [shape = 'u8[524288]{0}', space=vmem, size = 0x80000, scoped, tag = 'input window, operand 3, single buffered']
    #allocation6 [shape = 's32[1]{0}', space=sflag, size = 0x4, scoped, tag = 'scoped memory for tpu_custom_call.1']
    #allocation7 [shape = 'u8[262144]{0}', space=vmem, size = 0x40000, scoped, tag = 'input window, operand 5, single buffered']
    #allocation8 [shape = 'u8[524288]{0}', space=vmem, size = 0x80000, scoped, tag = 'output window, operand 0, single buffered']
    %12 = vsyncpa [#allocation3], 0
    %13 = vsyncpa [#allocation6], 0
    %14 = vsyncpa [#allocation4], 0
    // Predicated region
    $region2: #{tpu_custom_call.1} parent=1 // pred_check
      _
    $region3: #{tpu_custom_call.1} parent=1 // pred_check_branch
      %16 = sbr.rel (0) target = $region5
    $region4: #{tpu_custom_call.1} parent=1 // pred_region
      _
    $region5: #{tpu_custom_call.1} parent=1 // pred_fallthru
      _
    // Predicated region
    $region6: #{tpu_custom_call.1} parent=1 // pred_check
      _
    $region7: #{tpu_custom_call.1} parent=1 // pred_check_branch
      %18 = sbr.rel (0) target = $region9
    $region8: #{tpu_custom_call.1} parent=1 // pred_region
      %s20 = ssub.s32 8192, 8192
      %21 = vsyncadd [#allocation3], %s20
      %s22 = sshll.u32 [#allocation2], 4
      %s23 = int_to_ptr.vmem [resolvable:$true] %s22
      %28 = dma.hbm_to_vmem [thread:$0]  %s1, 8192, %s23, [#allocation3], 128, 128, 8
    $region9: #{tpu_custom_call.1} parent=1 // pred_fallthru
      _
    // Predicated region
    $region10: #{tpu_custom_call.1} parent=1 // pred_check
      _
    $region11: #{tpu_custom_call.1} parent=1 // pred_check_branch
      %30 = sbr.rel (0) target = $region13
    $region12: #{tpu_custom_call.1} parent=1 // pred_region
      _
    $region13: #{tpu_custom_call.1} parent=1 // pred_fallthru
      _
    // Predicated region
    $region14: #{tpu_custom_call.1} parent=1 // pred_check
      _
    $region15: #{tpu_custom_call.1} parent=1 // pred_check_branch
      %32 = sbr.rel (0) target = $region17
    $region16: #{tpu_custom_call.1} parent=1 // pred_region
      %s34 = ssub.s32 16384, 16384
      %35 = vsyncadd [#allocation6], %s34
      %s36 = sshll.u32 [#allocation5], 4
      %s37 = int_to_ptr.vmem [resolvable:$true] %s36
      %42 = dma.hbm_to_vmem [thread:$0]  %s3, 16384, %s37, [#allocation6], 256, 256, 16
    $region17: #{tpu_custom_call.1} parent=1 // pred_fallthru
      _
    // Predicated region
    $region18: #{tpu_custom_call.1} parent=1 // pred_check
      _
    $region19: #{tpu_custom_call.1} parent=1 // pred_check_branch
      %44 = sbr.rel (0) target = $region21
    $region20: #{tpu_custom_call.1} parent=1 // pred_region
      _
    $region21: #{tpu_custom_call.1} parent=1 // pred_fallthru
      _
    // Predicated region
    $region22: #{tpu_custom_call.1} parent=1 // pred_check
      _
    $region23: #{tpu_custom_call.1} parent=1 // pred_check_branch
      %46 = sbr.rel (0) target = $region25
    $region24: #{tpu_custom_call.1} parent=1 // pred_region
      %s48 = ssub.s32 8192, 8192
      %49 = vsyncadd [#allocation6], %s48
      %s50 = sshll.u32 [#allocation7], 4
      %s51 = int_to_ptr.vmem [resolvable:$true] %s50
      %56 = dma.hbm_to_vmem [thread:$0]  %s5, 8192, %s51, [#allocation6], 256, 256, 16
    $region25: #{tpu_custom_call.1} parent=1 // pred_fallthru
      _
    // Predicated region
    $region26: #{tpu_custom_call.1} parent=1 // pred_check
      _
    $region27: #{tpu_custom_call.1} parent=1 // pred_check_branch
      %58 = sbr.rel (0) target = $region29
    $region28: #{tpu_custom_call.1} parent=1 // pred_region
      _
    $region29: #{tpu_custom_call.1} parent=1 // pred_fallthru
      _
    // Predicated region
    $region30: #{tpu_custom_call.1} parent=1 // pred_check
      _
    $region31: #{tpu_custom_call.1} parent=1 // pred_check_branch
      %60 = sbr.rel (0) target = $region33
    $region32: #{tpu_custom_call.1} parent=1 // pred_region
      %61 = dma.done [#allocation3], 8192
    $region33: #{tpu_custom_call.1} parent=1 // pred_fallthru
      _
    // Predicated region
    $region34: #{tpu_custom_call.1} parent=1 // pred_check
      _
    $region35: #{tpu_custom_call.1} parent=1 // pred_check_branch
      %63 = sbr.rel (0) target = $region37
    $region36: #{tpu_custom_call.1} parent=1 // pred_region
      %64 = dma.done [#allocation6], 16384
    $region37: #{tpu_custom_call.1} parent=1 // pred_fallthru
      _
    // Predicated region
    $region38: #{tpu_custom_call.1} parent=1 // pred_check
      _
    $region39: #{tpu_custom_call.1} parent=1 // pred_check_branch
      %66 = sbr.rel (0) target = $region41
    $region40: #{tpu_custom_call.1} parent=1 // pred_region
      %67 = dma.done [#allocation6], 8192
    $region41: #{tpu_custom_call.1} parent=1 // pred_fallthru
      _
    %v68 = vld [vmem:[%s0] sm:$0xff]
    %v69 = vld [vmem:[%s0 + $0x8] sm:$0xff]
    %v70 = vld [vmem:[%s0 + $0x10] sm:$0xff]
    %v71 = vld [vmem:[%s0 + $0x18] sm:$0xff]
    %v72 = vld [vmem:[%s0 + $0x20] sm:$0xff]
    %v73 = vld [vmem:[%s0 + $0x28] sm:$0xff]
    %v74 = vld [vmem:[%s0 + $0x30] sm:$0xff]
    %v75 = vld [vmem:[%s0 + $0x38] sm:$0xff]
    %v76 = vld [vmem:[%s0 + $0x40] sm:$0xff]
    %v77 = vld [vmem:[%s0 + $0x48] sm:$0xff]
    %v78 = vld [vmem:[%s0 + $0x50] sm:$0xff]
    %v79 = vld [vmem:[%s0 + $0x58] sm:$0xff]
    %v80 = vld [vmem:[%s0 + $0x60] sm:$0xff]
    %v81 = vld [vmem:[%s0 + $0x68] sm:$0xff]
    %v82 = vld [vmem:[%s0 + $0x70] sm:$0xff]
    %v83 = vld [vmem:[%s0 + $0x78] sm:$0xff]
    %v84 = vld [vmem:[%s0 + $0x80] sm:$0xff]
    %v85 = vld [vmem:[%s0 + $0x88] sm:$0xff]
    %v86 = vld [vmem:[%s0 + $0x90] sm:$0xff]
    %v87 = vld [vmem:[%s0 + $0x98] sm:$0xff]
    %v88 = vld [vmem:[%s0 + $0xa0] sm:$0xff]
    %v89 = vld [vmem:[%s0 + $0xa8] sm:$0xff]
    %v90 = vld [vmem:[%s0 + $0xb0] sm:$0xff]
    %v91 = vld [vmem:[%s0 + $0xb8] sm:$0xff]
    %v92 = vld [vmem:[%s0 + $0xc0] sm:$0xff]
    %v93 = vld [vmem:[%s0 + $0xc8] sm:$0xff]
    %v94 = vld [vmem:[%s0 + $0xd0] sm:$0xff]
    %v95 = vld [vmem:[%s0 + $0xd8] sm:$0xff]
    %v96 = vld [vmem:[%s0 + $0xe0] sm:$0xff]
    %v97 = vld [vmem:[%s0 + $0xe8] sm:$0xff]
    %v98 = vld [vmem:[%s0 + $0xf0] sm:$0xff]
    %v99 = vld [vmem:[%s0 + $0xf8] sm:$0xff]
    %v100 = vld [vmem:[%s0 + $0x100] sm:$0xff]
    %v101 = vld [vmem:[%s0 + $0x108] sm:$0xff]
    %v102 = vld [vmem:[%s0 + $0x110] sm:$0xff]
    %v103 = vld [vmem:[%s0 + $0x118] sm:$0xff]
    %v104 = vld [vmem:[%s0 + $0x120] sm:$0xff]
    %v105 = vld [vmem:[%s0 + $0x128] sm:$0xff]
    %v106 = vld [vmem:[%s0 + $0x130] sm:$0xff]
    %v107 = vld [vmem:[%s0 + $0x138] sm:$0xff]
    %v108 = vld [vmem:[%s0 + $0x140] sm:$0xff]
    %v109 = vld [vmem:[%s0 + $0x148] sm:$0xff]
    %v110 = vld [vmem:[%s0 + $0x150] sm:$0xff]
    %v111 = vld [vmem:[%s0 + $0x158] sm:$0xff]
    %v112 = vld [vmem:[%s0 + $0x160] sm:$0xff]
    %v113 = vld [vmem:[%s0 + $0x168] sm:$0xff]
    %v114 = vld [vmem:[%s0 + $0x170] sm:$0xff]
    %v115 = vld [vmem:[%s0 + $0x178] sm:$0xff]
    %v116 = vld [vmem:[%s0 + $0x180] sm:$0xff]
    %v117 = vld [vmem:[%s0 + $0x188] sm:$0xff]
    %v118 = vld [vmem:[%s0 + $0x190] sm:$0xff]
    %v119 = vld [vmem:[%s0 + $0x198] sm:$0xff]
    %v120 = vld [vmem:[%s0 + $0x1a0] sm:$0xff]
    %v121 = vld [vmem:[%s0 + $0x1a8] sm:$0xff]
    %v122 = vld [vmem:[%s0 + $0x1b0] sm:$0xff]
    %v123 = vld [vmem:[%s0 + $0x1b8] sm:$0xff]
    %v124 = vld [vmem:[%s0 + $0x1c0] sm:$0xff]
    %v125 = vld [vmem:[%s0 + $0x1c8] sm:$0xff]
    %v126 = vld [vmem:[%s0 + $0x1d0] sm:$0xff]
    %v127 = vld [vmem:[%s0 + $0x1d8] sm:$0xff]
    %v128 = vld [vmem:[%s0 + $0x1e0] sm:$0xff]
    %v129 = vld [vmem:[%s0 + $0x1e8] sm:$0xff]
    %v130 = vld [vmem:[%s0 + $0x1f0] sm:$0xff]
    %v131 = vld [vmem:[%s0 + $0x1f8] sm:$0xff]
    %v132 = vld [vmem:[%s0 + $0x200] sm:$0xff]
    %v133 = vld [vmem:[%s0 + $0x208] sm:$0xff]
    %v134 = vld [vmem:[%s0 + $0x210] sm:$0xff]
    %v135 = vld [vmem:[%s0 + $0x218] sm:$0xff]
    %v136 = vld [vmem:[%s0 + $0x220] sm:$0xff]
    %v137 = vld [vmem:[%s0 + $0x228] sm:$0xff]
    %v138 = vld [vmem:[%s0 + $0x230] sm:$0xff]
    %v139 = vld [vmem:[%s0 + $0x238] sm:$0xff]
    %v140 = vld [vmem:[%s0 + $0x240] sm:$0xff]
    %v141 = vld [vmem:[%s0 + $0x248] sm:$0xff]
    %v142 = vld [vmem:[%s0 + $0x250] sm:$0xff]
    %v143 = vld [vmem:[%s0 + $0x258] sm:$0xff]
    %v144 = vld [vmem:[%s0 + $0x260] sm:$0xff]
    %v145 = vld [vmem:[%s0 + $0x268] sm:$0xff]
    %v146 = vld [vmem:[%s0 + $0x270] sm:$0xff]
    %v147 = vld [vmem:[%s0 + $0x278] sm:$0xff]
    %v148 = vld [vmem:[%s0 + $0x280] sm:$0xff]
    %v149 = vld [vmem:[%s0 + $0x288] sm:$0xff]
    %v150 = vld [vmem:[%s0 + $0x290] sm:$0xff]
    %v151 = vld [vmem:[%s0 + $0x298] sm:$0xff]
    %v152 = vld [vmem:[%s0 + $0x2a0] sm:$0xff]
    %v153 = vld [vmem:[%s0 + $0x2a8] sm:$0xff]
    %v154 = vld [vmem:[%s0 + $0x2b0] sm:$0xff]
    %v155 = vld [vmem:[%s0 + $0x2b8] sm:$0xff]
    %v156 = vld [vmem:[%s0 + $0x2c0] sm:$0xff]
    %v157 = vld [vmem:[%s0 + $0x2c8] sm:$0xff]
    %v158 = vld [vmem:[%s0 + $0x2d0] sm:$0xff]
    %v159 = vld [vmem:[%s0 + $0x2d8] sm:$0xff]
    %v160 = vld [vmem:[%s0 + $0x2e0] sm:$0xff]
    %v161 = vld [vmem:[%s0 + $0x2e8] sm:$0xff]
    %v162 = vld [vmem:[%s0 + $0x2f0] sm:$0xff]
    %v163 = vld [vmem:[%s0 + $0x2f8] sm:$0xff]
    %v164 = vld [vmem:[%s0 + $0x300] sm:$0xff]
    %v165 = vld [vmem:[%s0 + $0x308] sm:$0xff]
    %v166 = vld [vmem:[%s0 + $0x310] sm:$0xff]
    %v167 = vld [vmem:[%s0 + $0x318] sm:$0xff]
    %v168 = vld [vmem:[%s0 + $0x320] sm:$0xff]
    %v169 = vld [vmem:[%s0 + $0x328] sm:$0xff]
    %v170 = vld [vmem:[%s0 + $0x330] sm:$0xff]
    %v171 = vld [vmem:[%s0 + $0x338] sm:$0xff]
    %v172 = vld [vmem:[%s0 + $0x340] sm:$0xff]
    %v173 = vld [vmem:[%s0 + $0x348] sm:$0xff]
    %v174 = vld [vmem:[%s0 + $0x350] sm:$0xff]
    %v175 = vld [vmem:[%s0 + $0x358] sm:$0xff]
    %v176 = vld [vmem:[%s0 + $0x360] sm:$0xff]
    %v177 = vld [vmem:[%s0 + $0x368] sm:$0xff]
    %v178 = vld [vmem:[%s0 + $0x370] sm:$0xff]
    %v179 = vld [vmem:[%s0 + $0x378] sm:$0xff]
    %v180 = vld [vmem:[%s0 + $0x380] sm:$0xff]
    %v181 = vld [vmem:[%s0 + $0x388] sm:$0xff]
    %v182 = vld [vmem:[%s0 + $0x390] sm:$0xff]
    %v183 = vld [vmem:[%s0 + $0x398] sm:$0xff]
    %v184 = vld [vmem:[%s0 + $0x3a0] sm:$0xff]
    %v185 = vld [vmem:[%s0 + $0x3a8] sm:$0xff]
    %v186 = vld [vmem:[%s0 + $0x3b0] sm:$0xff]
    %v187 = vld [vmem:[%s0 + $0x3b8] sm:$0xff]
    %v188 = vld [vmem:[%s0 + $0x3c0] sm:$0xff]
    %v189 = vld [vmem:[%s0 + $0x3c8] sm:$0xff]
    %v190 = vld [vmem:[%s0 + $0x3d0] sm:$0xff]
    %v191 = vld [vmem:[%s0 + $0x3d8] sm:$0xff]
    %v192 = vld [vmem:[%s0 + $0x3e0] sm:$0xff]
    %v193 = vld [vmem:[%s0 + $0x3e8] sm:$0xff]
    %v194 = vld [vmem:[%s0 + $0x3f0] sm:$0xff]
    %v195 = vld [vmem:[%s0 + $0x3f8] sm:$0xff]
    %v196 = vpack.c.bf16 %v72, %v68
    %v197 = vpack.c.bf16 %v73, %v69
    %v198 = vpack.c.bf16 %v74, %v70
    %v199 = vpack.c.bf16 %v75, %v71
    %v200 = vpack.c.bf16 %v80, %v76
    %v201 = vpack.c.bf16 %v81, %v77
    %v202 = vpack.c.bf16 %v82, %v78
    %v203 = vpack.c.bf16 %v83, %v79
    %v204 = vpack.c.bf16 %v88, %v84
    %v205 = vpack.c.bf16 %v89, %v85
    %v206 = vpack.c.bf16 %v90, %v86
    %v207 = vpack.c.bf16 %v91, %v87
    %v208 = vpack.c.bf16 %v96, %v92
    %v209 = vpack.c.bf16 %v97, %v93
    %v210 = vpack.c.bf16 %v98, %v94
    %v211 = vpack.c.bf16 %v99, %v95
    %v212 = vpack.c.bf16 %v104, %v100
    %v213 = vpack.c.bf16 %v105, %v101
    %v214 = vpack.c.bf16 %v106, %v102
    %v215 = vpack.c.bf16 %v107, %v103
    %v216 = vpack.c.bf16 %v112, %v108
    %v217 = vpack.c.bf16 %v113, %v109
    %v218 = vpack.c.bf16 %v114, %v110
    %v219 = vpack.c.bf16 %v115, %v111
    %v220 = vpack.c.bf16 %v120, %v116
    %v221 = vpack.c.bf16 %v121, %v117
    %v222 = vpack.c.bf16 %v122, %v118
    %v223 = vpack.c.bf16 %v123, %v119
    %v224 = vpack.c.bf16 %v128, %v124
    %v225 = vpack.c.bf16 %v129, %v125
    %v226 = vpack.c.bf16 %v130, %v126
    %v227 = vpack.c.bf16 %v131, %v127
    %v228 = vpack.c.bf16 %v136, %v132
    %v229 = vpack.c.bf16 %v137, %v133
    %v230 = vpack.c.bf16 %v138, %v134
    %v231 = vpack.c.bf16 %v139, %v135
    %v232 = vpack.c.bf16 %v144, %v140
    %v233 = vpack.c.bf16 %v145, %v141
    %v234 = vpack.c.bf16 %v146, %v142
    %v235 = vpack.c.bf16 %v147, %v143
    %v236 = vpack.c.bf16 %v152, %v148
    %v237 = vpack.c.bf16 %v153, %v149
    %v238 = vpack.c.bf16 %v154, %v150
    %v239 = vpack.c.bf16 %v155, %v151
    %v240 = vpack.c.bf16 %v160, %v156
    %v241 = vpack.c.bf16 %v161, %v157
    %v242 = vpack.c.bf16 %v162, %v158
    %v243 = vpack.c.bf16 %v163, %v159
    %v244 = vpack.c.bf16 %v168, %v164
    %v245 = vpack.c.bf16 %v169, %v165
    %v246 = vpack.c.bf16 %v170, %v166
    %v247 = vpack.c.bf16 %v171, %v167
    %v248 = vpack.c.bf16 %v176, %v172
    %v249 = vpack.c.bf16 %v177, %v173
    %v250 = vpack.c.bf16 %v178, %v174
    %v251 = vpack.c.bf16 %v179, %v175
    %v252 = vpack.c.bf16 %v184, %v180
    %v253 = vpack.c.bf16 %v185, %v181
    %v254 = vpack.c.bf16 %v186, %v182
    %v255 = vpack.c.bf16 %v187, %v183
    %v256 = vpack.c.bf16 %v192, %v188
    %v257 = vpack.c.bf16 %v193, %v189
    %v258 = vpack.c.bf16 %v194, %v190
    %v259 = vpack.c.bf16 %v195, %v191
    %v260 = vld [vmem:[#allocation2] sm:$0xff]
    %v261 = vld [vmem:[#allocation2 + $0x8] sm:$0xff]
    %v262 = vld [vmem:[#allocation2 + $0x10] sm:$0xff]
    %v263 = vld [vmem:[#allocation2 + $0x18] sm:$0xff]
    %v264 = vld [vmem:[#allocation2 + $0x20] sm:$0xff]
    %v265 = vld [vmem:[#allocation2 + $0x28] sm:$0xff]
    %v266 = vld [vmem:[#allocation2 + $0x30] sm:$0xff]
    %v267 = vld [vmem:[#allocation2 + $0x38] sm:$0xff]
    %v268 = vld [vmem:[#allocation2 + $0x40] sm:$0xff]
    %v269 = vld [vmem:[#allocation2 + $0x48] sm:$0xff]
    %v270 = vld [vmem:[#allocation2 + $0x50] sm:$0xff]
    %v271 = vld [vmem:[#allocation2 + $0x58] sm:$0xff]
    %v272 = vld [vmem:[#allocation2 + $0x60] sm:$0xff]
    %v273 = vld [vmem:[#allocation2 + $0x68] sm:$0xff]
    %v274 = vld [vmem:[#allocation2 + $0x70] sm:$0xff]
    %v275 = vld [vmem:[#allocation2 + $0x78] sm:$0xff]
    %v276 = vld [vmem:[#allocation2 + $0x80] sm:$0xff]
    %v277 = vld [vmem:[#allocation2 + $0x88] sm:$0xff]
    %v278 = vld [vmem:[#allocation2 + $0x90] sm:$0xff]
    %v279 = vld [vmem:[#allocation2 + $0x98] sm:$0xff]
    %v280 = vld [vmem:[#allocation2 + $0xa0] sm:$0xff]
    %v281 = vld [vmem:[#allocation2 + $0xa8] sm:$0xff]
    %v282 = vld [vmem:[#allocation2 + $0xb0] sm:$0xff]
    %v283 = vld [vmem:[#allocation2 + $0xb8] sm:$0xff]
    %v284 = vld [vmem:[#allocation2 + $0xc0] sm:$0xff]
    %v285 = vld [vmem:[#allocation2 + $0xc8] sm:$0xff]
    %v286 = vld [vmem:[#allocation2 + $0xd0] sm:$0xff]
    %v287 = vld [vmem:[#allocation2 + $0xd8] sm:$0xff]
    %v288 = vld [vmem:[#allocation2 + $0xe0] sm:$0xff]
    %v289 = vld [vmem:[#allocation2 + $0xe8] sm:$0xff]
    %v290 = vld [vmem:[#allocation2 + $0xf0] sm:$0xff]
    %v291 = vld [vmem:[#allocation2 + $0xf8] sm:$0xff]
    %v292 = vld [vmem:[#allocation2 + $0x100] sm:$0xff]
    %v293 = vld [vmem:[#allocation2 + $0x108] sm:$0xff]
    %v294 = vld [vmem:[#allocation2 + $0x110] sm:$0xff]
    %v295 = vld [vmem:[#allocation2 + $0x118] sm:$0xff]
    %v296 = vld [vmem:[#allocation2 + $0x120] sm:$0xff]
    %v297 = vld [vmem:[#allocation2 + $0x128] sm:$0xff]
    %v298 = vld [vmem:[#allocation2 + $0x130] sm:$0xff]
    %v299 = vld [vmem:[#allocation2 + $0x138] sm:$0xff]
    %v300 = vld [vmem:[#allocation2 + $0x140] sm:$0xff]
    %v301 = vld [vmem:[#allocation2 + $0x148] sm:$0xff]
    %v302 = vld [vmem:[#allocation2 + $0x150] sm:$0xff]
    %v303 = vld [vmem:[#allocation2 + $0x158] sm:$0xff]
    %v304 = vld [vmem:[#allocation2 + $0x160] sm:$0xff]
    %v305 = vld [vmem:[#allocation2 + $0x168] sm:$0xff]
    %v306 = vld [vmem:[#allocation2 + $0x170] sm:$0xff]
    %v307 = vld [vmem:[#allocation2 + $0x178] sm:$0xff]
    %v308 = vld [vmem:[#allocation2 + $0x180] sm:$0xff]
    %v309 = vld [vmem:[#allocation2 + $0x188] sm:$0xff]
    %v310 = vld [vmem:[#allocation2 + $0x190] sm:$0xff]
    %v311 = vld [vmem:[#allocation2 + $0x198] sm:$0xff]
    %v312 = vld [vmem:[#allocation2 + $0x1a0] sm:$0xff]
    %v313 = vld [vmem:[#allocation2 + $0x1a8] sm:$0xff]
    %v314 = vld [vmem:[#allocation2 + $0x1b0] sm:$0xff]
    %v315 = vld [vmem:[#allocation2 + $0x1b8] sm:$0xff]
    %v316 = vld [vmem:[#allocation2 + $0x1c0] sm:$0xff]
    %v317 = vld [vmem:[#allocation2 + $0x1c8] sm:$0xff]
    %v318 = vld [vmem:[#allocation2 + $0x1d0] sm:$0xff]
    %v319 = vld [vmem:[#allocation2 + $0x1d8] sm:$0xff]
    %v320 = vld [vmem:[#allocation2 + $0x1e0] sm:$0xff]
    %v321 = vld [vmem:[#allocation2 + $0x1e8] sm:$0xff]
    %v322 = vld [vmem:[#allocation2 + $0x1f0] sm:$0xff]
    %v323 = vld [vmem:[#allocation2 + $0x1f8] sm:$0xff]
    %v324 = vld [vmem:[%s2] sm:$0xff]
    %v325 = vld [vmem:[%s2 + $0x8] sm:$0xff]
    %v326 = vld [vmem:[%s2 + $0x10] sm:$0xff]
    %v327 = vld [vmem:[%s2 + $0x18] sm:$0xff]
    %v328 = vld [vmem:[%s2 + $0x20] sm:$0xff]
    %v329 = vld [vmem:[%s2 + $0x28] sm:$0xff]
    %v330 = vld [vmem:[%s2 + $0x30] sm:$0xff]
    %v331 = vld [vmem:[%s2 + $0x38] sm:$0xff]
    %v332 = vld [vmem:[%s2 + $0x40] sm:$0xff]
    %v333 = vld [vmem:[%s2 + $0x48] sm:$0xff]
    %v334 = vld [vmem:[%s2 + $0x50] sm:$0xff]
    %v335 = vld [vmem:[%s2 + $0x58] sm:$0xff]
    %v336 = vld [vmem:[%s2 + $0x60] sm:$0xff]
    %v337 = vld [vmem:[%s2 + $0x68] sm:$0xff]
    %v338 = vld [vmem:[%s2 + $0x70] sm:$0xff]
    %v339 = vld [vmem:[%s2 + $0x78] sm:$0xff]
    %v340 = vld [vmem:[%s2 + $0x80] sm:$0xff]
    %v341 = vld [vmem:[%s2 + $0x88] sm:$0xff]
    %v342 = vld [vmem:[%s2 + $0x90] sm:$0xff]
    %v343 = vld [vmem:[%s2 + $0x98] sm:$0xff]
    %v344 = vld [vmem:[%s2 + $0xa0] sm:$0xff]
    %v345 = vld [vmem:[%s2 + $0xa8] sm:$0xff]
    %v346 = vld [vmem:[%s2 + $0xb0] sm:$0xff]
    %v347 = vld [vmem:[%s2 + $0xb8] sm:$0xff]
    %v348 = vld [vmem:[%s2 + $0xc0] sm:$0xff]
    %v349 = vld [vmem:[%s2 + $0xc8] sm:$0xff]
    %v350 = vld [vmem:[%s2 + $0xd0] sm:$0xff]
    %v351 = vld [vmem:[%s2 + $0xd8] sm:$0xff]
    %v352 = vld [vmem:[%s2 + $0xe0] sm:$0xff]
    %v353 = vld [vmem:[%s2 + $0xe8] sm:$0xff]
    %v354 = vld [vmem:[%s2 + $0xf0] sm:$0xff]
    %v355 = vld [vmem:[%s2 + $0xf8] sm:$0xff]
    %v356 = vld [vmem:[%s2 + $0x100] sm:$0xff]
    %v357 = vld [vmem:[%s2 + $0x108] sm:$0xff]
    %v358 = vld [vmem:[%s2 + $0x110] sm:$0xff]
    %v359 = vld [vmem:[%s2 + $0x118] sm:$0xff]
    %v360 = vld [vmem:[%s2 + $0x120] sm:$0xff]
    %v361 = vld [vmem:[%s2 + $0x128] sm:$0xff]
    %v362 = vld [vmem:[%s2 + $0x130] sm:$0xff]
    %v363 = vld [vmem:[%s2 + $0x138] sm:$0xff]
    %v364 = vld [vmem:[%s2 + $0x140] sm:$0xff]
    %v365 = vld [vmem:[%s2 + $0x148] sm:$0xff]
    %v366 = vld [vmem:[%s2 + $0x150] sm:$0xff]
    %v367 = vld [vmem:[%s2 + $0x158] sm:$0xff]
    %v368 = vld [vmem:[%s2 + $0x160] sm:$0xff]
    %v369 = vld [vmem:[%s2 + $0x168] sm:$0xff]
    %v370 = vld [vmem:[%s2 + $0x170] sm:$0xff]
    %v371 = vld [vmem:[%s2 + $0x178] sm:$0xff]
    %v372 = vld [vmem:[%s2 + $0x180] sm:$0xff]
    %v373 = vld [vmem:[%s2 + $0x188] sm:$0xff]
    %v374 = vld [vmem:[%s2 + $0x190] sm:$0xff]
    %v375 = vld [vmem:[%s2 + $0x198] sm:$0xff]
    %v376 = vld [vmem:[%s2 + $0x1a0] sm:$0xff]
    %v377 = vld [vmem:[%s2 + $0x1a8] sm:$0xff]
    %v378 = vld [vmem:[%s2 + $0x1b0] sm:$0xff]
    %v379 = vld [vmem:[%s2 + $0x1b8] sm:$0xff]
    %v380 = vld [vmem:[%s2 + $0x1c0] sm:$0xff]
    %v381 = vld [vmem:[%s2 + $0x1c8] sm:$0xff]
    %v382 = vld [vmem:[%s2 + $0x1d0] sm:$0xff]
    %v383 = vld [vmem:[%s2 + $0x1d8] sm:$0xff]
    %v384 = vld [vmem:[%s2 + $0x1e0] sm:$0xff]
    %v385 = vld [vmem:[%s2 + $0x1e8] sm:$0xff]
    %v386 = vld [vmem:[%s2 + $0x1f0] sm:$0xff]
    %v387 = vld [vmem:[%s2 + $0x1f8] sm:$0xff]
    %389 = vset.pattern.permute.xlu0 0
    %390 = vperm.xlu0 %389, %v324
    %v391 = vpop.permute.xlu0 %390
    %394 = vset.pattern.permute.xlu0 0
    %395 = vperm.xlu0 %394, %v325
    %v396 = vpop.permute.xlu0 %395
    %399 = vset.pattern.permute.xlu0 0
    %400 = vperm.xlu0 %399, %v326
    %v401 = vpop.permute.xlu0 %400
    %404 = vset.pattern.permute.xlu0 0
    %405 = vperm.xlu0 %404, %v327
    %v406 = vpop.permute.xlu0 %405
    %409 = vset.pattern.permute.xlu0 0
    %410 = vperm.xlu0 %409, %v328
    %v411 = vpop.permute.xlu0 %410
    %414 = vset.pattern.permute.xlu0 0
    %415 = vperm.xlu0 %414, %v329
    %v416 = vpop.permute.xlu0 %415
    %419 = vset.pattern.permute.xlu0 0
    %420 = vperm.xlu0 %419, %v330
    %v421 = vpop.permute.xlu0 %420
    %424 = vset.pattern.permute.xlu0 0
    %425 = vperm.xlu0 %424, %v331
    %v426 = vpop.permute.xlu0 %425
    %429 = vset.pattern.permute.xlu0 0
    %430 = vperm.xlu0 %429, %v332
    %v431 = vpop.permute.xlu0 %430
    %434 = vset.pattern.permute.xlu0 0
    %435 = vperm.xlu0 %434, %v333
    %v436 = vpop.permute.xlu0 %435
    %439 = vset.pattern.permute.xlu0 0
    %440 = vperm.xlu0 %439, %v334
    %v441 = vpop.permute.xlu0 %440
    %444 = vset.pattern.permute.xlu0 0
    %445 = vperm.xlu0 %444, %v335
    %v446 = vpop.permute.xlu0 %445
    %449 = vset.pattern.permute.xlu0 0
    %450 = vperm.xlu0 %449, %v336
    %v451 = vpop.permute.xlu0 %450
    %454 = vset.pattern.permute.xlu0 0
    %455 = vperm.xlu0 %454, %v337
    %v456 = vpop.permute.xlu0 %455
    %459 = vset.pattern.permute.xlu0 0
    %460 = vperm.xlu0 %459, %v338
    %v461 = vpop.permute.xlu0 %460
    %464 = vset.pattern.permute.xlu0 0
    %465 = vperm.xlu0 %464, %v339
    %v466 = vpop.permute.xlu0 %465
    %469 = vset.pattern.permute.xlu0 0
    %470 = vperm.xlu0 %469, %v340
    %v471 = vpop.permute.xlu0 %470
    %474 = vset.pattern.permute.xlu0 0
    %475 = vperm.xlu0 %474, %v341
    %v476 = vpop.permute.xlu0 %475
    %479 = vset.pattern.permute.xlu0 0
    %480 = vperm.xlu0 %479, %v342
    %v481 = vpop.permute.xlu0 %480
    %484 = vset.pattern.permute.xlu0 0
    %485 = vperm.xlu0 %484, %v343
    %v486 = vpop.permute.xlu0 %485
    %489 = vset.pattern.permute.xlu0 0
    %490 = vperm.xlu0 %489, %v344
    %v491 = vpop.permute.xlu0 %490
    %494 = vset.pattern.permute.xlu0 0
    %495 = vperm.xlu0 %494, %v345
    %v496 = vpop.permute.xlu0 %495
    %499 = vset.pattern.permute.xlu0 0
    %500 = vperm.xlu0 %499, %v346
    %v501 = vpop.permute.xlu0 %500
    %504 = vset.pattern.permute.xlu0 0
    %505 = vperm.xlu0 %504, %v347
    %v506 = vpop.permute.xlu0 %505
    %509 = vset.pattern.permute.xlu0 0
    %510 = vperm.xlu0 %509, %v348
    %v511 = vpop.permute.xlu0 %510
    %514 = vset.pattern.permute.xlu0 0
    %515 = vperm.xlu0 %514, %v349
    %v516 = vpop.permute.xlu0 %515
    %519 = vset.pattern.permute.xlu0 0
    %520 = vperm.xlu0 %519, %v350
    %v521 = vpop.permute.xlu0 %520
    %524 = vset.pattern.permute.xlu0 0
    %525 = vperm.xlu0 %524, %v351
    %v526 = vpop.permute.xlu0 %525
    %529 = vset.pattern.permute.xlu0 0
    %530 = vperm.xlu0 %529, %v352
    %v531 = vpop.permute.xlu0 %530
    %534 = vset.pattern.permute.xlu0 0
    %535 = vperm.xlu0 %534, %v353
    %v536 = vpop.permute.xlu0 %535
    %539 = vset.pattern.permute.xlu0 0
    %540 = vperm.xlu0 %539, %v354
    %v541 = vpop.permute.xlu0 %540
    %544 = vset.pattern.permute.xlu0 0
    %545 = vperm.xlu0 %544, %v355
    %v546 = vpop.permute.xlu0 %545
    %549 = vset.pattern.permute.xlu0 0
    %550 = vperm.xlu0 %549, %v356
    %v551 = vpop.permute.xlu0 %550
    %554 = vset.pattern.permute.xlu0 0
    %555 = vperm.xlu0 %554, %v357
    %v556 = vpop.permute.xlu0 %555
    %559 = vset.pattern.permute.xlu0 0
    %560 = vperm.xlu0 %559, %v358
    %v561 = vpop.permute.xlu0 %560
    %564 = vset.pattern.permute.xlu0 0
    %565 = vperm.xlu0 %564, %v359
    %v566 = vpop.permute.xlu0 %565
    %569 = vset.pattern.permute.xlu0 0
    %570 = vperm.xlu0 %569, %v360
    %v571 = vpop.permute.xlu0 %570
    %574 = vset.pattern.permute.xlu0 0
    %575 = vperm.xlu0 %574, %v361
    %v576 = vpop.permute.xlu0 %575
    %579 = vset.pattern.permute.xlu0 0
    %580 = vperm.xlu0 %579, %v362
    %v581 = vpop.permute.xlu0 %580
    %584 = vset.pattern.permute.xlu0 0
    %585 = vperm.xlu0 %584, %v363
    %v586 = vpop.permute.xlu0 %585
    %589 = vset.pattern.permute.xlu0 0
    %590 = vperm.xlu0 %589, %v364
    %v591 = vpop.permute.xlu0 %590
    %594 = vset.pattern.permute.xlu0 0
    %595 = vperm.xlu0 %594, %v365
    %v596 = vpop.permute.xlu0 %595
    %599 = vset.pattern.permute.xlu0 0
    %600 = vperm.xlu0 %599, %v366
    %v601 = vpop.permute.xlu0 %600
    %604 = vset.pattern.permute.xlu0 0
    %605 = vperm.xlu0 %604, %v367
    %v606 = vpop.permute.xlu0 %605
    %609 = vset.pattern.permute.xlu0 0
    %610 = vperm.xlu0 %609, %v368
    %v611 = vpop.permute.xlu0 %610
    %614 = vset.pattern.permute.xlu0 0
    %615 = vperm.xlu0 %614, %v369
    %v616 = vpop.permute.xlu0 %615
    %619 = vset.pattern.permute.xlu0 0
    %620 = vperm.xlu0 %619, %v370
    %v621 = vpop.permute.xlu0 %620
    %624 = vset.pattern.permute.xlu0 0
    %625 = vperm.xlu0 %624, %v371
    %v626 = vpop.permute.xlu0 %625
    %629 = vset.pattern.permute.xlu0 0
    %630 = vperm.xlu0 %629, %v372
    %v631 = vpop.permute.xlu0 %630
    %634 = vset.pattern.permute.xlu0 0
    %635 = vperm.xlu0 %634, %v373
    %v636 = vpop.permute.xlu0 %635
    %639 = vset.pattern.permute.xlu0 0
    %640 = vperm.xlu0 %639, %v374
    %v641 = vpop.permute.xlu0 %640
    %644 = vset.pattern.permute.xlu0 0
    %645 = vperm.xlu0 %644, %v375
    %v646 = vpop.permute.xlu0 %645
    %649 = vset.pattern.permute.xlu0 0
    %650 = vperm.xlu0 %649, %v376
    %v651 = vpop.permute.xlu0 %650
    %654 = vset.pattern.permute.xlu0 0
    %655 = vperm.xlu0 %654, %v377
    %v656 = vpop.permute.xlu0 %655
    %659 = vset.pattern.permute.xlu0 0
    %660 = vperm.xlu0 %659, %v378
    %v661 = vpop.permute.xlu0 %660
    %664 = vset.pattern.permute.xlu0 0
    %665 = vperm.xlu0 %664, %v379
    %v666 = vpop.permute.xlu0 %665
    %669 = vset.pattern.permute.xlu0 0
    %670 = vperm.xlu0 %669, %v380
    %v671 = vpop.permute.xlu0 %670
    %674 = vset.pattern.permute.xlu0 0
    %675 = vperm.xlu0 %674, %v381
    %v676 = vpop.permute.xlu0 %675
    %679 = vset.pattern.permute.xlu0 0
    %680 = vperm.xlu0 %679, %v382
    %v681 = vpop.permute.xlu0 %680
    %684 = vset.pattern.permute.xlu0 0
    %685 = vperm.xlu0 %684, %v383
    %v686 = vpop.permute.xlu0 %685
    %689 = vset.pattern.permute.xlu0 0
    %690 = vperm.xlu0 %689, %v384
    %v691 = vpop.permute.xlu0 %690
    %694 = vset.pattern.permute.xlu0 0
    %695 = vperm.xlu0 %694, %v385
    %v696 = vpop.permute.xlu0 %695
    %699 = vset.pattern.permute.xlu0 0
    %700 = vperm.xlu0 %699, %v386
    %v701 = vpop.permute.xlu0 %700
    %704 = vset.pattern.permute.xlu0 0
    %705 = vperm.xlu0 %704, %v387
    %v706 = vpop.permute.xlu0 %705
    %v772 = vunpack.c.l.b16 %v260
    %v773 = vunpack.c.h.b16 %v260
    %v774 = vunpack.c.l.b16 %v261
    %v775 = vunpack.c.h.b16 %v261
    %v776 = vunpack.c.l.b16 %v262
    %v777 = vunpack.c.h.b16 %v262
    %v778 = vunpack.c.l.b16 %v263
    %v779 = vunpack.c.h.b16 %v263
    %v780 = vunpack.c.l.b16 %v264
    %v781 = vunpack.c.h.b16 %v264
    %v782 = vunpack.c.l.b16 %v265
    %v783 = vunpack.c.h.b16 %v265
    %v784 = vunpack.c.l.b16 %v266
    %v785 = vunpack.c.h.b16 %v266
    %v786 = vunpack.c.l.b16 %v267
    %v787 = vunpack.c.h.b16 %v267
    %v788 = vunpack.c.l.b16 %v268
    %v789 = vunpack.c.h.b16 %v268
    %v790 = vunpack.c.l.b16 %v269
    %v791 = vunpack.c.h.b16 %v269
    %v792 = vunpack.c.l.b16 %v270
    %v793 = vunpack.c.h.b16 %v270
    %v794 = vunpack.c.l.b16 %v271
    %v795 = vunpack.c.h.b16 %v271
    %v796 = vunpack.c.l.b16 %v272
    %v797 = vunpack.c.h.b16 %v272
    %v798 = vunpack.c.l.b16 %v273
    %v799 = vunpack.c.h.b16 %v273
    %v800 = vunpack.c.l.b16 %v274
    %v801 = vunpack.c.h.b16 %v274
    %v802 = vunpack.c.l.b16 %v275
    %v803 = vunpack.c.h.b16 %v275
    %v804 = vunpack.c.l.b16 %v276
    %v805 = vunpack.c.h.b16 %v276
    %v806 = vunpack.c.l.b16 %v277
    %v807 = vunpack.c.h.b16 %v277
    %v808 = vunpack.c.l.b16 %v278
    %v809 = vunpack.c.h.b16 %v278
    %v810 = vunpack.c.l.b16 %v279
    %v811 = vunpack.c.h.b16 %v279
    %v812 = vunpack.c.l.b16 %v280
    %v813 = vunpack.c.h.b16 %v280
    %v814 = vunpack.c.l.b16 %v281
    %v815 = vunpack.c.h.b16 %v281
    %v816 = vunpack.c.l.b16 %v282
    %v817 = vunpack.c.h.b16 %v282
    %v818 = vunpack.c.l.b16 %v283
    %v819 = vunpack.c.h.b16 %v283
    %v820 = vunpack.c.l.b16 %v284
    %v821 = vunpack.c.h.b16 %v284
    %v822 = vunpack.c.l.b16 %v285
    %v823 = vunpack.c.h.b16 %v285
    %v824 = vunpack.c.l.b16 %v286
    %v825 = vunpack.c.h.b16 %v286
    %v826 = vunpack.c.l.b16 %v287
    %v827 = vunpack.c.h.b16 %v287
    %v828 = vunpack.c.l.b16 %v288
    %v829 = vunpack.c.h.b16 %v288
    %v830 = vunpack.c.l.b16 %v289
    %v831 = vunpack.c.h.b16 %v289
    %v832 = vunpack.c.l.b16 %v290
    %v833 = vunpack.c.h.b16 %v290
    %v834 = vunpack.c.l.b16 %v291
    %v835 = vunpack.c.h.b16 %v291
    %v836 = vunpack.c.l.b16 %v292
    %v837 = vunpack.c.h.b16 %v292
    %v838 = vunpack.c.l.b16 %v293
    %v839 = vunpack.c.h.b16 %v293
    %v840 = vunpack.c.l.b16 %v294
    %v841 = vunpack.c.h.b16 %v294
    %v842 = vunpack.c.l.b16 %v295
    %v843 = vunpack.c.h.b16 %v295
    %v844 = vunpack.c.l.b16 %v296
    %v845 = vunpack.c.h.b16 %v296
    %v846 = vunpack.c.l.b16 %v297
    %v847 = vunpack.c.h.b16 %v297
    %v848 = vunpack.c.l.b16 %v298
    %v849 = vunpack.c.h.b16 %v298
    %v850 = vunpack.c.l.b16 %v299
    %v851 = vunpack.c.h.b16 %v299
    %v852 = vunpack.c.l.b16 %v300
    %v853 = vunpack.c.h.b16 %v300
    %v854 = vunpack.c.l.b16 %v301
    %v855 = vunpack.c.h.b16 %v301
    %v856 = vunpack.c.l.b16 %v302
    %v857 = vunpack.c.h.b16 %v302
    %v858 = vunpack.c.l.b16 %v303
    %v859 = vunpack.c.h.b16 %v303
    %v860 = vunpack.c.l.b16 %v304
    %v861 = vunpack.c.h.b16 %v304
    %v862 = vunpack.c.l.b16 %v305
    %v863 = vunpack.c.h.b16 %v305
    %v864 = vunpack.c.l.b16 %v306
    %v865 = vunpack.c.h.b16 %v306
    %v866 = vunpack.c.l.b16 %v307
    %v867 = vunpack.c.h.b16 %v307
    %v868 = vunpack.c.l.b16 %v308
    %v869 = vunpack.c.h.b16 %v308
    %v870 = vunpack.c.l.b16 %v309
    %v871 = vunpack.c.h.b16 %v309
    %v872 = vunpack.c.l.b16 %v310
    %v873 = vunpack.c.h.b16 %v310
    %v874 = vunpack.c.l.b16 %v311
    %v875 = vunpack.c.h.b16 %v311
    %v876 = vunpack.c.l.b16 %v312
    %v877 = vunpack.c.h.b16 %v312
    %v878 = vunpack.c.l.b16 %v313
    %v879 = vunpack.c.h.b16 %v313
    %v880 = vunpack.c.l.b16 %v314
    %v881 = vunpack.c.h.b16 %v314
    %v882 = vunpack.c.l.b16 %v315
    %v883 = vunpack.c.h.b16 %v315
    %v884 = vunpack.c.l.b16 %v316
    %v885 = vunpack.c.h.b16 %v316
    %v886 = vunpack.c.l.b16 %v317
    %v887 = vunpack.c.h.b16 %v317
    %v888 = vunpack.c.l.b16 %v318
    %v889 = vunpack.c.h.b16 %v318
    %v890 = vunpack.c.l.b16 %v319
    %v891 = vunpack.c.h.b16 %v319
    %v892 = vunpack.c.l.b16 %v320
    %v893 = vunpack.c.h.b16 %v320
    %v894 = vunpack.c.l.b16 %v321
    %v895 = vunpack.c.h.b16 %v321
    %v896 = vunpack.c.l.b16 %v322
    %v897 = vunpack.c.h.b16 %v322
    %v898 = vunpack.c.l.b16 %v323
    %v899 = vunpack.c.h.b16 %v323
    %v900 = vpack.c.b16 %v774, %v772
    %v901 = vpack.c.b16 %v775, %v773
    %v902 = vpack.c.b16 %v778, %v776
    %v903 = vpack.c.b16 %v779, %v777
    %v904 = vpack.c.b16 %v782, %v780
    %v905 = vpack.c.b16 %v783, %v781
    %v906 = vpack.c.b16 %v786, %v784
    %v907 = vpack.c.b16 %v787, %v785
    %v908 = vpack.c.b16 %v790, %v788
    %v909 = vpack.c.b16 %v791, %v789
    %v910 = vpack.c.b16 %v794, %v792
    %v911 = vpack.c.b16 %v795, %v793
    %v912 = vpack.c.b16 %v798, %v796
    %v913 = vpack.c.b16 %v799, %v797
    %v914 = vpack.c.b16 %v802, %v800
    %v915 = vpack.c.b16 %v803, %v801
    %v916 = vpack.c.b16 %v806, %v804
    %v917 = vpack.c.b16 %v807, %v805
    %v918 = vpack.c.b16 %v810, %v808
    %v919 = vpack.c.b16 %v811, %v809
    %v920 = vpack.c.b16 %v814, %v812
    %v921 = vpack.c.b16 %v815, %v813
    %v922 = vpack.c.b16 %v818, %v816
    %v923 = vpack.c.b16 %v819, %v817
    %v924 = vpack.c.b16 %v822, %v820
    %v925 = vpack.c.b16 %v823, %v821
    %v926 = vpack.c.b16 %v826, %v824
    %v927 = vpack.c.b16 %v827, %v825
    %v928 = vpack.c.b16 %v830, %v828
    %v929 = vpack.c.b16 %v831, %v829
    %v930 = vpack.c.b16 %v834, %v832
    %v931 = vpack.c.b16 %v835, %v833
    %v932 = vpack.c.b16 %v838, %v836
    %v933 = vpack.c.b16 %v839, %v837
    %v934 = vpack.c.b16 %v842, %v840
    %v935 = vpack.c.b16 %v843, %v841
    %v936 = vpack.c.b16 %v846, %v844
    %v937 = vpack.c.b16 %v847, %v845
    %v938 = vpack.c.b16 %v850, %v848
    %v939 = vpack.c.b16 %v851, %v849
    %v940 = vpack.c.b16 %v854, %v852
    %v941 = vpack.c.b16 %v855, %v853
    %v942 = vpack.c.b16 %v858, %v856
    %v943 = vpack.c.b16 %v859, %v857
    %v944 = vpack.c.b16 %v862, %v860
    %v945 = vpack.c.b16 %v863, %v861
    %v946 = vpack.c.b16 %v866, %v864
    %v947 = vpack.c.b16 %v867, %v865
    %v948 = vpack.c.b16 %v870, %v868
    %v949 = vpack.c.b16 %v871, %v869
    %v950 = vpack.c.b16 %v874, %v872
    %v951 = vpack.c.b16 %v875, %v873
    %v952 = vpack.c.b16 %v878, %v876
    %v953 = vpack.c.b16 %v879, %v877
    %v954 = vpack.c.b16 %v882, %v880
    %v955 = vpack.c.b16 %v883, %v881
    %v956 = vpack.c.b16 %v886, %v884
    %v957 = vpack.c.b16 %v887, %v885
    %v958 = vpack.c.b16 %v890, %v888
    %v959 = vpack.c.b16 %v891, %v889
    %v960 = vpack.c.b16 %v894, %v892
    %v961 = vpack.c.b16 %v895, %v893
    %v962 = vpack.c.b16 %v898, %v896
    %v963 = vpack.c.b16 %v899, %v897
    %1028 = vmatprep.subr.bf16.mxu0 %v225
    %1029 = vmatpush1.bf16.msra.mxu0 %v224
    %1030 = vmatprep.subr.bf16.mxu0 %v221
    %1031 = vmatpush1.bf16.msra.mxu0 %v220
    %1032 = vmatprep.subr.bf16.mxu0 %v217
    %1033 = vmatpush1.bf16.msra.mxu0 %v216
    %1034 = vmatprep.subr.bf16.mxu0 %v213
    %1035 = vmatpush1.bf16.msra.mxu0 %v212
    %1036 = vmatprep.subr.bf16.mxu0 %v209
    %1037 = vmatpush1.bf16.msra.mxu0 %v208
    %1038 = vmatprep.subr.bf16.mxu0 %v205
    %1039 = vmatpush1.bf16.msra.mxu0 %v204
    %1040 = vmatprep.subr.bf16.mxu0 %v201
    %1041 = vmatpush1.bf16.msra.mxu0 %v200
    %1042 = vmatprep.subr.bf16.mxu0 %v197
    %1043 = vmatpush1.bf16.msra.mxu0 %v196
    %1044 = vmatprep.subr.bf16.mxu0 %v257
    %1045 = vmatpush2.bf16.msra.mxu0 %v256
    %1046 = vmatprep.subr.bf16.mxu0 %v253
    %1047 = vmatpush2.bf16.msra.mxu0 %v252
    %1048 = vmatprep.subr.bf16.mxu0 %v249
    %1049 = vmatpush2.bf16.msra.mxu0 %v248
    %1050 = vmatprep.subr.bf16.mxu0 %v245
    %1051 = vmatpush2.bf16.msra.mxu0 %v244
    %1052 = vmatprep.subr.bf16.mxu0 %v241
    %1053 = vmatpush2.bf16.msra.mxu0 %v240
    %1054 = vmatprep.subr.bf16.mxu0 %v237
    %1055 = vmatpush2.bf16.msra.mxu0 %v236
    %1056 = vmatprep.subr.bf16.mxu0 %v233
    %1057 = vmatpush2.bf16.msra.mxu0 %v232
    %1058 = vmatprep.subr.bf16.mxu0 %v229
    %1059 = vmatpush2.bf16.msra.mxu0 %v228
    %1060 = vmatprep.mubr.bf16.mxu0 %v901
    %1061 = vmatmul.mubr.bf16.gmra.mxu0 %v900
    %v1062 = vpop.f32.mrf.mxu0
    %v1063 = vadd.f32 %v391, %v1062
    %v1064 = vpop.f32.mrf.mxu0
    %v1065 = vadd.f32 %v391, %v1064
    %v1066 = vpop.f32.mrf.mxu0
    %v1067 = vadd.f32 %v396, %v1066
    %v1068 = vpop.f32.mrf.mxu0
    %v1069 = vadd.f32 %v396, %v1068
    %1070 = vmatprep.mubr.bf16.mxu0 %v903
    %1071 = vmatmul.mubr.bf16.gmra.mxu0 %v902
    %v1072 = vpop.f32.mrf.mxu0
    %v1073 = vadd.f32 %v401, %v1072
    %v1074 = vpop.f32.mrf.mxu0
    %v1075 = vadd.f32 %v401, %v1074
    %v1076 = vpop.f32.mrf.mxu0
    %v1077 = vadd.f32 %v406, %v1076
    %v1078 = vpop.f32.mrf.mxu0
    %v1079 = vadd.f32 %v406, %v1078
    %1080 = vmatprep.mubr.bf16.mxu0 %v905
    %1081 = vmatmul.mubr.bf16.gmra.mxu0 %v904
    %v1082 = vpop.f32.mrf.mxu0
    %v1083 = vadd.f32 %v411, %v1082
    %v1084 = vpop.f32.mrf.mxu0
    %v1085 = vadd.f32 %v411, %v1084
    %v1086 = vpop.f32.mrf.mxu0
    %v1087 = vadd.f32 %v416, %v1086
    %v1088 = vpop.f32.mrf.mxu0
    %v1089 = vadd.f32 %v416, %v1088
    %1090 = vmatprep.mubr.bf16.mxu0 %v907
    %1091 = vmatmul.mubr.bf16.gmra.mxu0 %v906
    %v1092 = vpop.f32.mrf.mxu0
    %v1093 = vadd.f32 %v421, %v1092
    %v1094 = vpop.f32.mrf.mxu0
    %v1095 = vadd.f32 %v421, %v1094
    %v1096 = vpop.f32.mrf.mxu0
    %v1097 = vadd.f32 %v426, %v1096
    %v1098 = vpop.f32.mrf.mxu0
    %v1099 = vadd.f32 %v426, %v1098
    %1100 = vmatprep.mubr.bf16.mxu0 %v909
    %1101 = vmatmul.mubr.bf16.gmra.mxu0 %v908
    %v1102 = vpop.f32.mrf.mxu0
    %v1103 = vadd.f32 %v431, %v1102
    %v1104 = vpop.f32.mrf.mxu0
    %v1105 = vadd.f32 %v431, %v1104
    %v1106 = vpop.f32.mrf.mxu0
    %v1107 = vadd.f32 %v436, %v1106
    %v1108 = vpop.f32.mrf.mxu0
    %v1109 = vadd.f32 %v436, %v1108
    %1110 = vmatprep.mubr.bf16.mxu0 %v911
    %1111 = vmatmul.mubr.bf16.gmra.mxu0 %v910
    %v1112 = vpop.f32.mrf.mxu0
    %v1113 = vadd.f32 %v441, %v1112
    %v1114 = vpop.f32.mrf.mxu0
    %v1115 = vadd.f32 %v441, %v1114
    %v1116 = vpop.f32.mrf.mxu0
    %v1117 = vadd.f32 %v446, %v1116
    %v1118 = vpop.f32.mrf.mxu0
    %v1119 = vadd.f32 %v446, %v1118
    %1120 = vmatprep.mubr.bf16.mxu0 %v913
    %1121 = vmatmul.mubr.bf16.gmra.mxu0 %v912
    %v1122 = vpop.f32.mrf.mxu0
    %v1123 = vadd.f32 %v451, %v1122
    %v1124 = vpop.f32.mrf.mxu0
    %v1125 = vadd.f32 %v451, %v1124
    %v1126 = vpop.f32.mrf.mxu0
    %v1127 = vadd.f32 %v456, %v1126
    %v1128 = vpop.f32.mrf.mxu0
    %v1129 = vadd.f32 %v456, %v1128
    %1130 = vmatprep.mubr.bf16.mxu0 %v915
    %1131 = vmatmul.mubr.bf16.gmra.mxu0 %v914
    %v1132 = vpop.f32.mrf.mxu0
    %v1133 = vadd.f32 %v461, %v1132
    %v1134 = vpop.f32.mrf.mxu0
    %v1135 = vadd.f32 %v461, %v1134
    %v1136 = vpop.f32.mrf.mxu0
    %v1137 = vadd.f32 %v466, %v1136
    %v1138 = vpop.f32.mrf.mxu0
    %v1139 = vadd.f32 %v466, %v1138
    %1140 = vmatprep.mubr.bf16.mxu0 %v917
    %1141 = vmatmul.mubr.bf16.gmra.mxu0 %v916
    %v1142 = vpop.f32.mrf.mxu0
    %v1143 = vadd.f32 %v471, %v1142
    %v1144 = vpop.f32.mrf.mxu0
    %v1145 = vadd.f32 %v471, %v1144
    %v1146 = vpop.f32.mrf.mxu0
    %v1147 = vadd.f32 %v476, %v1146
    %v1148 = vpop.f32.mrf.mxu0
    %v1149 = vadd.f32 %v476, %v1148
    %1150 = vmatprep.mubr.bf16.mxu0 %v919
    %1151 = vmatmul.mubr.bf16.gmra.mxu0 %v918
    %v1152 = vpop.f32.mrf.mxu0
    %v1153 = vadd.f32 %v481, %v1152
    %v1154 = vpop.f32.mrf.mxu0
    %v1155 = vadd.f32 %v481, %v1154
    %v1156 = vpop.f32.mrf.mxu0
    %v1157 = vadd.f32 %v486, %v1156
    %v1158 = vpop.f32.mrf.mxu0
    %v1159 = vadd.f32 %v486, %v1158
    %1160 = vmatprep.mubr.bf16.mxu0 %v921
    %1161 = vmatmul.mubr.bf16.gmra.mxu0 %v920
    %v1162 = vpop.f32.mrf.mxu0
    %v1163 = vadd.f32 %v491, %v1162
    %v1164 = vpop.f32.mrf.mxu0
    %v1165 = vadd.f32 %v491, %v1164
    %v1166 = vpop.f32.mrf.mxu0
    %v1167 = vadd.f32 %v496, %v1166
    %v1168 = vpop.f32.mrf.mxu0
    %v1169 = vadd.f32 %v496, %v1168
    %1170 = vmatprep.mubr.bf16.mxu0 %v923
    %1171 = vmatmul.mubr.bf16.gmra.mxu0 %v922
    %v1172 = vpop.f32.mrf.mxu0
    %v1173 = vadd.f32 %v501, %v1172
    %v1174 = vpop.f32.mrf.mxu0
    %v1175 = vadd.f32 %v501, %v1174
    %v1176 = vpop.f32.mrf.mxu0
    %v1177 = vadd.f32 %v506, %v1176
    %v1178 = vpop.f32.mrf.mxu0
    %v1179 = vadd.f32 %v506, %v1178
    %1180 = vmatprep.mubr.bf16.mxu0 %v925
    %1181 = vmatmul.mubr.bf16.gmra.mxu0 %v924
    %v1182 = vpop.f32.mrf.mxu0
    %v1183 = vadd.f32 %v511, %v1182
    %v1184 = vpop.f32.mrf.mxu0
    %v1185 = vadd.f32 %v511, %v1184
    %v1186 = vpop.f32.mrf.mxu0
    %v1187 = vadd.f32 %v516, %v1186
    %v1188 = vpop.f32.mrf.mxu0
    %v1189 = vadd.f32 %v516, %v1188
    %1190 = vmatprep.mubr.bf16.mxu0 %v927
    %1191 = vmatmul.mubr.bf16.gmra.mxu0 %v926
    %v1192 = vpop.f32.mrf.mxu0
    %v1193 = vadd.f32 %v521, %v1192
    %v1194 = vpop.f32.mrf.mxu0
    %v1195 = vadd.f32 %v521, %v1194
    %v1196 = vpop.f32.mrf.mxu0
    %v1197 = vadd.f32 %v526, %v1196
    %v1198 = vpop.f32.mrf.mxu0
    %v1199 = vadd.f32 %v526, %v1198
    %1200 = vmatprep.mubr.bf16.mxu0 %v929
    %1201 = vmatmul.mubr.bf16.gmra.mxu0 %v928
    %v1202 = vpop.f32.mrf.mxu0
    %v1203 = vadd.f32 %v531, %v1202
    %v1204 = vpop.f32.mrf.mxu0
    %v1205 = vadd.f32 %v531, %v1204
    %v1206 = vpop.f32.mrf.mxu0
    %v1207 = vadd.f32 %v536, %v1206
    %v1208 = vpop.f32.mrf.mxu0
    %v1209 = vadd.f32 %v536, %v1208
    %1210 = vmatprep.mubr.bf16.mxu0 %v931
    %1211 = vmatmul.mubr.bf16.gmra.mxu0 %v930
    %v1212 = vpop.f32.mrf.mxu0
    %v1213 = vadd.f32 %v541, %v1212
    %v1214 = vpop.f32.mrf.mxu0
    %v1215 = vadd.f32 %v541, %v1214
    %v1216 = vpop.f32.mrf.mxu0
    %v1217 = vadd.f32 %v546, %v1216
    %v1218 = vpop.f32.mrf.mxu0
    %v1219 = vadd.f32 %v546, %v1218
    %1220 = vmatprep.mubr.bf16.mxu0 %v933
    %1221 = vmatmul.mubr.bf16.gmra.mxu0 %v932
    %v1222 = vpop.f32.mrf.mxu0
    %v1223 = vadd.f32 %v551, %v1222
    %v1224 = vpop.f32.mrf.mxu0
    %v1225 = vadd.f32 %v551, %v1224
    %v1226 = vpop.f32.mrf.mxu0
    %v1227 = vadd.f32 %v556, %v1226
    %v1228 = vpop.f32.mrf.mxu0
    %v1229 = vadd.f32 %v556, %v1228
    %1230 = vmatprep.mubr.bf16.mxu0 %v935
    %1231 = vmatmul.mubr.bf16.gmra.mxu0 %v934
    %v1232 = vpop.f32.mrf.mxu0
    %v1233 = vadd.f32 %v561, %v1232
    %v1234 = vpop.f32.mrf.mxu0
    %v1235 = vadd.f32 %v561, %v1234
    %v1236 = vpop.f32.mrf.mxu0
    %v1237 = vadd.f32 %v566, %v1236
    %v1238 = vpop.f32.mrf.mxu0
    %v1239 = vadd.f32 %v566, %v1238
    %1240 = vmatprep.mubr.bf16.mxu0 %v937
    %1241 = vmatmul.mubr.bf16.gmra.mxu0 %v936
    %v1242 = vpop.f32.mrf.mxu0
    %v1243 = vadd.f32 %v571, %v1242
    %v1244 = vpop.f32.mrf.mxu0
    %v1245 = vadd.f32 %v571, %v1244
    %v1246 = vpop.f32.mrf.mxu0
    %v1247 = vadd.f32 %v576, %v1246
    %v1248 = vpop.f32.mrf.mxu0
    %v1249 = vadd.f32 %v576, %v1248
    %1250 = vmatprep.mubr.bf16.mxu0 %v939
    %1251 = vmatmul.mubr.bf16.gmra.mxu0 %v938
    %v1252 = vpop.f32.mrf.mxu0
    %v1253 = vadd.f32 %v581, %v1252
    %v1254 = vpop.f32.mrf.mxu0
    %v1255 = vadd.f32 %v581, %v1254
    %v1256 = vpop.f32.mrf.mxu0
    %v1257 = vadd.f32 %v586, %v1256
    %v1258 = vpop.f32.mrf.mxu0
    %v1259 = vadd.f32 %v586, %v1258
    %1260 = vmatprep.mubr.bf16.mxu0 %v941
    %1261 = vmatmul.mubr.bf16.gmra.mxu0 %v940
    %v1262 = vpop.f32.mrf.mxu0
    %v1263 = vadd.f32 %v591, %v1262
    %v1264 = vpop.f32.mrf.mxu0
    %v1265 = vadd.f32 %v591, %v1264
    %v1266 = vpop.f32.mrf.mxu0
    %v1267 = vadd.f32 %v596, %v1266
    %v1268 = vpop.f32.mrf.mxu0
    %v1269 = vadd.f32 %v596, %v1268
    %1270 = vmatprep.mubr.bf16.mxu0 %v943
    %1271 = vmatmul.mubr.bf16.gmra.mxu0 %v942
    %v1272 = vpop.f32.mrf.mxu0
    %v1273 = vadd.f32 %v601, %v1272
    %v1274 = vpop.f32.mrf.mxu0
    %v1275 = vadd.f32 %v601, %v1274
    %v1276 = vpop.f32.mrf.mxu0
    %v1277 = vadd.f32 %v606, %v1276
    %v1278 = vpop.f32.mrf.mxu0
    %v1279 = vadd.f32 %v606, %v1278
    %1280 = vmatprep.mubr.bf16.mxu0 %v945
    %1281 = vmatmul.mubr.bf16.gmra.mxu0 %v944
    %v1282 = vpop.f32.mrf.mxu0
    %v1283 = vadd.f32 %v611, %v1282
    %v1284 = vpop.f32.mrf.mxu0
    %v1285 = vadd.f32 %v611, %v1284
    %v1286 = vpop.f32.mrf.mxu0
    %v1287 = vadd.f32 %v616, %v1286
    %v1288 = vpop.f32.mrf.mxu0
    %v1289 = vadd.f32 %v616, %v1288
    %1290 = vmatprep.mubr.bf16.mxu0 %v947
    %1291 = vmatmul.mubr.bf16.gmra.mxu0 %v946
    %v1292 = vpop.f32.mrf.mxu0
    %v1293 = vadd.f32 %v621, %v1292
    %v1294 = vpop.f32.mrf.mxu0
    %v1295 = vadd.f32 %v621, %v1294
    %v1296 = vpop.f32.mrf.mxu0
    %v1297 = vadd.f32 %v626, %v1296
    %v1298 = vpop.f32.mrf.mxu0
    %v1299 = vadd.f32 %v626, %v1298
    %1300 = vmatprep.mubr.bf16.mxu0 %v949
    %1301 = vmatmul.mubr.bf16.gmra.mxu0 %v948
    %v1302 = vpop.f32.mrf.mxu0
    %v1303 = vadd.f32 %v631, %v1302
    %v1304 = vpop.f32.mrf.mxu0
    %v1305 = vadd.f32 %v631, %v1304
    %v1306 = vpop.f32.mrf.mxu0
    %v1307 = vadd.f32 %v636, %v1306
    %v1308 = vpop.f32.mrf.mxu0
    %v1309 = vadd.f32 %v636, %v1308
    %1310 = vmatprep.mubr.bf16.mxu0 %v951
    %1311 = vmatmul.mubr.bf16.gmra.mxu0 %v950
    %v1312 = vpop.f32.mrf.mxu0
    %v1313 = vadd.f32 %v641, %v1312
    %v1314 = vpop.f32.mrf.mxu0
    %v1315 = vadd.f32 %v641, %v1314
    %v1316 = vpop.f32.mrf.mxu0
    %v1317 = vadd.f32 %v646, %v1316
    %v1318 = vpop.f32.mrf.mxu0
    %v1319 = vadd.f32 %v646, %v1318
    %1320 = vmatprep.mubr.bf16.mxu0 %v953
    %1321 = vmatmul.mubr.bf16.gmra.mxu0 %v952
    %v1322 = vpop.f32.mrf.mxu0
    %v1323 = vadd.f32 %v651, %v1322
    %v1324 = vpop.f32.mrf.mxu0
    %v1325 = vadd.f32 %v651, %v1324
    %v1326 = vpop.f32.mrf.mxu0
    %v1327 = vadd.f32 %v656, %v1326
    %v1328 = vpop.f32.mrf.mxu0
    %v1329 = vadd.f32 %v656, %v1328
    %1330 = vmatprep.mubr.bf16.mxu0 %v955
    %1331 = vmatmul.mubr.bf16.gmra.mxu0 %v954
    %v1332 = vpop.f32.mrf.mxu0
    %v1333 = vadd.f32 %v661, %v1332
    %v1334 = vpop.f32.mrf.mxu0
    %v1335 = vadd.f32 %v661, %v1334
    %v1336 = vpop.f32.mrf.mxu0
    %v1337 = vadd.f32 %v666, %v1336
    %v1338 = vpop.f32.mrf.mxu0
    %v1339 = vadd.f32 %v666, %v1338
    %1340 = vmatprep.mubr.bf16.mxu0 %v957
    %1341 = vmatmul.mubr.bf16.gmra.mxu0 %v956
    %v1342 = vpop.f32.mrf.mxu0
    %v1343 = vadd.f32 %v671, %v1342
    %v1344 = vpop.f32.mrf.mxu0
    %v1345 = vadd.f32 %v671, %v1344
    %v1346 = vpop.f32.mrf.mxu0
    %v1347 = vadd.f32 %v676, %v1346
    %v1348 = vpop.f32.mrf.mxu0
    %v1349 = vadd.f32 %v676, %v1348
    %1350 = vmatprep.mubr.bf16.mxu0 %v959
    %1351 = vmatmul.mubr.bf16.gmra.mxu0 %v958
    %v1352 = vpop.f32.mrf.mxu0
    %v1353 = vadd.f32 %v681, %v1352
    %v1354 = vpop.f32.mrf.mxu0
    %v1355 = vadd.f32 %v681, %v1354
    %v1356 = vpop.f32.mrf.mxu0
    %v1357 = vadd.f32 %v686, %v1356
    %v1358 = vpop.f32.mrf.mxu0
    %v1359 = vadd.f32 %v686, %v1358
    %1360 = vmatprep.mubr.bf16.mxu0 %v961
    %1361 = vmatmul.mubr.bf16.gmra.mxu0 %v960
    %v1362 = vpop.f32.mrf.mxu0
    %v1363 = vadd.f32 %v691, %v1362
    %v1364 = vpop.f32.mrf.mxu0
    %v1365 = vadd.f32 %v691, %v1364
    %v1366 = vpop.f32.mrf.mxu0
    %v1367 = vadd.f32 %v696, %v1366
    %v1368 = vpop.f32.mrf.mxu0
    %v1369 = vadd.f32 %v696, %v1368
    %1370 = vmatprep.mubr.bf16.mxu0 %v963
    %1371 = vmatmul.mubr.bf16.gmra.mxu0 %v962
    %v1372 = vpop.f32.mrf.mxu0
    %v1373 = vadd.f32 %v701, %v1372
    %v1374 = vpop.f32.mrf.mxu0
    %v1375 = vadd.f32 %v701, %v1374
    %v1376 = vpop.f32.mrf.mxu0
    %v1377 = vadd.f32 %v706, %v1376
    %v1378 = vpop.f32.mrf.mxu0
    %v1379 = vadd.f32 %v706, %v1378
    %1380 = vdwg.mxu0
    %1381 = vmatprep.subr.bf16.mxu0 %v227
    %1382 = vmatpush1.bf16.msra.mxu0 %v226
    %1383 = vmatprep.subr.bf16.mxu0 %v223
    %1384 = vmatpush1.bf16.msra.mxu0 %v222
    %1385 = vmatprep.subr.bf16.mxu0 %v219
    %1386 = vmatpush1.bf16.msra.mxu0 %v218
    %1387 = vmatprep.subr.bf16.mxu0 %v215
    %1388 = vmatpush1.bf16.msra.mxu0 %v214
    %1389 = vmatprep.subr.bf16.mxu0 %v211
    %1390 = vmatpush1.bf16.msra.mxu0 %v210
    %1391 = vmatprep.subr.bf16.mxu0 %v207
    %1392 = vmatpush1.bf16.msra.mxu0 %v206
    %1393 = vmatprep.subr.bf16.mxu0 %v203
    %1394 = vmatpush1.bf16.msra.mxu0 %v202
    %1395 = vmatprep.subr.bf16.mxu0 %v199
    %1396 = vmatpush1.bf16.msra.mxu0 %v198
    %1397 = vmatprep.subr.bf16.mxu0 %v259
    %1398 = vmatpush2.bf16.msra.mxu0 %v258
    %1399 = vmatprep.subr.bf16.mxu0 %v255
    %1400 = vmatpush2.bf16.msra.mxu0 %v254
    %1401 = vmatprep.subr.bf16.mxu0 %v251
    %1402 = vmatpush2.bf16.msra.mxu0 %v250
    %1403 = vmatprep.subr.bf16.mxu0 %v247
    %1404 = vmatpush2.bf16.msra.mxu0 %v246
    %1405 = vmatprep.subr.bf16.mxu0 %v243
    %1406 = vmatpush2.bf16.msra.mxu0 %v242
    %1407 = vmatprep.subr.bf16.mxu0 %v239
    %1408 = vmatpush2.bf16.msra.mxu0 %v238
    %1409 = vmatprep.subr.bf16.mxu0 %v235
    %1410 = vmatpush2.bf16.msra.mxu0 %v234
    %1411 = vmatprep.subr.bf16.mxu0 %v231
    %1412 = vmatpush2.bf16.msra.mxu0 %v230
    %1413 = vmatprep.mubr.bf16.mxu0 %v901
    %1414 = vmatmul.mubr.bf16.gmra.mxu0 %v900
    %v1415 = vpop.f32.mrf.mxu0
    %v1416 = vadd.f32 %v391, %v1415
    %v1417 = vpop.f32.mrf.mxu0
    %v1418 = vadd.f32 %v391, %v1417
    %v1419 = vpop.f32.mrf.mxu0
    %v1420 = vadd.f32 %v396, %v1419
    %v1421 = vpop.f32.mrf.mxu0
    %v1422 = vadd.f32 %v396, %v1421
    %1423 = vmatprep.mubr.bf16.mxu0 %v903
    %1424 = vmatmul.mubr.bf16.gmra.mxu0 %v902
    %v1425 = vpop.f32.mrf.mxu0
    %v1426 = vadd.f32 %v401, %v1425
    %v1427 = vpop.f32.mrf.mxu0
    %v1428 = vadd.f32 %v401, %v1427
    %v1429 = vpop.f32.mrf.mxu0
    %v1430 = vadd.f32 %v406, %v1429
    %v1431 = vpop.f32.mrf.mxu0
    %v1432 = vadd.f32 %v406, %v1431
    %1433 = vmatprep.mubr.bf16.mxu0 %v905
    %1434 = vmatmul.mubr.bf16.gmra.mxu0 %v904
    %v1435 = vpop.f32.mrf.mxu0
    %v1436 = vadd.f32 %v411, %v1435
    %v1437 = vpop.f32.mrf.mxu0
    %v1438 = vadd.f32 %v411, %v1437
    %v1439 = vpop.f32.mrf.mxu0
    %v1440 = vadd.f32 %v416, %v1439
    %v1441 = vpop.f32.mrf.mxu0
    %v1442 = vadd.f32 %v416, %v1441
    %1443 = vmatprep.mubr.bf16.mxu0 %v907
    %1444 = vmatmul.mubr.bf16.gmra.mxu0 %v906
    %v1445 = vpop.f32.mrf.mxu0
    %v1446 = vadd.f32 %v421, %v1445
    %v1447 = vpop.f32.mrf.mxu0
    %v1448 = vadd.f32 %v421, %v1447
    %v1449 = vpop.f32.mrf.mxu0
    %v1450 = vadd.f32 %v426, %v1449
    %v1451 = vpop.f32.mrf.mxu0
    %v1452 = vadd.f32 %v426, %v1451
    %1453 = vmatprep.mubr.bf16.mxu0 %v909
    %1454 = vmatmul.mubr.bf16.gmra.mxu0 %v908
    %v1455 = vpop.f32.mrf.mxu0
    %v1456 = vadd.f32 %v431, %v1455
    %v1457 = vpop.f32.mrf.mxu0
    %v1458 = vadd.f32 %v431, %v1457
    %v1459 = vpop.f32.mrf.mxu0
    %v1460 = vadd.f32 %v436, %v1459
    %v1461 = vpop.f32.mrf.mxu0
    %v1462 = vadd.f32 %v436, %v1461
    %1463 = vmatprep.mubr.bf16.mxu0 %v911
    %1464 = vmatmul.mubr.bf16.gmra.mxu0 %v910
    %v1465 = vpop.f32.mrf.mxu0
    %v1466 = vadd.f32 %v441, %v1465
    %v1467 = vpop.f32.mrf.mxu0
    %v1468 = vadd.f32 %v441, %v1467
    %v1469 = vpop.f32.mrf.mxu0
    %v1470 = vadd.f32 %v446, %v1469
    %v1471 = vpop.f32.mrf.mxu0
    %v1472 = vadd.f32 %v446, %v1471
    %1473 = vmatprep.mubr.bf16.mxu0 %v913
    %1474 = vmatmul.mubr.bf16.gmra.mxu0 %v912
    %v1475 = vpop.f32.mrf.mxu0
    %v1476 = vadd.f32 %v451, %v1475
    %v1477 = vpop.f32.mrf.mxu0
    %v1478 = vadd.f32 %v451, %v1477
    %v1479 = vpop.f32.mrf.mxu0
    %v1480 = vadd.f32 %v456, %v1479
    %v1481 = vpop.f32.mrf.mxu0
    %v1482 = vadd.f32 %v456, %v1481
    %1483 = vmatprep.mubr.bf16.mxu0 %v915
    %1484 = vmatmul.mubr.bf16.gmra.mxu0 %v914
    %v1485 = vpop.f32.mrf.mxu0
    %v1486 = vadd.f32 %v461, %v1485
    %v1487 = vpop.f32.mrf.mxu0
    %v1488 = vadd.f32 %v461, %v1487
    %v1489 = vpop.f32.mrf.mxu0
    %v1490 = vadd.f32 %v466, %v1489
    %v1491 = vpop.f32.mrf.mxu0
    %v1492 = vadd.f32 %v466, %v1491
    %1493 = vmatprep.mubr.bf16.mxu0 %v917
    %1494 = vmatmul.mubr.bf16.gmra.mxu0 %v916
    %v1495 = vpop.f32.mrf.mxu0
    %v1496 = vadd.f32 %v471, %v1495
    %v1497 = vpop.f32.mrf.mxu0
    %v1498 = vadd.f32 %v471, %v1497
    %v1499 = vpop.f32.mrf.mxu0
    %v1500 = vadd.f32 %v476, %v1499
    %v1501 = vpop.f32.mrf.mxu0
    %v1502 = vadd.f32 %v476, %v1501
    %1503 = vmatprep.mubr.bf16.mxu0 %v919
    %1504 = vmatmul.mubr.bf16.gmra.mxu0 %v918
    %v1505 = vpop.f32.mrf.mxu0
    %v1506 = vadd.f32 %v481, %v1505
    %v1507 = vpop.f32.mrf.mxu0
    %v1508 = vadd.f32 %v481, %v1507
    %v1509 = vpop.f32.mrf.mxu0
    %v1510 = vadd.f32 %v486, %v1509
    %v1511 = vpop.f32.mrf.mxu0
    %v1512 = vadd.f32 %v486, %v1511
    %1513 = vmatprep.mubr.bf16.mxu0 %v921
    %1514 = vmatmul.mubr.bf16.gmra.mxu0 %v920
    %v1515 = vpop.f32.mrf.mxu0
    %v1516 = vadd.f32 %v491, %v1515
    %v1517 = vpop.f32.mrf.mxu0
    %v1518 = vadd.f32 %v491, %v1517
    %v1519 = vpop.f32.mrf.mxu0
    %v1520 = vadd.f32 %v496, %v1519
    %v1521 = vpop.f32.mrf.mxu0
    %v1522 = vadd.f32 %v496, %v1521
    %1523 = vmatprep.mubr.bf16.mxu0 %v923
    %1524 = vmatmul.mubr.bf16.gmra.mxu0 %v922
    %v1525 = vpop.f32.mrf.mxu0
    %v1526 = vadd.f32 %v501, %v1525
    %v1527 = vpop.f32.mrf.mxu0
    %v1528 = vadd.f32 %v501, %v1527
    %v1529 = vpop.f32.mrf.mxu0
    %v1530 = vadd.f32 %v506, %v1529
    %v1531 = vpop.f32.mrf.mxu0
    %v1532 = vadd.f32 %v506, %v1531
    %1533 = vmatprep.mubr.bf16.mxu0 %v925
    %1534 = vmatmul.mubr.bf16.gmra.mxu0 %v924
    %v1535 = vpop.f32.mrf.mxu0
    %v1536 = vadd.f32 %v511, %v1535
    %v1537 = vpop.f32.mrf.mxu0
    %v1538 = vadd.f32 %v511, %v1537
    %v1539 = vpop.f32.mrf.mxu0
    %v1540 = vadd.f32 %v516, %v1539
    %v1541 = vpop.f32.mrf.mxu0
    %v1542 = vadd.f32 %v516, %v1541
    %1543 = vmatprep.mubr.bf16.mxu0 %v927
    %1544 = vmatmul.mubr.bf16.gmra.mxu0 %v926
    %v1545 = vpop.f32.mrf.mxu0
    %v1546 = vadd.f32 %v521, %v1545
    %v1547 = vpop.f32.mrf.mxu0
    %v1548 = vadd.f32 %v521, %v1547
    %v1549 = vpop.f32.mrf.mxu0
    %v1550 = vadd.f32 %v526, %v1549
    %v1551 = vpop.f32.mrf.mxu0
    %v1552 = vadd.f32 %v526, %v1551
    %1553 = vmatprep.mubr.bf16.mxu0 %v929
    %1554 = vmatmul.mubr.bf16.gmra.mxu0 %v928
    %v1555 = vpop.f32.mrf.mxu0
    %v1556 = vadd.f32 %v531, %v1555
    %v1557 = vpop.f32.mrf.mxu0
    %v1558 = vadd.f32 %v531, %v1557
    %v1559 = vpop.f32.mrf.mxu0
    %v1560 = vadd.f32 %v536, %v1559
    %v1561 = vpop.f32.mrf.mxu0
    %v1562 = vadd.f32 %v536, %v1561
    %1563 = vmatprep.mubr.bf16.mxu0 %v931
    %1564 = vmatmul.mubr.bf16.gmra.mxu0 %v930
    %v1565 = vpop.f32.mrf.mxu0
    %v1566 = vadd.f32 %v541, %v1565
    %v1567 = vpop.f32.mrf.mxu0
    %v1568 = vadd.f32 %v541, %v1567
    %v1569 = vpop.f32.mrf.mxu0
    %v1570 = vadd.f32 %v546, %v1569
    %v1571 = vpop.f32.mrf.mxu0
    %v1572 = vadd.f32 %v546, %v1571
    %1573 = vmatprep.mubr.bf16.mxu0 %v933
    %1574 = vmatmul.mubr.bf16.gmra.mxu0 %v932
    %v1575 = vpop.f32.mrf.mxu0
    %v1576 = vadd.f32 %v551, %v1575
    %v1577 = vpop.f32.mrf.mxu0
    %v1578 = vadd.f32 %v551, %v1577
    %v1579 = vpop.f32.mrf.mxu0
    %v1580 = vadd.f32 %v556, %v1579
    %v1581 = vpop.f32.mrf.mxu0
    %v1582 = vadd.f32 %v556, %v1581
    %1583 = vmatprep.mubr.bf16.mxu0 %v935
    %1584 = vmatmul.mubr.bf16.gmra.mxu0 %v934
    %v1585 = vpop.f32.mrf.mxu0
    %v1586 = vadd.f32 %v561, %v1585
    %v1587 = vpop.f32.mrf.mxu0
    %v1588 = vadd.f32 %v561, %v1587
    %v1589 = vpop.f32.mrf.mxu0
    %v1590 = vadd.f32 %v566, %v1589
    %v1591 = vpop.f32.mrf.mxu0
    %v1592 = vadd.f32 %v566, %v1591
    %1593 = vmatprep.mubr.bf16.mxu0 %v937
    %1594 = vmatmul.mubr.bf16.gmra.mxu0 %v936
    %v1595 = vpop.f32.mrf.mxu0
    %v1596 = vadd.f32 %v571, %v1595
    %v1597 = vpop.f32.mrf.mxu0
    %v1598 = vadd.f32 %v571, %v1597
    %v1599 = vpop.f32.mrf.mxu0
    %v1600 = vadd.f32 %v576, %v1599
    %v1601 = vpop.f32.mrf.mxu0
    %v1602 = vadd.f32 %v576, %v1601
    %1603 = vmatprep.mubr.bf16.mxu0 %v939
    %1604 = vmatmul.mubr.bf16.gmra.mxu0 %v938
    %v1605 = vpop.f32.mrf.mxu0
    %v1606 = vadd.f32 %v581, %v1605
    %v1607 = vpop.f32.mrf.mxu0
    %v1608 = vadd.f32 %v581, %v1607
    %v1609 = vpop.f32.mrf.mxu0
    %v1610 = vadd.f32 %v586, %v1609
    %v1611 = vpop.f32.mrf.mxu0
    %v1612 = vadd.f32 %v586, %v1611
    %1613 = vmatprep.mubr.bf16.mxu0 %v941
    %1614 = vmatmul.mubr.bf16.gmra.mxu0 %v940
    %v1615 = vpop.f32.mrf.mxu0
    %v1616 = vadd.f32 %v591, %v1615
    %v1617 = vpop.f32.mrf.mxu0
    %v1618 = vadd.f32 %v591, %v1617
    %v1619 = vpop.f32.mrf.mxu0
    %v1620 = vadd.f32 %v596, %v1619
    %v1621 = vpop.f32.mrf.mxu0
    %v1622 = vadd.f32 %v596, %v1621
    %1623 = vmatprep.mubr.bf16.mxu0 %v943
    %1624 = vmatmul.mubr.bf16.gmra.mxu0 %v942
    %v1625 = vpop.f32.mrf.mxu0
    %v1626 = vadd.f32 %v601, %v1625
    %v1627 = vpop.f32.mrf.mxu0
    %v1628 = vadd.f32 %v601, %v1627
    %v1629 = vpop.f32.mrf.mxu0
    %v1630 = vadd.f32 %v606, %v1629
    %v1631 = vpop.f32.mrf.mxu0
    %v1632 = vadd.f32 %v606, %v1631
    %1633 = vmatprep.mubr.bf16.mxu0 %v945
    %1634 = vmatmul.mubr.bf16.gmra.mxu0 %v944
    %v1635 = vpop.f32.mrf.mxu0
    %v1636 = vadd.f32 %v611, %v1635
    %v1637 = vpop.f32.mrf.mxu0
    %v1638 = vadd.f32 %v611, %v1637
    %v1639 = vpop.f32.mrf.mxu0
    %v1640 = vadd.f32 %v616, %v1639
    %v1641 = vpop.f32.mrf.mxu0
    %v1642 = vadd.f32 %v616, %v1641
    %1643 = vmatprep.mubr.bf16.mxu0 %v947
    %1644 = vmatmul.mubr.bf16.gmra.mxu0 %v946
    %v1645 = vpop.f32.mrf.mxu0
    %v1646 = vadd.f32 %v621, %v1645
    %v1647 = vpop.f32.mrf.mxu0
    %v1648 = vadd.f32 %v621, %v1647
    %v1649 = vpop.f32.mrf.mxu0
    %v1650 = vadd.f32 %v626, %v1649
    %v1651 = vpop.f32.mrf.mxu0
    %v1652 = vadd.f32 %v626, %v1651
    %1653 = vmatprep.mubr.bf16.mxu0 %v949
    %1654 = vmatmul.mubr.bf16.gmra.mxu0 %v948
    %v1655 = vpop.f32.mrf.mxu0
    %v1656 = vadd.f32 %v631, %v1655
    %v1657 = vpop.f32.mrf.mxu0
    %v1658 = vadd.f32 %v631, %v1657
    %v1659 = vpop.f32.mrf.mxu0
    %v1660 = vadd.f32 %v636, %v1659
    %v1661 = vpop.f32.mrf.mxu0
    %v1662 = vadd.f32 %v636, %v1661
    %1663 = vmatprep.mubr.bf16.mxu0 %v951
    %1664 = vmatmul.mubr.bf16.gmra.mxu0 %v950
    %v1665 = vpop.f32.mrf.mxu0
    %v1666 = vadd.f32 %v641, %v1665
    %v1667 = vpop.f32.mrf.mxu0
    %v1668 = vadd.f32 %v641, %v1667
    %v1669 = vpop.f32.mrf.mxu0
    %v1670 = vadd.f32 %v646, %v1669
    %v1671 = vpop.f32.mrf.mxu0
    %v1672 = vadd.f32 %v646, %v1671
    %1673 = vmatprep.mubr.bf16.mxu0 %v953
    %1674 = vmatmul.mubr.bf16.gmra.mxu0 %v952
    %v1675 = vpop.f32.mrf.mxu0
    %v1676 = vadd.f32 %v651, %v1675
    %v1677 = vpop.f32.mrf.mxu0
    %v1678 = vadd.f32 %v651, %v1677
    %v1679 = vpop.f32.mrf.mxu0
    %v1680 = vadd.f32 %v656, %v1679
    %v1681 = vpop.f32.mrf.mxu0
    %v1682 = vadd.f32 %v656, %v1681
    %1683 = vmatprep.mubr.bf16.mxu0 %v955
    %1684 = vmatmul.mubr.bf16.gmra.mxu0 %v954
    %v1685 = vpop.f32.mrf.mxu0
    %v1686 = vadd.f32 %v661, %v1685
    %v1687 = vpop.f32.mrf.mxu0
    %v1688 = vadd.f32 %v661, %v1687
    %v1689 = vpop.f32.mrf.mxu0
    %v1690 = vadd.f32 %v666, %v1689
    %v1691 = vpop.f32.mrf.mxu0
    %v1692 = vadd.f32 %v666, %v1691
    %1693 = vmatprep.mubr.bf16.mxu0 %v957
    %1694 = vmatmul.mubr.bf16.gmra.mxu0 %v956
    %v1695 = vpop.f32.mrf.mxu0
    %v1696 = vadd.f32 %v671, %v1695
    %v1697 = vpop.f32.mrf.mxu0
    %v1698 = vadd.f32 %v671, %v1697
    %v1699 = vpop.f32.mrf.mxu0
    %v1700 = vadd.f32 %v676, %v1699
    %v1701 = vpop.f32.mrf.mxu0
    %v1702 = vadd.f32 %v676, %v1701
    %1703 = vmatprep.mubr.bf16.mxu0 %v959
    %1704 = vmatmul.mubr.bf16.gmra.mxu0 %v958
    %v1705 = vpop.f32.mrf.mxu0
    %v1706 = vadd.f32 %v681, %v1705
    %v1707 = vpop.f32.mrf.mxu0
    %v1708 = vadd.f32 %v681, %v1707
    %v1709 = vpop.f32.mrf.mxu0
    %v1710 = vadd.f32 %v686, %v1709
    %v1711 = vpop.f32.mrf.mxu0
    %v1712 = vadd.f32 %v686, %v1711
    %1713 = vmatprep.mubr.bf16.mxu0 %v961
    %1714 = vmatmul.mubr.bf16.gmra.mxu0 %v960
    %v1715 = vpop.f32.mrf.mxu0
    %v1716 = vadd.f32 %v691, %v1715
    %v1717 = vpop.f32.mrf.mxu0
    %v1718 = vadd.f32 %v691, %v1717
    %v1719 = vpop.f32.mrf.mxu0
    %v1720 = vadd.f32 %v696, %v1719
    %v1721 = vpop.f32.mrf.mxu0
    %v1722 = vadd.f32 %v696, %v1721
    %1723 = vmatprep.mubr.bf16.mxu0 %v963
    %1724 = vmatmul.mubr.bf16.gmra.mxu0 %v962
    %v1725 = vpop.f32.mrf.mxu0
    %v1726 = vadd.f32 %v701, %v1725
    %v1727 = vpop.f32.mrf.mxu0
    %v1728 = vadd.f32 %v701, %v1727
    %v1729 = vpop.f32.mrf.mxu0
    %v1730 = vadd.f32 %v706, %v1729
    %v1731 = vpop.f32.mrf.mxu0
    %v1732 = vadd.f32 %v706, %v1731
    %1733 = vdwg.mxu0
    %v1734 = vmax.f32 %v1063, 0.0
    %v1735 = vmax.f32 %v1065, 0.0
    %v1736 = vmax.f32 %v1416, 0.0
    %v1737 = vmax.f32 %v1418, 0.0
    %v1738 = vmax.f32 %v1067, 0.0
    %v1739 = vmax.f32 %v1069, 0.0
    %v1740 = vmax.f32 %v1420, 0.0
    %v1741 = vmax.f32 %v1422, 0.0
    %v1742 = vmax.f32 %v1073, 0.0
    %v1743 = vmax.f32 %v1075, 0.0
    %v1744 = vmax.f32 %v1426, 0.0
    %v1745 = vmax.f32 %v1428, 0.0
    %v1746 = vmax.f32 %v1077, 0.0
    %v1747 = vmax.f32 %v1079, 0.0
    %v1748 = vmax.f32 %v1430, 0.0
    %v1749 = vmax.f32 %v1432, 0.0
    %v1750 = vmax.f32 %v1083, 0.0
    %v1751 = vmax.f32 %v1085, 0.0
    %v1752 = vmax.f32 %v1436, 0.0
    %v1753 = vmax.f32 %v1438, 0.0
    %v1754 = vmax.f32 %v1087, 0.0
    %v1755 = vmax.f32 %v1089, 0.0
    %v1756 = vmax.f32 %v1440, 0.0
    %v1757 = vmax.f32 %v1442, 0.0
    %v1758 = vmax.f32 %v1093, 0.0
    %v1759 = vmax.f32 %v1095, 0.0
    %v1760 = vmax.f32 %v1446, 0.0
    %v1761 = vmax.f32 %v1448, 0.0
    %v1762 = vmax.f32 %v1097, 0.0
    %v1763 = vmax.f32 %v1099, 0.0
    %v1764 = vmax.f32 %v1450, 0.0
    %v1765 = vmax.f32 %v1452, 0.0
    %v1766 = vmax.f32 %v1103, 0.0
    %v1767 = vmax.f32 %v1105, 0.0
    %v1768 = vmax.f32 %v1456, 0.0
    %v1769 = vmax.f32 %v1458, 0.0
    %v1770 = vmax.f32 %v1107, 0.0
    %v1771 = vmax.f32 %v1109, 0.0
    %v1772 = vmax.f32 %v1460, 0.0
    %v1773 = vmax.f32 %v1462, 0.0
    %v1774 = vmax.f32 %v1113, 0.0
    %v1775 = vmax.f32 %v1115, 0.0
    %v1776 = vmax.f32 %v1466, 0.0
    %v1777 = vmax.f32 %v1468, 0.0
    %v1778 = vmax.f32 %v1117, 0.0
    %v1779 = vmax.f32 %v1119, 0.0
    %v1780 = vmax.f32 %v1470, 0.0
    %v1781 = vmax.f32 %v1472, 0.0
    %v1782 = vmax.f32 %v1123, 0.0
    %v1783 = vmax.f32 %v1125, 0.0
    %v1784 = vmax.f32 %v1476, 0.0
    %v1785 = vmax.f32 %v1478, 0.0
    %v1786 = vmax.f32 %v1127, 0.0
    %v1787 = vmax.f32 %v1129, 0.0
    %v1788 = vmax.f32 %v1480, 0.0
    %v1789 = vmax.f32 %v1482, 0.0
    %v1790 = vmax.f32 %v1133, 0.0
    %v1791 = vmax.f32 %v1135, 0.0
    %v1792 = vmax.f32 %v1486, 0.0
    %v1793 = vmax.f32 %v1488, 0.0
    %v1794 = vmax.f32 %v1137, 0.0
    %v1795 = vmax.f32 %v1139, 0.0
    %v1796 = vmax.f32 %v1490, 0.0
    %v1797 = vmax.f32 %v1492, 0.0
    %v1798 = vmax.f32 %v1143, 0.0
    %v1799 = vmax.f32 %v1145, 0.0
    %v1800 = vmax.f32 %v1496, 0.0
    %v1801 = vmax.f32 %v1498, 0.0
    %v1802 = vmax.f32 %v1147, 0.0
    %v1803 = vmax.f32 %v1149, 0.0
    %v1804 = vmax.f32 %v1500, 0.0
    %v1805 = vmax.f32 %v1502, 0.0
    %v1806 = vmax.f32 %v1153, 0.0
    %v1807 = vmax.f32 %v1155, 0.0
    %v1808 = vmax.f32 %v1506, 0.0
    %v1809 = vmax.f32 %v1508, 0.0
    %v1810 = vmax.f32 %v1157, 0.0
    %v1811 = vmax.f32 %v1159, 0.0
    %v1812 = vmax.f32 %v1510, 0.0
    %v1813 = vmax.f32 %v1512, 0.0
    %v1814 = vmax.f32 %v1163, 0.0
    %v1815 = vmax.f32 %v1165, 0.0
    %v1816 = vmax.f32 %v1516, 0.0
    %v1817 = vmax.f32 %v1518, 0.0
    %v1818 = vmax.f32 %v1167, 0.0
    %v1819 = vmax.f32 %v1169, 0.0
    %v1820 = vmax.f32 %v1520, 0.0
    %v1821 = vmax.f32 %v1522, 0.0
    %v1822 = vmax.f32 %v1173, 0.0
    %v1823 = vmax.f32 %v1175, 0.0
    %v1824 = vmax.f32 %v1526, 0.0
    %v1825 = vmax.f32 %v1528, 0.0
    %v1826 = vmax.f32 %v1177, 0.0
    %v1827 = vmax.f32 %v1179, 0.0
    %v1828 = vmax.f32 %v1530, 0.0
    %v1829 = vmax.f32 %v1532, 0.0
    %v1830 = vmax.f32 %v1183, 0.0
    %v1831 = vmax.f32 %v1185, 0.0
    %v1832 = vmax.f32 %v1536, 0.0
    %v1833 = vmax.f32 %v1538, 0.0
    %v1834 = vmax.f32 %v1187, 0.0
    %v1835 = vmax.f32 %v1189, 0.0
    %v1836 = vmax.f32 %v1540, 0.0
    %v1837 = vmax.f32 %v1542, 0.0
    %v1838 = vmax.f32 %v1193, 0.0
    %v1839 = vmax.f32 %v1195, 0.0
    %v1840 = vmax.f32 %v1546, 0.0
    %v1841 = vmax.f32 %v1548, 0.0
    %v1842 = vmax.f32 %v1197, 0.0
    %v1843 = vmax.f32 %v1199, 0.0
    %v1844 = vmax.f32 %v1550, 0.0
    %v1845 = vmax.f32 %v1552, 0.0
    %v1846 = vmax.f32 %v1203, 0.0
    %v1847 = vmax.f32 %v1205, 0.0
    %v1848 = vmax.f32 %v1556, 0.0
    %v1849 = vmax.f32 %v1558, 0.0
    %v1850 = vmax.f32 %v1207, 0.0
    %v1851 = vmax.f32 %v1209, 0.0
    %v1852 = vmax.f32 %v1560, 0.0
    %v1853 = vmax.f32 %v1562, 0.0
    %v1854 = vmax.f32 %v1213, 0.0
    %v1855 = vmax.f32 %v1215, 0.0
    %v1856 = vmax.f32 %v1566, 0.0
    %v1857 = vmax.f32 %v1568, 0.0
    %v1858 = vmax.f32 %v1217, 0.0
    %v1859 = vmax.f32 %v1219, 0.0
    %v1860 = vmax.f32 %v1570, 0.0
    %v1861 = vmax.f32 %v1572, 0.0
    %v1862 = vmax.f32 %v1223, 0.0
    %v1863 = vmax.f32 %v1225, 0.0
    %v1864 = vmax.f32 %v1576, 0.0
    %v1865 = vmax.f32 %v1578, 0.0
    %v1866 = vmax.f32 %v1227, 0.0
    %v1867 = vmax.f32 %v1229, 0.0
    %v1868 = vmax.f32 %v1580, 0.0
    %v1869 = vmax.f32 %v1582, 0.0
    %v1870 = vmax.f32 %v1233, 0.0
    %v1871 = vmax.f32 %v1235, 0.0
    %v1872 = vmax.f32 %v1586, 0.0
    %v1873 = vmax.f32 %v1588, 0.0
    %v1874 = vmax.f32 %v1237, 0.0
    %v1875 = vmax.f32 %v1239, 0.0
    %v1876 = vmax.f32 %v1590, 0.0
    %v1877 = vmax.f32 %v1592, 0.0
    %v1878 = vmax.f32 %v1243, 0.0
    %v1879 = vmax.f32 %v1245, 0.0
    %v1880 = vmax.f32 %v1596, 0.0
    %v1881 = vmax.f32 %v1598, 0.0
    %v1882 = vmax.f32 %v1247, 0.0
    %v1883 = vmax.f32 %v1249, 0.0
    %v1884 = vmax.f32 %v1600, 0.0
    %v1885 = vmax.f32 %v1602, 0.0
    %v1886 = vmax.f32 %v1253, 0.0
    %v1887 = vmax.f32 %v1255, 0.0
    %v1888 = vmax.f32 %v1606, 0.0
    %v1889 = vmax.f32 %v1608, 0.0
    %v1890 = vmax.f32 %v1257, 0.0
    %v1891 = vmax.f32 %v1259, 0.0
    %v1892 = vmax.f32 %v1610, 0.0
    %v1893 = vmax.f32 %v1612, 0.0
    %v1894 = vmax.f32 %v1263, 0.0
    %v1895 = vmax.f32 %v1265, 0.0
    %v1896 = vmax.f32 %v1616, 0.0
    %v1897 = vmax.f32 %v1618, 0.0
    %v1898 = vmax.f32 %v1267, 0.0
    %v1899 = vmax.f32 %v1269, 0.0
    %v1900 = vmax.f32 %v1620, 0.0
    %v1901 = vmax.f32 %v1622, 0.0
    %v1902 = vmax.f32 %v1273, 0.0
    %v1903 = vmax.f32 %v1275, 0.0
    %v1904 = vmax.f32 %v1626, 0.0
    %v1905 = vmax.f32 %v1628, 0.0
    %v1906 = vmax.f32 %v1277, 0.0
    %v1907 = vmax.f32 %v1279, 0.0
    %v1908 = vmax.f32 %v1630, 0.0
    %v1909 = vmax.f32 %v1632, 0.0
    %v1910 = vmax.f32 %v1283, 0.0
    %v1911 = vmax.f32 %v1285, 0.0
    %v1912 = vmax.f32 %v1636, 0.0
    %v1913 = vmax.f32 %v1638, 0.0
    %v1914 = vmax.f32 %v1287, 0.0
    %v1915 = vmax.f32 %v1289, 0.0
    %v1916 = vmax.f32 %v1640, 0.0
    %v1917 = vmax.f32 %v1642, 0.0
    %v1918 = vmax.f32 %v1293, 0.0
    %v1919 = vmax.f32 %v1295, 0.0
    %v1920 = vmax.f32 %v1646, 0.0
    %v1921 = vmax.f32 %v1648, 0.0
    %v1922 = vmax.f32 %v1297, 0.0
    %v1923 = vmax.f32 %v1299, 0.0
    %v1924 = vmax.f32 %v1650, 0.0
    %v1925 = vmax.f32 %v1652, 0.0
    %v1926 = vmax.f32 %v1303, 0.0
    %v1927 = vmax.f32 %v1305, 0.0
    %v1928 = vmax.f32 %v1656, 0.0
    %v1929 = vmax.f32 %v1658, 0.0
    %v1930 = vmax.f32 %v1307, 0.0
    %v1931 = vmax.f32 %v1309, 0.0
    %v1932 = vmax.f32 %v1660, 0.0
    %v1933 = vmax.f32 %v1662, 0.0
    %v1934 = vmax.f32 %v1313, 0.0
    %v1935 = vmax.f32 %v1315, 0.0
    %v1936 = vmax.f32 %v1666, 0.0
    %v1937 = vmax.f32 %v1668, 0.0
    %v1938 = vmax.f32 %v1317, 0.0
    %v1939 = vmax.f32 %v1319, 0.0
    %v1940 = vmax.f32 %v1670, 0.0
    %v1941 = vmax.f32 %v1672, 0.0
    %v1942 = vmax.f32 %v1323, 0.0
    %v1943 = vmax.f32 %v1325, 0.0
    %v1944 = vmax.f32 %v1676, 0.0
    %v1945 = vmax.f32 %v1678, 0.0
    %v1946 = vmax.f32 %v1327, 0.0
    %v1947 = vmax.f32 %v1329, 0.0
    %v1948 = vmax.f32 %v1680, 0.0
    %v1949 = vmax.f32 %v1682, 0.0
    %v1950 = vmax.f32 %v1333, 0.0
    %v1951 = vmax.f32 %v1335, 0.0
    %v1952 = vmax.f32 %v1686, 0.0
    %v1953 = vmax.f32 %v1688, 0.0
    %v1954 = vmax.f32 %v1337, 0.0
    %v1955 = vmax.f32 %v1339, 0.0
    %v1956 = vmax.f32 %v1690, 0.0
    %v1957 = vmax.f32 %v1692, 0.0
    %v1958 = vmax.f32 %v1343, 0.0
    %v1959 = vmax.f32 %v1345, 0.0
    %v1960 = vmax.f32 %v1696, 0.0
    %v1961 = vmax.f32 %v1698, 0.0
    %v1962 = vmax.f32 %v1347, 0.0
    %v1963 = vmax.f32 %v1349, 0.0
    %v1964 = vmax.f32 %v1700, 0.0
    %v1965 = vmax.f32 %v1702, 0.0
    %v1966 = vmax.f32 %v1353, 0.0
    %v1967 = vmax.f32 %v1355, 0.0
    %v1968 = vmax.f32 %v1706, 0.0
    %v1969 = vmax.f32 %v1708, 0.0
    %v1970 = vmax.f32 %v1357, 0.0
    %v1971 = vmax.f32 %v1359, 0.0
    %v1972 = vmax.f32 %v1710, 0.0
    %v1973 = vmax.f32 %v1712, 0.0
    %v1974 = vmax.f32 %v1363, 0.0
    %v1975 = vmax.f32 %v1365, 0.0
    %v1976 = vmax.f32 %v1716, 0.0
    %v1977 = vmax.f32 %v1718, 0.0
    %v1978 = vmax.f32 %v1367, 0.0
    %v1979 = vmax.f32 %v1369, 0.0
    %v1980 = vmax.f32 %v1720, 0.0
    %v1981 = vmax.f32 %v1722, 0.0
    %v1982 = vmax.f32 %v1373, 0.0
    %v1983 = vmax.f32 %v1375, 0.0
    %v1984 = vmax.f32 %v1726, 0.0
    %v1985 = vmax.f32 %v1728, 0.0
    %v1986 = vmax.f32 %v1377, 0.0
    %v1987 = vmax.f32 %v1379, 0.0
    %v1988 = vmax.f32 %v1730, 0.0
    %v1989 = vmax.f32 %v1732, 0.0
    %v1990 = vld [vmem:[#allocation5] sm:$0xff]
    %v1991 = vld [vmem:[#allocation5 + $0x8] sm:$0xff]
    %v1992 = vld [vmem:[#allocation5 + $0x10] sm:$0xff]
    %v1993 = vld [vmem:[#allocation5 + $0x18] sm:$0xff]
    %v1994 = vld [vmem:[#allocation5 + $0x20] sm:$0xff]
    %v1995 = vld [vmem:[#allocation5 + $0x28] sm:$0xff]
    %v1996 = vld [vmem:[#allocation5 + $0x30] sm:$0xff]
    %v1997 = vld [vmem:[#allocation5 + $0x38] sm:$0xff]
    %v1998 = vld [vmem:[#allocation5 + $0x40] sm:$0xff]
    %v1999 = vld [vmem:[#allocation5 + $0x48] sm:$0xff]
    %v2000 = vld [vmem:[#allocation5 + $0x50] sm:$0xff]
    %v2001 = vld [vmem:[#allocation5 + $0x58] sm:$0xff]
    %v2002 = vld [vmem:[#allocation5 + $0x60] sm:$0xff]
    %v2003 = vld [vmem:[#allocation5 + $0x68] sm:$0xff]
    %v2004 = vld [vmem:[#allocation5 + $0x70] sm:$0xff]
    %v2005 = vld [vmem:[#allocation5 + $0x78] sm:$0xff]
    %v2006 = vld [vmem:[#allocation5 + $0x80] sm:$0xff]
    %v2007 = vld [vmem:[#allocation5 + $0x88] sm:$0xff]
    %v2008 = vld [vmem:[#allocation5 + $0x90] sm:$0xff]
    %v2009 = vld [vmem:[#allocation5 + $0x98] sm:$0xff]
    %v2010 = vld [vmem:[#allocation5 + $0xa0] sm:$0xff]
    %v2011 = vld [vmem:[#allocation5 + $0xa8] sm:$0xff]
    %v2012 = vld [vmem:[#allocation5 + $0xb0] sm:$0xff]
    %v2013 = vld [vmem:[#allocation5 + $0xb8] sm:$0xff]
    %v2014 = vld [vmem:[#allocation5 + $0xc0] sm:$0xff]
    %v2015 = vld [vmem:[#allocation5 + $0xc8] sm:$0xff]
    %v2016 = vld [vmem:[#allocation5 + $0xd0] sm:$0xff]
    %v2017 = vld [vmem:[#allocation5 + $0xd8] sm:$0xff]
    %v2018 = vld [vmem:[#allocation5 + $0xe0] sm:$0xff]
    %v2019 = vld [vmem:[#allocation5 + $0xe8] sm:$0xff]
    %v2020 = vld [vmem:[#allocation5 + $0xf0] sm:$0xff]
    %v2021 = vld [vmem:[#allocation5 + $0xf8] sm:$0xff]
    %v2022 = vld [vmem:[#allocation5 + $0x100] sm:$0xff]
    %v2023 = vld [vmem:[#allocation5 + $0x108] sm:$0xff]
    %v2024 = vld [vmem:[#allocation5 + $0x110] sm:$0xff]
    %v2025 = vld [vmem:[#allocation5 + $0x118] sm:$0xff]
    %v2026 = vld [vmem:[#allocation5 + $0x120] sm:$0xff]
    %v2027 = vld [vmem:[#allocation5 + $0x128] sm:$0xff]
    %v2028 = vld [vmem:[#allocation5 + $0x130] sm:$0xff]
    %v2029 = vld [vmem:[#allocation5 + $0x138] sm:$0xff]
    %v2030 = vld [vmem:[#allocation5 + $0x140] sm:$0xff]
    %v2031 = vld [vmem:[#allocation5 + $0x148] sm:$0xff]
    %v2032 = vld [vmem:[#allocation5 + $0x150] sm:$0xff]
    %v2033 = vld [vmem:[#allocation5 + $0x158] sm:$0xff]
    %v2034 = vld [vmem:[#allocation5 + $0x160] sm:$0xff]
    %v2035 = vld [vmem:[#allocation5 + $0x168] sm:$0xff]
    %v2036 = vld [vmem:[#allocation5 + $0x170] sm:$0xff]
    %v2037 = vld [vmem:[#allocation5 + $0x178] sm:$0xff]
    %v2038 = vld [vmem:[#allocation5 + $0x180] sm:$0xff]
    %v2039 = vld [vmem:[#allocation5 + $0x188] sm:$0xff]
    %v2040 = vld [vmem:[#allocation5 + $0x190] sm:$0xff]
    %v2041 = vld [vmem:[#allocation5 + $0x198] sm:$0xff]
    %v2042 = vld [vmem:[#allocation5 + $0x1a0] sm:$0xff]
    %v2043 = vld [vmem:[#allocation5 + $0x1a8] sm:$0xff]
    %v2044 = vld [vmem:[#allocation5 + $0x1b0] sm:$0xff]
    %v2045 = vld [vmem:[#allocation5 + $0x1b8] sm:$0xff]
    %v2046 = vld [vmem:[#allocation5 + $0x1c0] sm:$0xff]
    %v2047 = vld [vmem:[#allocation5 + $0x1c8] sm:$0xff]
    %v2048 = vld [vmem:[#allocation5 + $0x1d0] sm:$0xff]
    %v2049 = vld [vmem:[#allocation5 + $0x1d8] sm:$0xff]
    %v2050 = vld [vmem:[#allocation5 + $0x1e0] sm:$0xff]
    %v2051 = vld [vmem:[#allocation5 + $0x1e8] sm:$0xff]
    %v2052 = vld [vmem:[#allocation5 + $0x1f0] sm:$0xff]
    %v2053 = vld [vmem:[#allocation5 + $0x1f8] sm:$0xff]
    %v2054 = vld [vmem:[#allocation5 + $0x200] sm:$0xff]
    %v2055 = vld [vmem:[#allocation5 + $0x208] sm:$0xff]
    %v2056 = vld [vmem:[#allocation5 + $0x210] sm:$0xff]
    %v2057 = vld [vmem:[#allocation5 + $0x218] sm:$0xff]
    %v2058 = vld [vmem:[#allocation5 + $0x220] sm:$0xff]
    %v2059 = vld [vmem:[#allocation5 + $0x228] sm:$0xff]
    %v2060 = vld [vmem:[#allocation5 + $0x230] sm:$0xff]
    %v2061 = vld [vmem:[#allocation5 + $0x238] sm:$0xff]
    %v2062 = vld [vmem:[#allocation5 + $0x240] sm:$0xff]
    %v2063 = vld [vmem:[#allocation5 + $0x248] sm:$0xff]
    %v2064 = vld [vmem:[#allocation5 + $0x250] sm:$0xff]
    %v2065 = vld [vmem:[#allocation5 + $0x258] sm:$0xff]
    %v2066 = vld [vmem:[#allocation5 + $0x260] sm:$0xff]
    %v2067 = vld [vmem:[#allocation5 + $0x268] sm:$0xff]
    %v2068 = vld [vmem:[#allocation5 + $0x270] sm:$0xff]
    %v2069 = vld [vmem:[#allocation5 + $0x278] sm:$0xff]
    %v2070 = vld [vmem:[#allocation5 + $0x280] sm:$0xff]
    %v2071 = vld [vmem:[#allocation5 + $0x288] sm:$0xff]
    %v2072 = vld [vmem:[#allocation5 + $0x290] sm:$0xff]
    %v2073 = vld [vmem:[#allocation5 + $0x298] sm:$0xff]
    %v2074 = vld [vmem:[#allocation5 + $0x2a0] sm:$0xff]
    %v2075 = vld [vmem:[#allocation5 + $0x2a8] sm:$0xff]
    %v2076 = vld [vmem:[#allocation5 + $0x2b0] sm:$0xff]
    %v2077 = vld [vmem:[#allocation5 + $0x2b8] sm:$0xff]
    %v2078 = vld [vmem:[#allocation5 + $0x2c0] sm:$0xff]
    %v2079 = vld [vmem:[#allocation5 + $0x2c8] sm:$0xff]
    %v2080 = vld [vmem:[#allocation5 + $0x2d0] sm:$0xff]
    %v2081 = vld [vmem:[#allocation5 + $0x2d8] sm:$0xff]
    %v2082 = vld [vmem:[#allocation5 + $0x2e0] sm:$0xff]
    %v2083 = vld [vmem:[#allocation5 + $0x2e8] sm:$0xff]
    %v2084 = vld [vmem:[#allocation5 + $0x2f0] sm:$0xff]
    %v2085 = vld [vmem:[#allocation5 + $0x2f8] sm:$0xff]
    %v2086 = vld [vmem:[#allocation5 + $0x300] sm:$0xff]
    %v2087 = vld [vmem:[#allocation5 + $0x308] sm:$0xff]
    %v2088 = vld [vmem:[#allocation5 + $0x310] sm:$0xff]
    %v2089 = vld [vmem:[#allocation5 + $0x318] sm:$0xff]
    %v2090 = vld [vmem:[#allocation5 + $0x320] sm:$0xff]
    %v2091 = vld [vmem:[#allocation5 + $0x328] sm:$0xff]
    %v2092 = vld [vmem:[#allocation5 + $0x330] sm:$0xff]
    %v2093 = vld [vmem:[#allocation5 + $0x338] sm:$0xff]
    %v2094 = vld [vmem:[#allocation5 + $0x340] sm:$0xff]
    %v2095 = vld [vmem:[#allocation5 + $0x348] sm:$0xff]
    %v2096 = vld [vmem:[#allocation5 + $0x350] sm:$0xff]
    %v2097 = vld [vmem:[#allocation5 + $0x358] sm:$0xff]
    %v2098 = vld [vmem:[#allocation5 + $0x360] sm:$0xff]
    %v2099 = vld [vmem:[#allocation5 + $0x368] sm:$0xff]
    %v2100 = vld [vmem:[#allocation5 + $0x370] sm:$0xff]
    %v2101 = vld [vmem:[#allocation5 + $0x378] sm:$0xff]
    %v2102 = vld [vmem:[#allocation5 + $0x380] sm:$0xff]
    %v2103 = vld [vmem:[#allocation5 + $0x388] sm:$0xff]
    %v2104 = vld [vmem:[#allocation5 + $0x390] sm:$0xff]
    %v2105 = vld [vmem:[#allocation5 + $0x398] sm:$0xff]
    %v2106 = vld [vmem:[#allocation5 + $0x3a0] sm:$0xff]
    %v2107 = vld [vmem:[#allocation5 + $0x3a8] sm:$0xff]
    %v2108 = vld [vmem:[#allocation5 + $0x3b0] sm:$0xff]
    %v2109 = vld [vmem:[#allocation5 + $0x3b8] sm:$0xff]
    %v2110 = vld [vmem:[#allocation5 + $0x3c0] sm:$0xff]
    %v2111 = vld [vmem:[#allocation5 + $0x3c8] sm:$0xff]
    %v2112 = vld [vmem:[#allocation5 + $0x3d0] sm:$0xff]
    %v2113 = vld [vmem:[#allocation5 + $0x3d8] sm:$0xff]
    %v2114 = vld [vmem:[#allocation5 + $0x3e0] sm:$0xff]
    %v2115 = vld [vmem:[#allocation5 + $0x3e8] sm:$0xff]
    %v2116 = vld [vmem:[#allocation5 + $0x3f0] sm:$0xff]
    %v2117 = vld [vmem:[#allocation5 + $0x3f8] sm:$0xff]
    %v2118 = vpack.c.bf16 %v1738, %v1734
    %v2119 = vpack.c.bf16 %v1739, %v1735
    %v2120 = vpack.c.bf16 %v1740, %v1736
    %v2121 = vpack.c.bf16 %v1741, %v1737
    %v2122 = vpack.c.bf16 %v1746, %v1742
    %v2123 = vpack.c.bf16 %v1747, %v1743
    %v2124 = vpack.c.bf16 %v1748, %v1744
    %v2125 = vpack.c.bf16 %v1749, %v1745
    %v2126 = vpack.c.bf16 %v1754, %v1750
    %v2127 = vpack.c.bf16 %v1755, %v1751
    %v2128 = vpack.c.bf16 %v1756, %v1752
    %v2129 = vpack.c.bf16 %v1757, %v1753
    %v2130 = vpack.c.bf16 %v1762, %v1758
    %v2131 = vpack.c.bf16 %v1763, %v1759
    %v2132 = vpack.c.bf16 %v1764, %v1760
    %v2133 = vpack.c.bf16 %v1765, %v1761
    %v2134 = vpack.c.bf16 %v1770, %v1766
    %v2135 = vpack.c.bf16 %v1771, %v1767
    %v2136 = vpack.c.bf16 %v1772, %v1768
    %v2137 = vpack.c.bf16 %v1773, %v1769
    %v2138 = vpack.c.bf16 %v1778, %v1774
    %v2139 = vpack.c.bf16 %v1779, %v1775
    %v2140 = vpack.c.bf16 %v1780, %v1776
    %v2141 = vpack.c.bf16 %v1781, %v1777
    %v2142 = vpack.c.bf16 %v1786, %v1782
    %v2143 = vpack.c.bf16 %v1787, %v1783
    %v2144 = vpack.c.bf16 %v1788, %v1784
    %v2145 = vpack.c.bf16 %v1789, %v1785
    %v2146 = vpack.c.bf16 %v1794, %v1790
    %v2147 = vpack.c.bf16 %v1795, %v1791
    %v2148 = vpack.c.bf16 %v1796, %v1792
    %v2149 = vpack.c.bf16 %v1797, %v1793
    %v2150 = vpack.c.bf16 %v1802, %v1798
    %v2151 = vpack.c.bf16 %v1803, %v1799
    %v2152 = vpack.c.bf16 %v1804, %v1800
    %v2153 = vpack.c.bf16 %v1805, %v1801
    %v2154 = vpack.c.bf16 %v1810, %v1806
    %v2155 = vpack.c.bf16 %v1811, %v1807
    %v2156 = vpack.c.bf16 %v1812, %v1808
    %v2157 = vpack.c.bf16 %v1813, %v1809
    %v2158 = vpack.c.bf16 %v1818, %v1814
    %v2159 = vpack.c.bf16 %v1819, %v1815
    %v2160 = vpack.c.bf16 %v1820, %v1816
    %v2161 = vpack.c.bf16 %v1821, %v1817
    %v2162 = vpack.c.bf16 %v1826, %v1822
    %v2163 = vpack.c.bf16 %v1827, %v1823
    %v2164 = vpack.c.bf16 %v1828, %v1824
    %v2165 = vpack.c.bf16 %v1829, %v1825
    %v2166 = vpack.c.bf16 %v1834, %v1830
    %v2167 = vpack.c.bf16 %v1835, %v1831
    %v2168 = vpack.c.bf16 %v1836, %v1832
    %v2169 = vpack.c.bf16 %v1837, %v1833
    %v2170 = vpack.c.bf16 %v1842, %v1838
    %v2171 = vpack.c.bf16 %v1843, %v1839
    %v2172 = vpack.c.bf16 %v1844, %v1840
    %v2173 = vpack.c.bf16 %v1845, %v1841
    %v2174 = vpack.c.bf16 %v1850, %v1846
    %v2175 = vpack.c.bf16 %v1851, %v1847
    %v2176 = vpack.c.bf16 %v1852, %v1848
    %v2177 = vpack.c.bf16 %v1853, %v1849
    %v2178 = vpack.c.bf16 %v1858, %v1854
    %v2179 = vpack.c.bf16 %v1859, %v1855
    %v2180 = vpack.c.bf16 %v1860, %v1856
    %v2181 = vpack.c.bf16 %v1861, %v1857
    %v2182 = vpack.c.bf16 %v1866, %v1862
    %v2183 = vpack.c.bf16 %v1867, %v1863
    %v2184 = vpack.c.bf16 %v1868, %v1864
    %v2185 = vpack.c.bf16 %v1869, %v1865
    %v2186 = vpack.c.bf16 %v1874, %v1870
    %v2187 = vpack.c.bf16 %v1875, %v1871
    %v2188 = vpack.c.bf16 %v1876, %v1872
    %v2189 = vpack.c.bf16 %v1877, %v1873
    %v2190 = vpack.c.bf16 %v1882, %v1878
    %v2191 = vpack.c.bf16 %v1883, %v1879
    %v2192 = vpack.c.bf16 %v1884, %v1880
    %v2193 = vpack.c.bf16 %v1885, %v1881
    %v2194 = vpack.c.bf16 %v1890, %v1886
    %v2195 = vpack.c.bf16 %v1891, %v1887
    %v2196 = vpack.c.bf16 %v1892, %v1888
    %v2197 = vpack.c.bf16 %v1893, %v1889
    %v2198 = vpack.c.bf16 %v1898, %v1894
    %v2199 = vpack.c.bf16 %v1899, %v1895
    %v2200 = vpack.c.bf16 %v1900, %v1896
    %v2201 = vpack.c.bf16 %v1901, %v1897
    %v2202 = vpack.c.bf16 %v1906, %v1902
    %v2203 = vpack.c.bf16 %v1907, %v1903
    %v2204 = vpack.c.bf16 %v1908, %v1904
    %v2205 = vpack.c.bf16 %v1909, %v1905
    %v2206 = vpack.c.bf16 %v1914, %v1910
    %v2207 = vpack.c.bf16 %v1915, %v1911
    %v2208 = vpack.c.bf16 %v1916, %v1912
    %v2209 = vpack.c.bf16 %v1917, %v1913
    %v2210 = vpack.c.bf16 %v1922, %v1918
    %v2211 = vpack.c.bf16 %v1923, %v1919
    %v2212 = vpack.c.bf16 %v1924, %v1920
    %v2213 = vpack.c.bf16 %v1925, %v1921
    %v2214 = vpack.c.bf16 %v1930, %v1926
    %v2215 = vpack.c.bf16 %v1931, %v1927
    %v2216 = vpack.c.bf16 %v1932, %v1928
    %v2217 = vpack.c.bf16 %v1933, %v1929
    %v2218 = vpack.c.bf16 %v1938, %v1934
    %v2219 = vpack.c.bf16 %v1939, %v1935
    %v2220 = vpack.c.bf16 %v1940, %v1936
    %v2221 = vpack.c.bf16 %v1941, %v1937
    %v2222 = vpack.c.bf16 %v1946, %v1942
    %v2223 = vpack.c.bf16 %v1947, %v1943
    %v2224 = vpack.c.bf16 %v1948, %v1944
    %v2225 = vpack.c.bf16 %v1949, %v1945
    %v2226 = vpack.c.bf16 %v1954, %v1950
    %v2227 = vpack.c.bf16 %v1955, %v1951
    %v2228 = vpack.c.bf16 %v1956, %v1952
    %v2229 = vpack.c.bf16 %v1957, %v1953
    %v2230 = vpack.c.bf16 %v1962, %v1958
    %v2231 = vpack.c.bf16 %v1963, %v1959
    %v2232 = vpack.c.bf16 %v1964, %v1960
    %v2233 = vpack.c.bf16 %v1965, %v1961
    %v2234 = vpack.c.bf16 %v1970, %v1966
    %v2235 = vpack.c.bf16 %v1971, %v1967
    %v2236 = vpack.c.bf16 %v1972, %v1968
    %v2237 = vpack.c.bf16 %v1973, %v1969
    %v2238 = vpack.c.bf16 %v1978, %v1974
    %v2239 = vpack.c.bf16 %v1979, %v1975
    %v2240 = vpack.c.bf16 %v1980, %v1976
    %v2241 = vpack.c.bf16 %v1981, %v1977
    %v2242 = vpack.c.bf16 %v1986, %v1982
    %v2243 = vpack.c.bf16 %v1987, %v1983
    %v2244 = vpack.c.bf16 %v1988, %v1984
    %v2245 = vpack.c.bf16 %v1989, %v1985
    %v2246 = vld [vmem:[%s4] sm:$0xff]
    %v2247 = vld [vmem:[%s4 + $0x8] sm:$0xff]
    %v2248 = vld [vmem:[%s4 + $0x10] sm:$0xff]
    %v2249 = vld [vmem:[%s4 + $0x18] sm:$0xff]
    %v2250 = vld [vmem:[%s4 + $0x20] sm:$0xff]
    %v2251 = vld [vmem:[%s4 + $0x28] sm:$0xff]
    %v2252 = vld [vmem:[%s4 + $0x30] sm:$0xff]
    %v2253 = vld [vmem:[%s4 + $0x38] sm:$0xff]
    %v2254 = vld [vmem:[%s4 + $0x40] sm:$0xff]
    %v2255 = vld [vmem:[%s4 + $0x48] sm:$0xff]
    %v2256 = vld [vmem:[%s4 + $0x50] sm:$0xff]
    %v2257 = vld [vmem:[%s4 + $0x58] sm:$0xff]
    %v2258 = vld [vmem:[%s4 + $0x60] sm:$0xff]
    %v2259 = vld [vmem:[%s4 + $0x68] sm:$0xff]
    %v2260 = vld [vmem:[%s4 + $0x70] sm:$0xff]
    %v2261 = vld [vmem:[%s4 + $0x78] sm:$0xff]
    %v2262 = vld [vmem:[%s4 + $0x80] sm:$0xff]
    %v2263 = vld [vmem:[%s4 + $0x88] sm:$0xff]
    %v2264 = vld [vmem:[%s4 + $0x90] sm:$0xff]
    %v2265 = vld [vmem:[%s4 + $0x98] sm:$0xff]
    %v2266 = vld [vmem:[%s4 + $0xa0] sm:$0xff]
    %v2267 = vld [vmem:[%s4 + $0xa8] sm:$0xff]
    %v2268 = vld [vmem:[%s4 + $0xb0] sm:$0xff]
    %v2269 = vld [vmem:[%s4 + $0xb8] sm:$0xff]
    %v2270 = vld [vmem:[%s4 + $0xc0] sm:$0xff]
    %v2271 = vld [vmem:[%s4 + $0xc8] sm:$0xff]
    %v2272 = vld [vmem:[%s4 + $0xd0] sm:$0xff]
    %v2273 = vld [vmem:[%s4 + $0xd8] sm:$0xff]
    %v2274 = vld [vmem:[%s4 + $0xe0] sm:$0xff]
    %v2275 = vld [vmem:[%s4 + $0xe8] sm:$0xff]
    %v2276 = vld [vmem:[%s4 + $0xf0] sm:$0xff]
    %v2277 = vld [vmem:[%s4 + $0xf8] sm:$0xff]
    %v2278 = vld [vmem:[%s4 + $0x100] sm:$0xff]
    %v2279 = vld [vmem:[%s4 + $0x108] sm:$0xff]
    %v2280 = vld [vmem:[%s4 + $0x110] sm:$0xff]
    %v2281 = vld [vmem:[%s4 + $0x118] sm:$0xff]
    %v2282 = vld [vmem:[%s4 + $0x120] sm:$0xff]
    %v2283 = vld [vmem:[%s4 + $0x128] sm:$0xff]
    %v2284 = vld [vmem:[%s4 + $0x130] sm:$0xff]
    %v2285 = vld [vmem:[%s4 + $0x138] sm:$0xff]
    %v2286 = vld [vmem:[%s4 + $0x140] sm:$0xff]
    %v2287 = vld [vmem:[%s4 + $0x148] sm:$0xff]
    %v2288 = vld [vmem:[%s4 + $0x150] sm:$0xff]
    %v2289 = vld [vmem:[%s4 + $0x158] sm:$0xff]
    %v2290 = vld [vmem:[%s4 + $0x160] sm:$0xff]
    %v2291 = vld [vmem:[%s4 + $0x168] sm:$0xff]
    %v2292 = vld [vmem:[%s4 + $0x170] sm:$0xff]
    %v2293 = vld [vmem:[%s4 + $0x178] sm:$0xff]
    %v2294 = vld [vmem:[%s4 + $0x180] sm:$0xff]
    %v2295 = vld [vmem:[%s4 + $0x188] sm:$0xff]
    %v2296 = vld [vmem:[%s4 + $0x190] sm:$0xff]
    %v2297 = vld [vmem:[%s4 + $0x198] sm:$0xff]
    %v2298 = vld [vmem:[%s4 + $0x1a0] sm:$0xff]
    %v2299 = vld [vmem:[%s4 + $0x1a8] sm:$0xff]
    %v2300 = vld [vmem:[%s4 + $0x1b0] sm:$0xff]
    %v2301 = vld [vmem:[%s4 + $0x1b8] sm:$0xff]
    %v2302 = vld [vmem:[%s4 + $0x1c0] sm:$0xff]
    %v2303 = vld [vmem:[%s4 + $0x1c8] sm:$0xff]
    %v2304 = vld [vmem:[%s4 + $0x1d0] sm:$0xff]
    %v2305 = vld [vmem:[%s4 + $0x1d8] sm:$0xff]
    %v2306 = vld [vmem:[%s4 + $0x1e0] sm:$0xff]
    %v2307 = vld [vmem:[%s4 + $0x1e8] sm:$0xff]
    %v2308 = vld [vmem:[%s4 + $0x1f0] sm:$0xff]
    %v2309 = vld [vmem:[%s4 + $0x1f8] sm:$0xff]
    %2311 = vset.pattern.permute.xlu0 0
    %2312 = vperm.xlu0 %2311, %v2246
    %v2313 = vpop.permute.xlu0 %2312
    %2316 = vset.pattern.permute.xlu0 0
    %2317 = vperm.xlu0 %2316, %v2247
    %v2318 = vpop.permute.xlu0 %2317
    %2321 = vset.pattern.permute.xlu0 0
    %2322 = vperm.xlu0 %2321, %v2248
    %v2323 = vpop.permute.xlu0 %2322
    %2326 = vset.pattern.permute.xlu0 0
    %2327 = vperm.xlu0 %2326, %v2249
    %v2328 = vpop.permute.xlu0 %2327
    %2331 = vset.pattern.permute.xlu0 0
    %2332 = vperm.xlu0 %2331, %v2250
    %v2333 = vpop.permute.xlu0 %2332
    %2336 = vset.pattern.permute.xlu0 0
    %2337 = vperm.xlu0 %2336, %v2251
    %v2338 = vpop.permute.xlu0 %2337
    %2341 = vset.pattern.permute.xlu0 0
    %2342 = vperm.xlu0 %2341, %v2252
    %v2343 = vpop.permute.xlu0 %2342
    %2346 = vset.pattern.permute.xlu0 0
    %2347 = vperm.xlu0 %2346, %v2253
    %v2348 = vpop.permute.xlu0 %2347
    %2351 = vset.pattern.permute.xlu0 0
    %2352 = vperm.xlu0 %2351, %v2254
    %v2353 = vpop.permute.xlu0 %2352
    %2356 = vset.pattern.permute.xlu0 0
    %2357 = vperm.xlu0 %2356, %v2255
    %v2358 = vpop.permute.xlu0 %2357
    %2361 = vset.pattern.permute.xlu0 0
    %2362 = vperm.xlu0 %2361, %v2256
    %v2363 = vpop.permute.xlu0 %2362
    %2366 = vset.pattern.permute.xlu0 0
    %2367 = vperm.xlu0 %2366, %v2257
    %v2368 = vpop.permute.xlu0 %2367
    %2371 = vset.pattern.permute.xlu0 0
    %2372 = vperm.xlu0 %2371, %v2258
    %v2373 = vpop.permute.xlu0 %2372
    %2376 = vset.pattern.permute.xlu0 0
    %2377 = vperm.xlu0 %2376, %v2259
    %v2378 = vpop.permute.xlu0 %2377
    %2381 = vset.pattern.permute.xlu0 0
    %2382 = vperm.xlu0 %2381, %v2260
    %v2383 = vpop.permute.xlu0 %2382
    %2386 = vset.pattern.permute.xlu0 0
    %2387 = vperm.xlu0 %2386, %v2261
    %v2388 = vpop.permute.xlu0 %2387
    %2391 = vset.pattern.permute.xlu0 0
    %2392 = vperm.xlu0 %2391, %v2262
    %v2393 = vpop.permute.xlu0 %2392
    %2396 = vset.pattern.permute.xlu0 0
    %2397 = vperm.xlu0 %2396, %v2263
    %v2398 = vpop.permute.xlu0 %2397
    %2401 = vset.pattern.permute.xlu0 0
    %2402 = vperm.xlu0 %2401, %v2264
    %v2403 = vpop.permute.xlu0 %2402
    %2406 = vset.pattern.permute.xlu0 0
    %2407 = vperm.xlu0 %2406, %v2265
    %v2408 = vpop.permute.xlu0 %2407
    %2411 = vset.pattern.permute.xlu0 0
    %2412 = vperm.xlu0 %2411, %v2266
    %v2413 = vpop.permute.xlu0 %2412
    %2416 = vset.pattern.permute.xlu0 0
    %2417 = vperm.xlu0 %2416, %v2267
    %v2418 = vpop.permute.xlu0 %2417
    %2421 = vset.pattern.permute.xlu0 0
    %2422 = vperm.xlu0 %2421, %v2268
    %v2423 = vpop.permute.xlu0 %2422
    %2426 = vset.pattern.permute.xlu0 0
    %2427 = vperm.xlu0 %2426, %v2269
    %v2428 = vpop.permute.xlu0 %2427
    %2431 = vset.pattern.permute.xlu0 0
    %2432 = vperm.xlu0 %2431, %v2270
    %v2433 = vpop.permute.xlu0 %2432
    %2436 = vset.pattern.permute.xlu0 0
    %2437 = vperm.xlu0 %2436, %v2271
    %v2438 = vpop.permute.xlu0 %2437
    %2441 = vset.pattern.permute.xlu0 0
    %2442 = vperm.xlu0 %2441, %v2272
    %v2443 = vpop.permute.xlu0 %2442
    %2446 = vset.pattern.permute.xlu0 0
    %2447 = vperm.xlu0 %2446, %v2273
    %v2448 = vpop.permute.xlu0 %2447
    %2451 = vset.pattern.permute.xlu0 0
    %2452 = vperm.xlu0 %2451, %v2274
    %v2453 = vpop.permute.xlu0 %2452
    %2456 = vset.pattern.permute.xlu0 0
    %2457 = vperm.xlu0 %2456, %v2275
    %v2458 = vpop.permute.xlu0 %2457
    %2461 = vset.pattern.permute.xlu0 0
    %2462 = vperm.xlu0 %2461, %v2276
    %v2463 = vpop.permute.xlu0 %2462
    %2466 = vset.pattern.permute.xlu0 0
    %2467 = vperm.xlu0 %2466, %v2277
    %v2468 = vpop.permute.xlu0 %2467
    %2471 = vset.pattern.permute.xlu0 0
    %2472 = vperm.xlu0 %2471, %v2278
    %v2473 = vpop.permute.xlu0 %2472
    %2476 = vset.pattern.permute.xlu0 0
    %2477 = vperm.xlu0 %2476, %v2279
    %v2478 = vpop.permute.xlu0 %2477
    %2481 = vset.pattern.permute.xlu0 0
    %2482 = vperm.xlu0 %2481, %v2280
    %v2483 = vpop.permute.xlu0 %2482
    %2486 = vset.pattern.permute.xlu0 0
    %2487 = vperm.xlu0 %2486, %v2281
    %v2488 = vpop.permute.xlu0 %2487
    %2491 = vset.pattern.permute.xlu0 0
    %2492 = vperm.xlu0 %2491, %v2282
    %v2493 = vpop.permute.xlu0 %2492
    %2496 = vset.pattern.permute.xlu0 0
    %2497 = vperm.xlu0 %2496, %v2283
    %v2498 = vpop.permute.xlu0 %2497
    %2501 = vset.pattern.permute.xlu0 0
    %2502 = vperm.xlu0 %2501, %v2284
    %v2503 = vpop.permute.xlu0 %2502
    %2506 = vset.pattern.permute.xlu0 0
    %2507 = vperm.xlu0 %2506, %v2285
    %v2508 = vpop.permute.xlu0 %2507
    %2511 = vset.pattern.permute.xlu0 0
    %2512 = vperm.xlu0 %2511, %v2286
    %v2513 = vpop.permute.xlu0 %2512
    %2516 = vset.pattern.permute.xlu0 0
    %2517 = vperm.xlu0 %2516, %v2287
    %v2518 = vpop.permute.xlu0 %2517
    %2521 = vset.pattern.permute.xlu0 0
    %2522 = vperm.xlu0 %2521, %v2288
    %v2523 = vpop.permute.xlu0 %2522
    %2526 = vset.pattern.permute.xlu0 0
    %2527 = vperm.xlu0 %2526, %v2289
    %v2528 = vpop.permute.xlu0 %2527
    %2531 = vset.pattern.permute.xlu0 0
    %2532 = vperm.xlu0 %2531, %v2290
    %v2533 = vpop.permute.xlu0 %2532
    %2536 = vset.pattern.permute.xlu0 0
    %2537 = vperm.xlu0 %2536, %v2291
    %v2538 = vpop.permute.xlu0 %2537
    %2541 = vset.pattern.permute.xlu0 0
    %2542 = vperm.xlu0 %2541, %v2292
    %v2543 = vpop.permute.xlu0 %2542
    %2546 = vset.pattern.permute.xlu0 0
    %2547 = vperm.xlu0 %2546, %v2293
    %v2548 = vpop.permute.xlu0 %2547
    %2551 = vset.pattern.permute.xlu0 0
    %2552 = vperm.xlu0 %2551, %v2294
    %v2553 = vpop.permute.xlu0 %2552
    %2556 = vset.pattern.permute.xlu0 0
    %2557 = vperm.xlu0 %2556, %v2295
    %v2558 = vpop.permute.xlu0 %2557
    %2561 = vset.pattern.permute.xlu0 0
    %2562 = vperm.xlu0 %2561, %v2296
    %v2563 = vpop.permute.xlu0 %2562
    %2566 = vset.pattern.permute.xlu0 0
    %2567 = vperm.xlu0 %2566, %v2297
    %v2568 = vpop.permute.xlu0 %2567
    %2571 = vset.pattern.permute.xlu0 0
    %2572 = vperm.xlu0 %2571, %v2298
    %v2573 = vpop.permute.xlu0 %2572
    %2576 = vset.pattern.permute.xlu0 0
    %2577 = vperm.xlu0 %2576, %v2299
    %v2578 = vpop.permute.xlu0 %2577
    %2581 = vset.pattern.permute.xlu0 0
    %2582 = vperm.xlu0 %2581, %v2300
    %v2583 = vpop.permute.xlu0 %2582
    %2586 = vset.pattern.permute.xlu0 0
    %2587 = vperm.xlu0 %2586, %v2301
    %v2588 = vpop.permute.xlu0 %2587
    %2591 = vset.pattern.permute.xlu0 0
    %2592 = vperm.xlu0 %2591, %v2302
    %v2593 = vpop.permute.xlu0 %2592
    %2596 = vset.pattern.permute.xlu0 0
    %2597 = vperm.xlu0 %2596, %v2303
    %v2598 = vpop.permute.xlu0 %2597
    %2601 = vset.pattern.permute.xlu0 0
    %2602 = vperm.xlu0 %2601, %v2304
    %v2603 = vpop.permute.xlu0 %2602
    %2606 = vset.pattern.permute.xlu0 0
    %2607 = vperm.xlu0 %2606, %v2305
    %v2608 = vpop.permute.xlu0 %2607
    %2611 = vset.pattern.permute.xlu0 0
    %2612 = vperm.xlu0 %2611, %v2306
    %v2613 = vpop.permute.xlu0 %2612
    %2616 = vset.pattern.permute.xlu0 0
    %2617 = vperm.xlu0 %2616, %v2307
    %v2618 = vpop.permute.xlu0 %2617
    %2621 = vset.pattern.permute.xlu0 0
    %2622 = vperm.xlu0 %2621, %v2308
    %v2623 = vpop.permute.xlu0 %2622
    %2626 = vset.pattern.permute.xlu0 0
    %2627 = vperm.xlu0 %2626, %v2309
    %v2628 = vpop.permute.xlu0 %2627
    %v2758 = vunpack.c.l.b16 %v1990
    %v2759 = vunpack.c.h.b16 %v1990
    %v2760 = vunpack.c.l.b16 %v1991
    %v2761 = vunpack.c.h.b16 %v1991
    %v2762 = vunpack.c.l.b16 %v1992
    %v2763 = vunpack.c.h.b16 %v1992
    %v2764 = vunpack.c.l.b16 %v1993
    %v2765 = vunpack.c.h.b16 %v1993
    %v2766 = vunpack.c.l.b16 %v1994
    %v2767 = vunpack.c.h.b16 %v1994
    %v2768 = vunpack.c.l.b16 %v1995
    %v2769 = vunpack.c.h.b16 %v1995
    %v2770 = vunpack.c.l.b16 %v1996
    %v2771 = vunpack.c.h.b16 %v1996
    %v2772 = vunpack.c.l.b16 %v1997
    %v2773 = vunpack.c.h.b16 %v1997
    %v2774 = vunpack.c.l.b16 %v1998
    %v2775 = vunpack.c.h.b16 %v1998
    %v2776 = vunpack.c.l.b16 %v1999
    %v2777 = vunpack.c.h.b16 %v1999
    %v2778 = vunpack.c.l.b16 %v2000
    %v2779 = vunpack.c.h.b16 %v2000
    %v2780 = vunpack.c.l.b16 %v2001
    %v2781 = vunpack.c.h.b16 %v2001
    %v2782 = vunpack.c.l.b16 %v2002
    %v2783 = vunpack.c.h.b16 %v2002
    %v2784 = vunpack.c.l.b16 %v2003
    %v2785 = vunpack.c.h.b16 %v2003
    %v2786 = vunpack.c.l.b16 %v2004
    %v2787 = vunpack.c.h.b16 %v2004
    %v2788 = vunpack.c.l.b16 %v2005
    %v2789 = vunpack.c.h.b16 %v2005
    %v2790 = vunpack.c.l.b16 %v2006
    %v2791 = vunpack.c.h.b16 %v2006
    %v2792 = vunpack.c.l.b16 %v2007
    %v2793 = vunpack.c.h.b16 %v2007
    %v2794 = vunpack.c.l.b16 %v2008
    %v2795 = vunpack.c.h.b16 %v2008
    %v2796 = vunpack.c.l.b16 %v2009
    %v2797 = vunpack.c.h.b16 %v2009
    %v2798 = vunpack.c.l.b16 %v2010
    %v2799 = vunpack.c.h.b16 %v2010
    %v2800 = vunpack.c.l.b16 %v2011
    %v2801 = vunpack.c.h.b16 %v2011
    %v2802 = vunpack.c.l.b16 %v2012
    %v2803 = vunpack.c.h.b16 %v2012
    %v2804 = vunpack.c.l.b16 %v2013
    %v2805 = vunpack.c.h.b16 %v2013
    %v2806 = vunpack.c.l.b16 %v2014
    %v2807 = vunpack.c.h.b16 %v2014
    %v2808 = vunpack.c.l.b16 %v2015
    %v2809 = vunpack.c.h.b16 %v2015
    %v2810 = vunpack.c.l.b16 %v2016
    %v2811 = vunpack.c.h.b16 %v2016
    %v2812 = vunpack.c.l.b16 %v2017
    %v2813 = vunpack.c.h.b16 %v2017
    %v2814 = vunpack.c.l.b16 %v2018
    %v2815 = vunpack.c.h.b16 %v2018
    %v2816 = vunpack.c.l.b16 %v2019
    %v2817 = vunpack.c.h.b16 %v2019
    %v2818 = vunpack.c.l.b16 %v2020
    %v2819 = vunpack.c.h.b16 %v2020
    %v2820 = vunpack.c.l.b16 %v2021
    %v2821 = vunpack.c.h.b16 %v2021
    %v2822 = vunpack.c.l.b16 %v2022
    %v2823 = vunpack.c.h.b16 %v2022
    %v2824 = vunpack.c.l.b16 %v2023
    %v2825 = vunpack.c.h.b16 %v2023
    %v2826 = vunpack.c.l.b16 %v2024
    %v2827 = vunpack.c.h.b16 %v2024
    %v2828 = vunpack.c.l.b16 %v2025
    %v2829 = vunpack.c.h.b16 %v2025
    %v2830 = vunpack.c.l.b16 %v2026
    %v2831 = vunpack.c.h.b16 %v2026
    %v2832 = vunpack.c.l.b16 %v2027
    %v2833 = vunpack.c.h.b16 %v2027
    %v2834 = vunpack.c.l.b16 %v2028
    %v2835 = vunpack.c.h.b16 %v2028
    %v2836 = vunpack.c.l.b16 %v2029
    %v2837 = vunpack.c.h.b16 %v2029
    %v2838 = vunpack.c.l.b16 %v2030
    %v2839 = vunpack.c.h.b16 %v2030
    %v2840 = vunpack.c.l.b16 %v2031
    %v2841 = vunpack.c.h.b16 %v2031
    %v2842 = vunpack.c.l.b16 %v2032
    %v2843 = vunpack.c.h.b16 %v2032
    %v2844 = vunpack.c.l.b16 %v2033
    %v2845 = vunpack.c.h.b16 %v2033
    %v2846 = vunpack.c.l.b16 %v2034
    %v2847 = vunpack.c.h.b16 %v2034
    %v2848 = vunpack.c.l.b16 %v2035
    %v2849 = vunpack.c.h.b16 %v2035
    %v2850 = vunpack.c.l.b16 %v2036
    %v2851 = vunpack.c.h.b16 %v2036
    %v2852 = vunpack.c.l.b16 %v2037
    %v2853 = vunpack.c.h.b16 %v2037
    %v2854 = vunpack.c.l.b16 %v2038
    %v2855 = vunpack.c.h.b16 %v2038
    %v2856 = vunpack.c.l.b16 %v2039
    %v2857 = vunpack.c.h.b16 %v2039
    %v2858 = vunpack.c.l.b16 %v2040
    %v2859 = vunpack.c.h.b16 %v2040
    %v2860 = vunpack.c.l.b16 %v2041
    %v2861 = vunpack.c.h.b16 %v2041
    %v2862 = vunpack.c.l.b16 %v2042
    %v2863 = vunpack.c.h.b16 %v2042
    %v2864 = vunpack.c.l.b16 %v2043
    %v2865 = vunpack.c.h.b16 %v2043
    %v2866 = vunpack.c.l.b16 %v2044
    %v2867 = vunpack.c.h.b16 %v2044
    %v2868 = vunpack.c.l.b16 %v2045
    %v2869 = vunpack.c.h.b16 %v2045
    %v2870 = vunpack.c.l.b16 %v2046
    %v2871 = vunpack.c.h.b16 %v2046
    %v2872 = vunpack.c.l.b16 %v2047
    %v2873 = vunpack.c.h.b16 %v2047
    %v2874 = vunpack.c.l.b16 %v2048
    %v2875 = vunpack.c.h.b16 %v2048
    %v2876 = vunpack.c.l.b16 %v2049
    %v2877 = vunpack.c.h.b16 %v2049
    %v2878 = vunpack.c.l.b16 %v2050
    %v2879 = vunpack.c.h.b16 %v2050
    %v2880 = vunpack.c.l.b16 %v2051
    %v2881 = vunpack.c.h.b16 %v2051
    %v2882 = vunpack.c.l.b16 %v2052
    %v2883 = vunpack.c.h.b16 %v2052
    %v2884 = vunpack.c.l.b16 %v2053
    %v2885 = vunpack.c.h.b16 %v2053
    %v2886 = vunpack.c.l.b16 %v2054
    %v2887 = vunpack.c.h.b16 %v2054
    %v2888 = vunpack.c.l.b16 %v2055
    %v2889 = vunpack.c.h.b16 %v2055
    %v2890 = vunpack.c.l.b16 %v2056
    %v2891 = vunpack.c.h.b16 %v2056
    %v2892 = vunpack.c.l.b16 %v2057
    %v2893 = vunpack.c.h.b16 %v2057
    %v2894 = vunpack.c.l.b16 %v2058
    %v2895 = vunpack.c.h.b16 %v2058
    %v2896 = vunpack.c.l.b16 %v2059
    %v2897 = vunpack.c.h.b16 %v2059
    %v2898 = vunpack.c.l.b16 %v2060
    %v2899 = vunpack.c.h.b16 %v2060
    %v2900 = vunpack.c.l.b16 %v2061
    %v2901 = vunpack.c.h.b16 %v2061
    %v2902 = vunpack.c.l.b16 %v2062
    %v2903 = vunpack.c.h.b16 %v2062
    %v2904 = vunpack.c.l.b16 %v2063
    %v2905 = vunpack.c.h.b16 %v2063
    %v2906 = vunpack.c.l.b16 %v2064
    %v2907 = vunpack.c.h.b16 %v2064
    %v2908 = vunpack.c.l.b16 %v2065
    %v2909 = vunpack.c.h.b16 %v2065
    %v2910 = vunpack.c.l.b16 %v2066
    %v2911 = vunpack.c.h.b16 %v2066
    %v2912 = vunpack.c.l.b16 %v2067
    %v2913 = vunpack.c.h.b16 %v2067
    %v2914 = vunpack.c.l.b16 %v2068
    %v2915 = vunpack.c.h.b16 %v2068
    %v2916 = vunpack.c.l.b16 %v2069
    %v2917 = vunpack.c.h.b16 %v2069
    %v2918 = vunpack.c.l.b16 %v2070
    %v2919 = vunpack.c.h.b16 %v2070
    %v2920 = vunpack.c.l.b16 %v2071
    %v2921 = vunpack.c.h.b16 %v2071
    %v2922 = vunpack.c.l.b16 %v2072
    %v2923 = vunpack.c.h.b16 %v2072
    %v2924 = vunpack.c.l.b16 %v2073
    %v2925 = vunpack.c.h.b16 %v2073
    %v2926 = vunpack.c.l.b16 %v2074
    %v2927 = vunpack.c.h.b16 %v2074
    %v2928 = vunpack.c.l.b16 %v2075
    %v2929 = vunpack.c.h.b16 %v2075
    %v2930 = vunpack.c.l.b16 %v2076
    %v2931 = vunpack.c.h.b16 %v2076
    %v2932 = vunpack.c.l.b16 %v2077
    %v2933 = vunpack.c.h.b16 %v2077
    %v2934 = vunpack.c.l.b16 %v2078
    %v2935 = vunpack.c.h.b16 %v2078
    %v2936 = vunpack.c.l.b16 %v2079
    %v2937 = vunpack.c.h.b16 %v2079
    %v2938 = vunpack.c.l.b16 %v2080
    %v2939 = vunpack.c.h.b16 %v2080
    %v2940 = vunpack.c.l.b16 %v2081
    %v2941 = vunpack.c.h.b16 %v2081
    %v2942 = vunpack.c.l.b16 %v2082
    %v2943 = vunpack.c.h.b16 %v2082
    %v2944 = vunpack.c.l.b16 %v2083
    %v2945 = vunpack.c.h.b16 %v2083
    %v2946 = vunpack.c.l.b16 %v2084
    %v2947 = vunpack.c.h.b16 %v2084
    %v2948 = vunpack.c.l.b16 %v2085
    %v2949 = vunpack.c.h.b16 %v2085
    %v2950 = vunpack.c.l.b16 %v2086
    %v2951 = vunpack.c.h.b16 %v2086
    %v2952 = vunpack.c.l.b16 %v2087
    %v2953 = vunpack.c.h.b16 %v2087
    %v2954 = vunpack.c.l.b16 %v2088
    %v2955 = vunpack.c.h.b16 %v2088
    %v2956 = vunpack.c.l.b16 %v2089
    %v2957 = vunpack.c.h.b16 %v2089
    %v2958 = vunpack.c.l.b16 %v2090
    %v2959 = vunpack.c.h.b16 %v2090
    %v2960 = vunpack.c.l.b16 %v2091
    %v2961 = vunpack.c.h.b16 %v2091
    %v2962 = vunpack.c.l.b16 %v2092
    %v2963 = vunpack.c.h.b16 %v2092
    %v2964 = vunpack.c.l.b16 %v2093
    %v2965 = vunpack.c.h.b16 %v2093
    %v2966 = vunpack.c.l.b16 %v2094
    %v2967 = vunpack.c.h.b16 %v2094
    %v2968 = vunpack.c.l.b16 %v2095
    %v2969 = vunpack.c.h.b16 %v2095
    %v2970 = vunpack.c.l.b16 %v2096
    %v2971 = vunpack.c.h.b16 %v2096
    %v2972 = vunpack.c.l.b16 %v2097
    %v2973 = vunpack.c.h.b16 %v2097
    %v2974 = vunpack.c.l.b16 %v2098
    %v2975 = vunpack.c.h.b16 %v2098
    %v2976 = vunpack.c.l.b16 %v2099
    %v2977 = vunpack.c.h.b16 %v2099
    %v2978 = vunpack.c.l.b16 %v2100
    %v2979 = vunpack.c.h.b16 %v2100
    %v2980 = vunpack.c.l.b16 %v2101
    %v2981 = vunpack.c.h.b16 %v2101
    %v2982 = vunpack.c.l.b16 %v2102
    %v2983 = vunpack.c.h.b16 %v2102
    %v2984 = vunpack.c.l.b16 %v2103
    %v2985 = vunpack.c.h.b16 %v2103
    %v2986 = vunpack.c.l.b16 %v2104
    %v2987 = vunpack.c.h.b16 %v2104
    %v2988 = vunpack.c.l.b16 %v2105
    %v2989 = vunpack.c.h.b16 %v2105
    %v2990 = vunpack.c.l.b16 %v2106
    %v2991 = vunpack.c.h.b16 %v2106
    %v2992 = vunpack.c.l.b16 %v2107
    %v2993 = vunpack.c.h.b16 %v2107
    %v2994 = vunpack.c.l.b16 %v2108
    %v2995 = vunpack.c.h.b16 %v2108
    %v2996 = vunpack.c.l.b16 %v2109
    %v2997 = vunpack.c.h.b16 %v2109
    %v2998 = vunpack.c.l.b16 %v2110
    %v2999 = vunpack.c.h.b16 %v2110
    %v3000 = vunpack.c.l.b16 %v2111
    %v3001 = vunpack.c.h.b16 %v2111
    %v3002 = vunpack.c.l.b16 %v2112
    %v3003 = vunpack.c.h.b16 %v2112
    %v3004 = vunpack.c.l.b16 %v2113
    %v3005 = vunpack.c.h.b16 %v2113
    %v3006 = vunpack.c.l.b16 %v2114
    %v3007 = vunpack.c.h.b16 %v2114
    %v3008 = vunpack.c.l.b16 %v2115
    %v3009 = vunpack.c.h.b16 %v2115
    %v3010 = vunpack.c.l.b16 %v2116
    %v3011 = vunpack.c.h.b16 %v2116
    %v3012 = vunpack.c.l.b16 %v2117
    %v3013 = vunpack.c.h.b16 %v2117
    %v3014 = vpack.c.b16 %v2762, %v2758
    %v3015 = vpack.c.b16 %v2763, %v2759
    %v3016 = vpack.c.b16 %v2764, %v2760
    %v3017 = vpack.c.b16 %v2765, %v2761
    %v3018 = vpack.c.b16 %v2770, %v2766
    %v3019 = vpack.c.b16 %v2771, %v2767
    %v3020 = vpack.c.b16 %v2772, %v2768
    %v3021 = vpack.c.b16 %v2773, %v2769
    %v3022 = vpack.c.b16 %v2778, %v2774
    %v3023 = vpack.c.b16 %v2779, %v2775
    %v3024 = vpack.c.b16 %v2780, %v2776
    %v3025 = vpack.c.b16 %v2781, %v2777
    %v3026 = vpack.c.b16 %v2786, %v2782
    %v3027 = vpack.c.b16 %v2787, %v2783
    %v3028 = vpack.c.b16 %v2788, %v2784
    %v3029 = vpack.c.b16 %v2789, %v2785
    %v3030 = vpack.c.b16 %v2794, %v2790
    %v3031 = vpack.c.b16 %v2795, %v2791
    %v3032 = vpack.c.b16 %v2796, %v2792
    %v3033 = vpack.c.b16 %v2797, %v2793
    %v3034 = vpack.c.b16 %v2802, %v2798
    %v3035 = vpack.c.b16 %v2803, %v2799
    %v3036 = vpack.c.b16 %v2804, %v2800
    %v3037 = vpack.c.b16 %v2805, %v2801
    %v3038 = vpack.c.b16 %v2810, %v2806
    %v3039 = vpack.c.b16 %v2811, %v2807
    %v3040 = vpack.c.b16 %v2812, %v2808
    %v3041 = vpack.c.b16 %v2813, %v2809
    %v3042 = vpack.c.b16 %v2818, %v2814
    %v3043 = vpack.c.b16 %v2819, %v2815
    %v3044 = vpack.c.b16 %v2820, %v2816
    %v3045 = vpack.c.b16 %v2821, %v2817
    %v3046 = vpack.c.b16 %v2826, %v2822
    %v3047 = vpack.c.b16 %v2827, %v2823
    %v3048 = vpack.c.b16 %v2828, %v2824
    %v3049 = vpack.c.b16 %v2829, %v2825
    %v3050 = vpack.c.b16 %v2834, %v2830
    %v3051 = vpack.c.b16 %v2835, %v2831
    %v3052 = vpack.c.b16 %v2836, %v2832
    %v3053 = vpack.c.b16 %v2837, %v2833
    %v3054 = vpack.c.b16 %v2842, %v2838
    %v3055 = vpack.c.b16 %v2843, %v2839
    %v3056 = vpack.c.b16 %v2844, %v2840
    %v3057 = vpack.c.b16 %v2845, %v2841
    %v3058 = vpack.c.b16 %v2850, %v2846
    %v3059 = vpack.c.b16 %v2851, %v2847
    %v3060 = vpack.c.b16 %v2852, %v2848
    %v3061 = vpack.c.b16 %v2853, %v2849
    %v3062 = vpack.c.b16 %v2858, %v2854
    %v3063 = vpack.c.b16 %v2859, %v2855
    %v3064 = vpack.c.b16 %v2860, %v2856
    %v3065 = vpack.c.b16 %v2861, %v2857
    %v3066 = vpack.c.b16 %v2866, %v2862
    %v3067 = vpack.c.b16 %v2867, %v2863
    %v3068 = vpack.c.b16 %v2868, %v2864
    %v3069 = vpack.c.b16 %v2869, %v2865
    %v3070 = vpack.c.b16 %v2874, %v2870
    %v3071 = vpack.c.b16 %v2875, %v2871
    %v3072 = vpack.c.b16 %v2876, %v2872
    %v3073 = vpack.c.b16 %v2877, %v2873
    %v3074 = vpack.c.b16 %v2882, %v2878
    %v3075 = vpack.c.b16 %v2883, %v2879
    %v3076 = vpack.c.b16 %v2884, %v2880
    %v3077 = vpack.c.b16 %v2885, %v2881
    %v3078 = vpack.c.b16 %v2890, %v2886
    %v3079 = vpack.c.b16 %v2891, %v2887
    %v3080 = vpack.c.b16 %v2892, %v2888
    %v3081 = vpack.c.b16 %v2893, %v2889
    %v3082 = vpack.c.b16 %v2898, %v2894
    %v3083 = vpack.c.b16 %v2899, %v2895
    %v3084 = vpack.c.b16 %v2900, %v2896
    %v3085 = vpack.c.b16 %v2901, %v2897
    %v3086 = vpack.c.b16 %v2906, %v2902
    %v3087 = vpack.c.b16 %v2907, %v2903
    %v3088 = vpack.c.b16 %v2908, %v2904
    %v3089 = vpack.c.b16 %v2909, %v2905
    %v3090 = vpack.c.b16 %v2914, %v2910
    %v3091 = vpack.c.b16 %v2915, %v2911
    %v3092 = vpack.c.b16 %v2916, %v2912
    %v3093 = vpack.c.b16 %v2917, %v2913
    %v3094 = vpack.c.b16 %v2922, %v2918
    %v3095 = vpack.c.b16 %v2923, %v2919
    %v3096 = vpack.c.b16 %v2924, %v2920
    %v3097 = vpack.c.b16 %v2925, %v2921
    %v3098 = vpack.c.b16 %v2930, %v2926
    %v3099 = vpack.c.b16 %v2931, %v2927
    %v3100 = vpack.c.b16 %v2932, %v2928
    %v3101 = vpack.c.b16 %v2933, %v2929
    %v3102 = vpack.c.b16 %v2938, %v2934
    %v3103 = vpack.c.b16 %v2939, %v2935
    %v3104 = vpack.c.b16 %v2940, %v2936
    %v3105 = vpack.c.b16 %v2941, %v2937
    %v3106 = vpack.c.b16 %v2946, %v2942
    %v3107 = vpack.c.b16 %v2947, %v2943
    %v3108 = vpack.c.b16 %v2948, %v2944
    %v3109 = vpack.c.b16 %v2949, %v2945
    %v3110 = vpack.c.b16 %v2954, %v2950
    %v3111 = vpack.c.b16 %v2955, %v2951
    %v3112 = vpack.c.b16 %v2956, %v2952
    %v3113 = vpack.c.b16 %v2957, %v2953
    %v3114 = vpack.c.b16 %v2962, %v2958
    %v3115 = vpack.c.b16 %v2963, %v2959
    %v3116 = vpack.c.b16 %v2964, %v2960
    %v3117 = vpack.c.b16 %v2965, %v2961
    %v3118 = vpack.c.b16 %v2970, %v2966
    %v3119 = vpack.c.b16 %v2971, %v2967
    %v3120 = vpack.c.b16 %v2972, %v2968
    %v3121 = vpack.c.b16 %v2973, %v2969
    %v3122 = vpack.c.b16 %v2978, %v2974
    %v3123 = vpack.c.b16 %v2979, %v2975
    %v3124 = vpack.c.b16 %v2980, %v2976
    %v3125 = vpack.c.b16 %v2981, %v2977
    %v3126 = vpack.c.b16 %v2986, %v2982
    %v3127 = vpack.c.b16 %v2987, %v2983
    %v3128 = vpack.c.b16 %v2988, %v2984
    %v3129 = vpack.c.b16 %v2989, %v2985
    %v3130 = vpack.c.b16 %v2994, %v2990
    %v3131 = vpack.c.b16 %v2995, %v2991
    %v3132 = vpack.c.b16 %v2996, %v2992
    %v3133 = vpack.c.b16 %v2997, %v2993
    %v3134 = vpack.c.b16 %v3002, %v2998
    %v3135 = vpack.c.b16 %v3003, %v2999
    %v3136 = vpack.c.b16 %v3004, %v3000
    %v3137 = vpack.c.b16 %v3005, %v3001
    %v3138 = vpack.c.b16 %v3010, %v3006
    %v3139 = vpack.c.b16 %v3011, %v3007
    %v3140 = vpack.c.b16 %v3012, %v3008
    %v3141 = vpack.c.b16 %v3013, %v3009
    %3270 = vmatprep.subr.bf16.mxu0 %v2147
    %3271 = vmatpush1.bf16.msra.mxu0 %v2146
    %3272 = vmatprep.subr.bf16.mxu0 %v2143
    %3273 = vmatpush1.bf16.msra.mxu0 %v2142
    %3274 = vmatprep.subr.bf16.mxu0 %v2139
    %3275 = vmatpush1.bf16.msra.mxu0 %v2138
    %3276 = vmatprep.subr.bf16.mxu0 %v2135
    %3277 = vmatpush1.bf16.msra.mxu0 %v2134
    %3278 = vmatprep.subr.bf16.mxu0 %v2131
    %3279 = vmatpush1.bf16.msra.mxu0 %v2130
    %3280 = vmatprep.subr.bf16.mxu0 %v2127
    %3281 = vmatpush1.bf16.msra.mxu0 %v2126
    %3282 = vmatprep.subr.bf16.mxu0 %v2123
    %3283 = vmatpush1.bf16.msra.mxu0 %v2122
    %3284 = vmatprep.subr.bf16.mxu0 %v2119
    %3285 = vmatpush1.bf16.msra.mxu0 %v2118
    %3286 = vmatprep.subr.bf16.mxu0 %v2179
    %3287 = vmatpush2.bf16.msra.mxu0 %v2178
    %3288 = vmatprep.subr.bf16.mxu0 %v2175
    %3289 = vmatpush2.bf16.msra.mxu0 %v2174
    %3290 = vmatprep.subr.bf16.mxu0 %v2171
    %3291 = vmatpush2.bf16.msra.mxu0 %v2170
    %3292 = vmatprep.subr.bf16.mxu0 %v2167
    %3293 = vmatpush2.bf16.msra.mxu0 %v2166
    %3294 = vmatprep.subr.bf16.mxu0 %v2163
    %3295 = vmatpush2.bf16.msra.mxu0 %v2162
    %3296 = vmatprep.subr.bf16.mxu0 %v2159
    %3297 = vmatpush2.bf16.msra.mxu0 %v2158
    %3298 = vmatprep.subr.bf16.mxu0 %v2155
    %3299 = vmatpush2.bf16.msra.mxu0 %v2154
    %3300 = vmatprep.subr.bf16.mxu0 %v2151
    %3301 = vmatpush2.bf16.msra.mxu0 %v2150
    %3302 = vmatprep.mubr.bf16.mxu0 %v3015
    %3303 = vmatmul.mubr.bf16.gmra.mxu0 %v3014
    %v3304 = vpop.f32.mrf.mxu0
    %v3305 = vadd.f32 %v2313, %v3304
    %v3306 = vpop.f32.mrf.mxu0
    %v3307 = vadd.f32 %v2313, %v3306
    %v3308 = vpop.f32.mrf.mxu0
    %v3309 = vadd.f32 %v2318, %v3308
    %v3310 = vpop.f32.mrf.mxu0
    %v3311 = vadd.f32 %v2318, %v3310
    %3312 = vmatprep.mubr.bf16.mxu0 %v3019
    %3313 = vmatmul.mubr.bf16.gmra.mxu0 %v3018
    %v3314 = vpop.f32.mrf.mxu0
    %v3315 = vadd.f32 %v2323, %v3314
    %v3316 = vpop.f32.mrf.mxu0
    %v3317 = vadd.f32 %v2323, %v3316
    %v3318 = vpop.f32.mrf.mxu0
    %v3319 = vadd.f32 %v2328, %v3318
    %v3320 = vpop.f32.mrf.mxu0
    %v3321 = vadd.f32 %v2328, %v3320
    %3322 = vmatprep.mubr.bf16.mxu0 %v3023
    %3323 = vmatmul.mubr.bf16.gmra.mxu0 %v3022
    %v3324 = vpop.f32.mrf.mxu0
    %v3325 = vadd.f32 %v2333, %v3324
    %v3326 = vpop.f32.mrf.mxu0
    %v3327 = vadd.f32 %v2333, %v3326
    %v3328 = vpop.f32.mrf.mxu0
    %v3329 = vadd.f32 %v2338, %v3328
    %v3330 = vpop.f32.mrf.mxu0
    %v3331 = vadd.f32 %v2338, %v3330
    %3332 = vmatprep.mubr.bf16.mxu0 %v3027
    %3333 = vmatmul.mubr.bf16.gmra.mxu0 %v3026
    %v3334 = vpop.f32.mrf.mxu0
    %v3335 = vadd.f32 %v2343, %v3334
    %v3336 = vpop.f32.mrf.mxu0
    %v3337 = vadd.f32 %v2343, %v3336
    %v3338 = vpop.f32.mrf.mxu0
    %v3339 = vadd.f32 %v2348, %v3338
    %v3340 = vpop.f32.mrf.mxu0
    %v3341 = vadd.f32 %v2348, %v3340
    %3342 = vmatprep.mubr.bf16.mxu0 %v3031
    %3343 = vmatmul.mubr.bf16.gmra.mxu0 %v3030
    %v3344 = vpop.f32.mrf.mxu0
    %v3345 = vadd.f32 %v2353, %v3344
    %v3346 = vpop.f32.mrf.mxu0
    %v3347 = vadd.f32 %v2353, %v3346
    %v3348 = vpop.f32.mrf.mxu0
    %v3349 = vadd.f32 %v2358, %v3348
    %v3350 = vpop.f32.mrf.mxu0
    %v3351 = vadd.f32 %v2358, %v3350
    %3352 = vmatprep.mubr.bf16.mxu0 %v3035
    %3353 = vmatmul.mubr.bf16.gmra.mxu0 %v3034
    %v3354 = vpop.f32.mrf.mxu0
    %v3355 = vadd.f32 %v2363, %v3354
    %v3356 = vpop.f32.mrf.mxu0
    %v3357 = vadd.f32 %v2363, %v3356
    %v3358 = vpop.f32.mrf.mxu0
    %v3359 = vadd.f32 %v2368, %v3358
    %v3360 = vpop.f32.mrf.mxu0
    %v3361 = vadd.f32 %v2368, %v3360
    %3362 = vmatprep.mubr.bf16.mxu0 %v3039
    %3363 = vmatmul.mubr.bf16.gmra.mxu0 %v3038
    %v3364 = vpop.f32.mrf.mxu0
    %v3365 = vadd.f32 %v2373, %v3364
    %v3366 = vpop.f32.mrf.mxu0
    %v3367 = vadd.f32 %v2373, %v3366
    %v3368 = vpop.f32.mrf.mxu0
    %v3369 = vadd.f32 %v2378, %v3368
    %v3370 = vpop.f32.mrf.mxu0
    %v3371 = vadd.f32 %v2378, %v3370
    %3372 = vmatprep.mubr.bf16.mxu0 %v3043
    %3373 = vmatmul.mubr.bf16.gmra.mxu0 %v3042
    %v3374 = vpop.f32.mrf.mxu0
    %v3375 = vadd.f32 %v2383, %v3374
    %v3376 = vpop.f32.mrf.mxu0
    %v3377 = vadd.f32 %v2383, %v3376
    %v3378 = vpop.f32.mrf.mxu0
    %v3379 = vadd.f32 %v2388, %v3378
    %v3380 = vpop.f32.mrf.mxu0
    %v3381 = vadd.f32 %v2388, %v3380
    %3382 = vmatprep.mubr.bf16.mxu0 %v3047
    %3383 = vmatmul.mubr.bf16.gmra.mxu0 %v3046
    %v3384 = vpop.f32.mrf.mxu0
    %v3385 = vadd.f32 %v2393, %v3384
    %v3386 = vpop.f32.mrf.mxu0
    %v3387 = vadd.f32 %v2393, %v3386
    %v3388 = vpop.f32.mrf.mxu0
    %v3389 = vadd.f32 %v2398, %v3388
    %v3390 = vpop.f32.mrf.mxu0
    %v3391 = vadd.f32 %v2398, %v3390
    %3392 = vmatprep.mubr.bf16.mxu0 %v3051
    %3393 = vmatmul.mubr.bf16.gmra.mxu0 %v3050
    %v3394 = vpop.f32.mrf.mxu0
    %v3395 = vadd.f32 %v2403, %v3394
    %v3396 = vpop.f32.mrf.mxu0
    %v3397 = vadd.f32 %v2403, %v3396
    %v3398 = vpop.f32.mrf.mxu0
    %v3399 = vadd.f32 %v2408, %v3398
    %v3400 = vpop.f32.mrf.mxu0
    %v3401 = vadd.f32 %v2408, %v3400
    %3402 = vmatprep.mubr.bf16.mxu0 %v3055
    %3403 = vmatmul.mubr.bf16.gmra.mxu0 %v3054
    %v3404 = vpop.f32.mrf.mxu0
    %v3405 = vadd.f32 %v2413, %v3404
    %v3406 = vpop.f32.mrf.mxu0
    %v3407 = vadd.f32 %v2413, %v3406
    %v3408 = vpop.f32.mrf.mxu0
    %v3409 = vadd.f32 %v2418, %v3408
    %v3410 = vpop.f32.mrf.mxu0
    %v3411 = vadd.f32 %v2418, %v3410
    %3412 = vmatprep.mubr.bf16.mxu0 %v3059
    %3413 = vmatmul.mubr.bf16.gmra.mxu0 %v3058
    %v3414 = vpop.f32.mrf.mxu0
    %v3415 = vadd.f32 %v2423, %v3414
    %v3416 = vpop.f32.mrf.mxu0
    %v3417 = vadd.f32 %v2423, %v3416
    %v3418 = vpop.f32.mrf.mxu0
    %v3419 = vadd.f32 %v2428, %v3418
    %v3420 = vpop.f32.mrf.mxu0
    %v3421 = vadd.f32 %v2428, %v3420
    %3422 = vmatprep.mubr.bf16.mxu0 %v3063
    %3423 = vmatmul.mubr.bf16.gmra.mxu0 %v3062
    %v3424 = vpop.f32.mrf.mxu0
    %v3425 = vadd.f32 %v2433, %v3424
    %v3426 = vpop.f32.mrf.mxu0
    %v3427 = vadd.f32 %v2433, %v3426
    %v3428 = vpop.f32.mrf.mxu0
    %v3429 = vadd.f32 %v2438, %v3428
    %v3430 = vpop.f32.mrf.mxu0
    %v3431 = vadd.f32 %v2438, %v3430
    %3432 = vmatprep.mubr.bf16.mxu0 %v3067
    %3433 = vmatmul.mubr.bf16.gmra.mxu0 %v3066
    %v3434 = vpop.f32.mrf.mxu0
    %v3435 = vadd.f32 %v2443, %v3434
    %v3436 = vpop.f32.mrf.mxu0
    %v3437 = vadd.f32 %v2443, %v3436
    %v3438 = vpop.f32.mrf.mxu0
    %v3439 = vadd.f32 %v2448, %v3438
    %v3440 = vpop.f32.mrf.mxu0
    %v3441 = vadd.f32 %v2448, %v3440
    %3442 = vmatprep.mubr.bf16.mxu0 %v3071
    %3443 = vmatmul.mubr.bf16.gmra.mxu0 %v3070
    %v3444 = vpop.f32.mrf.mxu0
    %v3445 = vadd.f32 %v2453, %v3444
    %v3446 = vpop.f32.mrf.mxu0
    %v3447 = vadd.f32 %v2453, %v3446
    %v3448 = vpop.f32.mrf.mxu0
    %v3449 = vadd.f32 %v2458, %v3448
    %v3450 = vpop.f32.mrf.mxu0
    %v3451 = vadd.f32 %v2458, %v3450
    %3452 = vmatprep.mubr.bf16.mxu0 %v3075
    %3453 = vmatmul.mubr.bf16.gmra.mxu0 %v3074
    %v3454 = vpop.f32.mrf.mxu0
    %v3455 = vadd.f32 %v2463, %v3454
    %v3456 = vpop.f32.mrf.mxu0
    %v3457 = vadd.f32 %v2463, %v3456
    %v3458 = vpop.f32.mrf.mxu0
    %v3459 = vadd.f32 %v2468, %v3458
    %v3460 = vpop.f32.mrf.mxu0
    %v3461 = vadd.f32 %v2468, %v3460
    %3462 = vmatprep.mubr.bf16.mxu0 %v3079
    %3463 = vmatmul.mubr.bf16.gmra.mxu0 %v3078
    %v3464 = vpop.f32.mrf.mxu0
    %v3465 = vadd.f32 %v2473, %v3464
    %v3466 = vpop.f32.mrf.mxu0
    %v3467 = vadd.f32 %v2473, %v3466
    %v3468 = vpop.f32.mrf.mxu0
    %v3469 = vadd.f32 %v2478, %v3468
    %v3470 = vpop.f32.mrf.mxu0
    %v3471 = vadd.f32 %v2478, %v3470
    %3472 = vmatprep.mubr.bf16.mxu0 %v3083
    %3473 = vmatmul.mubr.bf16.gmra.mxu0 %v3082
    %v3474 = vpop.f32.mrf.mxu0
    %v3475 = vadd.f32 %v2483, %v3474
    %v3476 = vpop.f32.mrf.mxu0
    %v3477 = vadd.f32 %v2483, %v3476
    %v3478 = vpop.f32.mrf.mxu0
    %v3479 = vadd.f32 %v2488, %v3478
    %v3480 = vpop.f32.mrf.mxu0
    %v3481 = vadd.f32 %v2488, %v3480
    %3482 = vmatprep.mubr.bf16.mxu0 %v3087
    %3483 = vmatmul.mubr.bf16.gmra.mxu0 %v3086
    %v3484 = vpop.f32.mrf.mxu0
    %v3485 = vadd.f32 %v2493, %v3484
    %v3486 = vpop.f32.mrf.mxu0
    %v3487 = vadd.f32 %v2493, %v3486
    %v3488 = vpop.f32.mrf.mxu0
    %v3489 = vadd.f32 %v2498, %v3488
    %v3490 = vpop.f32.mrf.mxu0
    %v3491 = vadd.f32 %v2498, %v3490
    %3492 = vmatprep.mubr.bf16.mxu0 %v3091
    %3493 = vmatmul.mubr.bf16.gmra.mxu0 %v3090
    %v3494 = vpop.f32.mrf.mxu0
    %v3495 = vadd.f32 %v2503, %v3494
    %v3496 = vpop.f32.mrf.mxu0
    %v3497 = vadd.f32 %v2503, %v3496
    %v3498 = vpop.f32.mrf.mxu0
    %v3499 = vadd.f32 %v2508, %v3498
    %v3500 = vpop.f32.mrf.mxu0
    %v3501 = vadd.f32 %v2508, %v3500
    %3502 = vmatprep.mubr.bf16.mxu0 %v3095
    %3503 = vmatmul.mubr.bf16.gmra.mxu0 %v3094
    %v3504 = vpop.f32.mrf.mxu0
    %v3505 = vadd.f32 %v2513, %v3504
    %v3506 = vpop.f32.mrf.mxu0
    %v3507 = vadd.f32 %v2513, %v3506
    %v3508 = vpop.f32.mrf.mxu0
    %v3509 = vadd.f32 %v2518, %v3508
    %v3510 = vpop.f32.mrf.mxu0
    %v3511 = vadd.f32 %v2518, %v3510
    %3512 = vmatprep.mubr.bf16.mxu0 %v3099
    %3513 = vmatmul.mubr.bf16.gmra.mxu0 %v3098
    %v3514 = vpop.f32.mrf.mxu0
    %v3515 = vadd.f32 %v2523, %v3514
    %v3516 = vpop.f32.mrf.mxu0
    %v3517 = vadd.f32 %v2523, %v3516
    %v3518 = vpop.f32.mrf.mxu0
    %v3519 = vadd.f32 %v2528, %v3518
    %v3520 = vpop.f32.mrf.mxu0
    %v3521 = vadd.f32 %v2528, %v3520
    %3522 = vmatprep.mubr.bf16.mxu0 %v3103
    %3523 = vmatmul.mubr.bf16.gmra.mxu0 %v3102
    %v3524 = vpop.f32.mrf.mxu0
    %v3525 = vadd.f32 %v2533, %v3524
    %v3526 = vpop.f32.mrf.mxu0
    %v3527 = vadd.f32 %v2533, %v3526
    %v3528 = vpop.f32.mrf.mxu0
    %v3529 = vadd.f32 %v2538, %v3528
    %v3530 = vpop.f32.mrf.mxu0
    %v3531 = vadd.f32 %v2538, %v3530
    %3532 = vmatprep.mubr.bf16.mxu0 %v3107
    %3533 = vmatmul.mubr.bf16.gmra.mxu0 %v3106
    %v3534 = vpop.f32.mrf.mxu0
    %v3535 = vadd.f32 %v2543, %v3534
    %v3536 = vpop.f32.mrf.mxu0
    %v3537 = vadd.f32 %v2543, %v3536
    %v3538 = vpop.f32.mrf.mxu0
    %v3539 = vadd.f32 %v2548, %v3538
    %v3540 = vpop.f32.mrf.mxu0
    %v3541 = vadd.f32 %v2548, %v3540
    %3542 = vmatprep.mubr.bf16.mxu0 %v3111
    %3543 = vmatmul.mubr.bf16.gmra.mxu0 %v3110
    %v3544 = vpop.f32.mrf.mxu0
    %v3545 = vadd.f32 %v2553, %v3544
    %v3546 = vpop.f32.mrf.mxu0
    %v3547 = vadd.f32 %v2553, %v3546
    %v3548 = vpop.f32.mrf.mxu0
    %v3549 = vadd.f32 %v2558, %v3548
    %v3550 = vpop.f32.mrf.mxu0
    %v3551 = vadd.f32 %v2558, %v3550
    %3552 = vmatprep.mubr.bf16.mxu0 %v3115
    %3553 = vmatmul.mubr.bf16.gmra.mxu0 %v3114
    %v3554 = vpop.f32.mrf.mxu0
    %v3555 = vadd.f32 %v2563, %v3554
    %v3556 = vpop.f32.mrf.mxu0
    %v3557 = vadd.f32 %v2563, %v3556
    %v3558 = vpop.f32.mrf.mxu0
    %v3559 = vadd.f32 %v2568, %v3558
    %v3560 = vpop.f32.mrf.mxu0
    %v3561 = vadd.f32 %v2568, %v3560
    %3562 = vmatprep.mubr.bf16.mxu0 %v3119
    %3563 = vmatmul.mubr.bf16.gmra.mxu0 %v3118
    %v3564 = vpop.f32.mrf.mxu0
    %v3565 = vadd.f32 %v2573, %v3564
    %v3566 = vpop.f32.mrf.mxu0
    %v3567 = vadd.f32 %v2573, %v3566
    %v3568 = vpop.f32.mrf.mxu0
    %v3569 = vadd.f32 %v2578, %v3568
    %v3570 = vpop.f32.mrf.mxu0
    %v3571 = vadd.f32 %v2578, %v3570
    %3572 = vmatprep.mubr.bf16.mxu0 %v3123
    %3573 = vmatmul.mubr.bf16.gmra.mxu0 %v3122
    %v3574 = vpop.f32.mrf.mxu0
    %v3575 = vadd.f32 %v2583, %v3574
    %v3576 = vpop.f32.mrf.mxu0
    %v3577 = vadd.f32 %v2583, %v3576
    %v3578 = vpop.f32.mrf.mxu0
    %v3579 = vadd.f32 %v2588, %v3578
    %v3580 = vpop.f32.mrf.mxu0
    %v3581 = vadd.f32 %v2588, %v3580
    %3582 = vmatprep.mubr.bf16.mxu0 %v3127
    %3583 = vmatmul.mubr.bf16.gmra.mxu0 %v3126
    %v3584 = vpop.f32.mrf.mxu0
    %v3585 = vadd.f32 %v2593, %v3584
    %v3586 = vpop.f32.mrf.mxu0
    %v3587 = vadd.f32 %v2593, %v3586
    %v3588 = vpop.f32.mrf.mxu0
    %v3589 = vadd.f32 %v2598, %v3588
    %v3590 = vpop.f32.mrf.mxu0
    %v3591 = vadd.f32 %v2598, %v3590
    %3592 = vmatprep.mubr.bf16.mxu0 %v3131
    %3593 = vmatmul.mubr.bf16.gmra.mxu0 %v3130
    %v3594 = vpop.f32.mrf.mxu0
    %v3595 = vadd.f32 %v2603, %v3594
    %v3596 = vpop.f32.mrf.mxu0
    %v3597 = vadd.f32 %v2603, %v3596
    %v3598 = vpop.f32.mrf.mxu0
    %v3599 = vadd.f32 %v2608, %v3598
    %v3600 = vpop.f32.mrf.mxu0
    %v3601 = vadd.f32 %v2608, %v3600
    %3602 = vmatprep.mubr.bf16.mxu0 %v3135
    %3603 = vmatmul.mubr.bf16.gmra.mxu0 %v3134
    %v3604 = vpop.f32.mrf.mxu0
    %v3605 = vadd.f32 %v2613, %v3604
    %v3606 = vpop.f32.mrf.mxu0
    %v3607 = vadd.f32 %v2613, %v3606
    %v3608 = vpop.f32.mrf.mxu0
    %v3609 = vadd.f32 %v2618, %v3608
    %v3610 = vpop.f32.mrf.mxu0
    %v3611 = vadd.f32 %v2618, %v3610
    %3612 = vmatprep.mubr.bf16.mxu0 %v3139
    %3613 = vmatmul.mubr.bf16.gmra.mxu0 %v3138
    %v3614 = vpop.f32.mrf.mxu0
    %v3615 = vadd.f32 %v2623, %v3614
    %v3616 = vpop.f32.mrf.mxu0
    %v3617 = vadd.f32 %v2623, %v3616
    %v3618 = vpop.f32.mrf.mxu0
    %v3619 = vadd.f32 %v2628, %v3618
    %v3620 = vpop.f32.mrf.mxu0
    %v3621 = vadd.f32 %v2628, %v3620
    %3622 = vdwg.mxu0
    %3623 = vmatprep.subr.bf16.mxu0 %v2211
    %3624 = vmatpush1.bf16.msra.mxu0 %v2210
    %3625 = vmatprep.subr.bf16.mxu0 %v2207
    %3626 = vmatpush1.bf16.msra.mxu0 %v2206
    %3627 = vmatprep.subr.bf16.mxu0 %v2203
    %3628 = vmatpush1.bf16.msra.mxu0 %v2202
    %3629 = vmatprep.subr.bf16.mxu0 %v2199
    %3630 = vmatpush1.bf16.msra.mxu0 %v2198
    %3631 = vmatprep.subr.bf16.mxu0 %v2195
    %3632 = vmatpush1.bf16.msra.mxu0 %v2194
    %3633 = vmatprep.subr.bf16.mxu0 %v2191
    %3634 = vmatpush1.bf16.msra.mxu0 %v2190
    %3635 = vmatprep.subr.bf16.mxu0 %v2187
    %3636 = vmatpush1.bf16.msra.mxu0 %v2186
    %3637 = vmatprep.subr.bf16.mxu0 %v2183
    %3638 = vmatpush1.bf16.msra.mxu0 %v2182
    %3639 = vmatprep.subr.bf16.mxu0 %v2243
    %3640 = vmatpush2.bf16.msra.mxu0 %v2242
    %3641 = vmatprep.subr.bf16.mxu0 %v2239
    %3642 = vmatpush2.bf16.msra.mxu0 %v2238
    %3643 = vmatprep.subr.bf16.mxu0 %v2235
    %3644 = vmatpush2.bf16.msra.mxu0 %v2234
    %3645 = vmatprep.subr.bf16.mxu0 %v2231
    %3646 = vmatpush2.bf16.msra.mxu0 %v2230
    %3647 = vmatprep.subr.bf16.mxu0 %v2227
    %3648 = vmatpush2.bf16.msra.mxu0 %v2226
    %3649 = vmatprep.subr.bf16.mxu0 %v2223
    %3650 = vmatpush2.bf16.msra.mxu0 %v2222
    %3651 = vmatprep.subr.bf16.mxu0 %v2219
    %3652 = vmatpush2.bf16.msra.mxu0 %v2218
    %3653 = vmatprep.subr.bf16.mxu0 %v2215
    %3654 = vmatpush2.bf16.msra.mxu0 %v2214
    %3655 = vmatprep.mubr.bf16.mxu0 %v3017
    %3656 = vmatmul.mubr.bf16.gmra.mxu0 %v3016
    %v3657 = vpop.f32.mrf.mxu0
    %v3658 = vadd.f32 %v3305, %v3657
    %v3659 = vpop.f32.mrf.mxu0
    %v3660 = vadd.f32 %v3307, %v3659
    %v3661 = vpop.f32.mrf.mxu0
    %v3662 = vadd.f32 %v3309, %v3661
    %v3663 = vpop.f32.mrf.mxu0
    %v3664 = vadd.f32 %v3311, %v3663
    %3665 = vmatprep.mubr.bf16.mxu0 %v3021
    %3666 = vmatmul.mubr.bf16.gmra.mxu0 %v3020
    %v3667 = vpop.f32.mrf.mxu0
    %v3668 = vadd.f32 %v3315, %v3667
    %v3669 = vpop.f32.mrf.mxu0
    %v3670 = vadd.f32 %v3317, %v3669
    %v3671 = vpop.f32.mrf.mxu0
    %v3672 = vadd.f32 %v3319, %v3671
    %v3673 = vpop.f32.mrf.mxu0
    %v3674 = vadd.f32 %v3321, %v3673
    %3675 = vmatprep.mubr.bf16.mxu0 %v3025
    %3676 = vmatmul.mubr.bf16.gmra.mxu0 %v3024
    %v3677 = vpop.f32.mrf.mxu0
    %v3678 = vadd.f32 %v3325, %v3677
    %v3679 = vpop.f32.mrf.mxu0
    %v3680 = vadd.f32 %v3327, %v3679
    %v3681 = vpop.f32.mrf.mxu0
    %v3682 = vadd.f32 %v3329, %v3681
    %v3683 = vpop.f32.mrf.mxu0
    %v3684 = vadd.f32 %v3331, %v3683
    %3685 = vmatprep.mubr.bf16.mxu0 %v3029
    %3686 = vmatmul.mubr.bf16.gmra.mxu0 %v3028
    %v3687 = vpop.f32.mrf.mxu0
    %v3688 = vadd.f32 %v3335, %v3687
    %v3689 = vpop.f32.mrf.mxu0
    %v3690 = vadd.f32 %v3337, %v3689
    %v3691 = vpop.f32.mrf.mxu0
    %v3692 = vadd.f32 %v3339, %v3691
    %v3693 = vpop.f32.mrf.mxu0
    %v3694 = vadd.f32 %v3341, %v3693
    %3695 = vmatprep.mubr.bf16.mxu0 %v3033
    %3696 = vmatmul.mubr.bf16.gmra.mxu0 %v3032
    %v3697 = vpop.f32.mrf.mxu0
    %v3698 = vadd.f32 %v3345, %v3697
    %v3699 = vpop.f32.mrf.mxu0
    %v3700 = vadd.f32 %v3347, %v3699
    %v3701 = vpop.f32.mrf.mxu0
    %v3702 = vadd.f32 %v3349, %v3701
    %v3703 = vpop.f32.mrf.mxu0
    %v3704 = vadd.f32 %v3351, %v3703
    %3705 = vmatprep.mubr.bf16.mxu0 %v3037
    %3706 = vmatmul.mubr.bf16.gmra.mxu0 %v3036
    %v3707 = vpop.f32.mrf.mxu0
    %v3708 = vadd.f32 %v3355, %v3707
    %v3709 = vpop.f32.mrf.mxu0
    %v3710 = vadd.f32 %v3357, %v3709
    %v3711 = vpop.f32.mrf.mxu0
    %v3712 = vadd.f32 %v3359, %v3711
    %v3713 = vpop.f32.mrf.mxu0
    %v3714 = vadd.f32 %v3361, %v3713
    %3715 = vmatprep.mubr.bf16.mxu0 %v3041
    %3716 = vmatmul.mubr.bf16.gmra.mxu0 %v3040
    %v3717 = vpop.f32.mrf.mxu0
    %v3718 = vadd.f32 %v3365, %v3717
    %v3719 = vpop.f32.mrf.mxu0
    %v3720 = vadd.f32 %v3367, %v3719
    %v3721 = vpop.f32.mrf.mxu0
    %v3722 = vadd.f32 %v3369, %v3721
    %v3723 = vpop.f32.mrf.mxu0
    %v3724 = vadd.f32 %v3371, %v3723
    %3725 = vmatprep.mubr.bf16.mxu0 %v3045
    %3726 = vmatmul.mubr.bf16.gmra.mxu0 %v3044
    %v3727 = vpop.f32.mrf.mxu0
    %v3728 = vadd.f32 %v3375, %v3727
    %v3729 = vpop.f32.mrf.mxu0
    %v3730 = vadd.f32 %v3377, %v3729
    %v3731 = vpop.f32.mrf.mxu0
    %v3732 = vadd.f32 %v3379, %v3731
    %v3733 = vpop.f32.mrf.mxu0
    %v3734 = vadd.f32 %v3381, %v3733
    %3735 = vmatprep.mubr.bf16.mxu0 %v3049
    %3736 = vmatmul.mubr.bf16.gmra.mxu0 %v3048
    %v3737 = vpop.f32.mrf.mxu0
    %v3738 = vadd.f32 %v3385, %v3737
    %v3739 = vpop.f32.mrf.mxu0
    %v3740 = vadd.f32 %v3387, %v3739
    %v3741 = vpop.f32.mrf.mxu0
    %v3742 = vadd.f32 %v3389, %v3741
    %v3743 = vpop.f32.mrf.mxu0
    %v3744 = vadd.f32 %v3391, %v3743
    %3745 = vmatprep.mubr.bf16.mxu0 %v3053
    %3746 = vmatmul.mubr.bf16.gmra.mxu0 %v3052
    %v3747 = vpop.f32.mrf.mxu0
    %v3748 = vadd.f32 %v3395, %v3747
    %v3749 = vpop.f32.mrf.mxu0
    %v3750 = vadd.f32 %v3397, %v3749
    %v3751 = vpop.f32.mrf.mxu0
    %v3752 = vadd.f32 %v3399, %v3751
    %v3753 = vpop.f32.mrf.mxu0
    %v3754 = vadd.f32 %v3401, %v3753
    %3755 = vmatprep.mubr.bf16.mxu0 %v3057
    %3756 = vmatmul.mubr.bf16.gmra.mxu0 %v3056
    %v3757 = vpop.f32.mrf.mxu0
    %v3758 = vadd.f32 %v3405, %v3757
    %v3759 = vpop.f32.mrf.mxu0
    %v3760 = vadd.f32 %v3407, %v3759
    %v3761 = vpop.f32.mrf.mxu0
    %v3762 = vadd.f32 %v3409, %v3761
    %v3763 = vpop.f32.mrf.mxu0
    %v3764 = vadd.f32 %v3411, %v3763
    %3765 = vmatprep.mubr.bf16.mxu0 %v3061
    %3766 = vmatmul.mubr.bf16.gmra.mxu0 %v3060
    %v3767 = vpop.f32.mrf.mxu0
    %v3768 = vadd.f32 %v3415, %v3767
    %v3769 = vpop.f32.mrf.mxu0
    %v3770 = vadd.f32 %v3417, %v3769
    %v3771 = vpop.f32.mrf.mxu0
    %v3772 = vadd.f32 %v3419, %v3771
    %v3773 = vpop.f32.mrf.mxu0
    %v3774 = vadd.f32 %v3421, %v3773
    %3775 = vmatprep.mubr.bf16.mxu0 %v3065
    %3776 = vmatmul.mubr.bf16.gmra.mxu0 %v3064
    %v3777 = vpop.f32.mrf.mxu0
    %v3778 = vadd.f32 %v3425, %v3777
    %v3779 = vpop.f32.mrf.mxu0
    %v3780 = vadd.f32 %v3427, %v3779
    %v3781 = vpop.f32.mrf.mxu0
    %v3782 = vadd.f32 %v3429, %v3781
    %v3783 = vpop.f32.mrf.mxu0
    %v3784 = vadd.f32 %v3431, %v3783
    %3785 = vmatprep.mubr.bf16.mxu0 %v3069
    %3786 = vmatmul.mubr.bf16.gmra.mxu0 %v3068
    %v3787 = vpop.f32.mrf.mxu0
    %v3788 = vadd.f32 %v3435, %v3787
    %v3789 = vpop.f32.mrf.mxu0
    %v3790 = vadd.f32 %v3437, %v3789
    %v3791 = vpop.f32.mrf.mxu0
    %v3792 = vadd.f32 %v3439, %v3791
    %v3793 = vpop.f32.mrf.mxu0
    %v3794 = vadd.f32 %v3441, %v3793
    %3795 = vmatprep.mubr.bf16.mxu0 %v3073
    %3796 = vmatmul.mubr.bf16.gmra.mxu0 %v3072
    %v3797 = vpop.f32.mrf.mxu0
    %v3798 = vadd.f32 %v3445, %v3797
    %v3799 = vpop.f32.mrf.mxu0
    %v3800 = vadd.f32 %v3447, %v3799
    %v3801 = vpop.f32.mrf.mxu0
    %v3802 = vadd.f32 %v3449, %v3801
    %v3803 = vpop.f32.mrf.mxu0
    %v3804 = vadd.f32 %v3451, %v3803
    %3805 = vmatprep.mubr.bf16.mxu0 %v3077
    %3806 = vmatmul.mubr.bf16.gmra.mxu0 %v3076
    %v3807 = vpop.f32.mrf.mxu0
    %v3808 = vadd.f32 %v3455, %v3807
    %v3809 = vpop.f32.mrf.mxu0
    %v3810 = vadd.f32 %v3457, %v3809
    %v3811 = vpop.f32.mrf.mxu0
    %v3812 = vadd.f32 %v3459, %v3811
    %v3813 = vpop.f32.mrf.mxu0
    %v3814 = vadd.f32 %v3461, %v3813
    %3815 = vmatprep.mubr.bf16.mxu0 %v3081
    %3816 = vmatmul.mubr.bf16.gmra.mxu0 %v3080
    %v3817 = vpop.f32.mrf.mxu0
    %v3818 = vadd.f32 %v3465, %v3817
    %v3819 = vpop.f32.mrf.mxu0
    %v3820 = vadd.f32 %v3467, %v3819
    %v3821 = vpop.f32.mrf.mxu0
    %v3822 = vadd.f32 %v3469, %v3821
    %v3823 = vpop.f32.mrf.mxu0
    %v3824 = vadd.f32 %v3471, %v3823
    %3825 = vmatprep.mubr.bf16.mxu0 %v3085
    %3826 = vmatmul.mubr.bf16.gmra.mxu0 %v3084
    %v3827 = vpop.f32.mrf.mxu0
    %v3828 = vadd.f32 %v3475, %v3827
    %v3829 = vpop.f32.mrf.mxu0
    %v3830 = vadd.f32 %v3477, %v3829
    %v3831 = vpop.f32.mrf.mxu0
    %v3832 = vadd.f32 %v3479, %v3831
    %v3833 = vpop.f32.mrf.mxu0
    %v3834 = vadd.f32 %v3481, %v3833
    %3835 = vmatprep.mubr.bf16.mxu0 %v3089
    %3836 = vmatmul.mubr.bf16.gmra.mxu0 %v3088
    %v3837 = vpop.f32.mrf.mxu0
    %v3838 = vadd.f32 %v3485, %v3837
    %v3839 = vpop.f32.mrf.mxu0
    %v3840 = vadd.f32 %v3487, %v3839
    %v3841 = vpop.f32.mrf.mxu0
    %v3842 = vadd.f32 %v3489, %v3841
    %v3843 = vpop.f32.mrf.mxu0
    %v3844 = vadd.f32 %v3491, %v3843
    %3845 = vmatprep.mubr.bf16.mxu0 %v3093
    %3846 = vmatmul.mubr.bf16.gmra.mxu0 %v3092
    %v3847 = vpop.f32.mrf.mxu0
    %v3848 = vadd.f32 %v3495, %v3847
    %v3849 = vpop.f32.mrf.mxu0
    %v3850 = vadd.f32 %v3497, %v3849
    %v3851 = vpop.f32.mrf.mxu0
    %v3852 = vadd.f32 %v3499, %v3851
    %v3853 = vpop.f32.mrf.mxu0
    %v3854 = vadd.f32 %v3501, %v3853
    %3855 = vmatprep.mubr.bf16.mxu0 %v3097
    %3856 = vmatmul.mubr.bf16.gmra.mxu0 %v3096
    %v3857 = vpop.f32.mrf.mxu0
    %v3858 = vadd.f32 %v3505, %v3857
    %v3859 = vpop.f32.mrf.mxu0
    %v3860 = vadd.f32 %v3507, %v3859
    %v3861 = vpop.f32.mrf.mxu0
    %v3862 = vadd.f32 %v3509, %v3861
    %v3863 = vpop.f32.mrf.mxu0
    %v3864 = vadd.f32 %v3511, %v3863
    %3865 = vmatprep.mubr.bf16.mxu0 %v3101
    %3866 = vmatmul.mubr.bf16.gmra.mxu0 %v3100
    %v3867 = vpop.f32.mrf.mxu0
    %v3868 = vadd.f32 %v3515, %v3867
    %v3869 = vpop.f32.mrf.mxu0
    %v3870 = vadd.f32 %v3517, %v3869
    %v3871 = vpop.f32.mrf.mxu0
    %v3872 = vadd.f32 %v3519, %v3871
    %v3873 = vpop.f32.mrf.mxu0
    %v3874 = vadd.f32 %v3521, %v3873
    %3875 = vmatprep.mubr.bf16.mxu0 %v3105
    %3876 = vmatmul.mubr.bf16.gmra.mxu0 %v3104
    %v3877 = vpop.f32.mrf.mxu0
    %v3878 = vadd.f32 %v3525, %v3877
    %v3879 = vpop.f32.mrf.mxu0
    %v3880 = vadd.f32 %v3527, %v3879
    %v3881 = vpop.f32.mrf.mxu0
    %v3882 = vadd.f32 %v3529, %v3881
    %v3883 = vpop.f32.mrf.mxu0
    %v3884 = vadd.f32 %v3531, %v3883
    %3885 = vmatprep.mubr.bf16.mxu0 %v3109
    %3886 = vmatmul.mubr.bf16.gmra.mxu0 %v3108
    %v3887 = vpop.f32.mrf.mxu0
    %v3888 = vadd.f32 %v3535, %v3887
    %v3889 = vpop.f32.mrf.mxu0
    %v3890 = vadd.f32 %v3537, %v3889
    %v3891 = vpop.f32.mrf.mxu0
    %v3892 = vadd.f32 %v3539, %v3891
    %v3893 = vpop.f32.mrf.mxu0
    %v3894 = vadd.f32 %v3541, %v3893
    %3895 = vmatprep.mubr.bf16.mxu0 %v3113
    %3896 = vmatmul.mubr.bf16.gmra.mxu0 %v3112
    %v3897 = vpop.f32.mrf.mxu0
    %v3898 = vadd.f32 %v3545, %v3897
    %v3899 = vpop.f32.mrf.mxu0
    %v3900 = vadd.f32 %v3547, %v3899
    %v3901 = vpop.f32.mrf.mxu0
    %v3902 = vadd.f32 %v3549, %v3901
    %v3903 = vpop.f32.mrf.mxu0
    %v3904 = vadd.f32 %v3551, %v3903
    %3905 = vmatprep.mubr.bf16.mxu0 %v3117
    %3906 = vmatmul.mubr.bf16.gmra.mxu0 %v3116
    %v3907 = vpop.f32.mrf.mxu0
    %v3908 = vadd.f32 %v3555, %v3907
    %v3909 = vpop.f32.mrf.mxu0
    %v3910 = vadd.f32 %v3557, %v3909
    %v3911 = vpop.f32.mrf.mxu0
    %v3912 = vadd.f32 %v3559, %v3911
    %v3913 = vpop.f32.mrf.mxu0
    %v3914 = vadd.f32 %v3561, %v3913
    %3915 = vmatprep.mubr.bf16.mxu0 %v3121
    %3916 = vmatmul.mubr.bf16.gmra.mxu0 %v3120
    %v3917 = vpop.f32.mrf.mxu0
    %v3918 = vadd.f32 %v3565, %v3917
    %v3919 = vpop.f32.mrf.mxu0
    %v3920 = vadd.f32 %v3567, %v3919
    %v3921 = vpop.f32.mrf.mxu0
    %v3922 = vadd.f32 %v3569, %v3921
    %v3923 = vpop.f32.mrf.mxu0
    %v3924 = vadd.f32 %v3571, %v3923
    %3925 = vmatprep.mubr.bf16.mxu0 %v3125
    %3926 = vmatmul.mubr.bf16.gmra.mxu0 %v3124
    %v3927 = vpop.f32.mrf.mxu0
    %v3928 = vadd.f32 %v3575, %v3927
    %v3929 = vpop.f32.mrf.mxu0
    %v3930 = vadd.f32 %v3577, %v3929
    %v3931 = vpop.f32.mrf.mxu0
    %v3932 = vadd.f32 %v3579, %v3931
    %v3933 = vpop.f32.mrf.mxu0
    %v3934 = vadd.f32 %v3581, %v3933
    %3935 = vmatprep.mubr.bf16.mxu0 %v3129
    %3936 = vmatmul.mubr.bf16.gmra.mxu0 %v3128
    %v3937 = vpop.f32.mrf.mxu0
    %v3938 = vadd.f32 %v3585, %v3937
    %v3939 = vpop.f32.mrf.mxu0
    %v3940 = vadd.f32 %v3587, %v3939
    %v3941 = vpop.f32.mrf.mxu0
    %v3942 = vadd.f32 %v3589, %v3941
    %v3943 = vpop.f32.mrf.mxu0
    %v3944 = vadd.f32 %v3591, %v3943
    %3945 = vmatprep.mubr.bf16.mxu0 %v3133
    %3946 = vmatmul.mubr.bf16.gmra.mxu0 %v3132
    %v3947 = vpop.f32.mrf.mxu0
    %v3948 = vadd.f32 %v3595, %v3947
    %v3949 = vpop.f32.mrf.mxu0
    %v3950 = vadd.f32 %v3597, %v3949
    %v3951 = vpop.f32.mrf.mxu0
    %v3952 = vadd.f32 %v3599, %v3951
    %v3953 = vpop.f32.mrf.mxu0
    %v3954 = vadd.f32 %v3601, %v3953
    %3955 = vmatprep.mubr.bf16.mxu0 %v3137
    %3956 = vmatmul.mubr.bf16.gmra.mxu0 %v3136
    %v3957 = vpop.f32.mrf.mxu0
    %v3958 = vadd.f32 %v3605, %v3957
    %v3959 = vpop.f32.mrf.mxu0
    %v3960 = vadd.f32 %v3607, %v3959
    %v3961 = vpop.f32.mrf.mxu0
    %v3962 = vadd.f32 %v3609, %v3961
    %v3963 = vpop.f32.mrf.mxu0
    %v3964 = vadd.f32 %v3611, %v3963
    %3965 = vmatprep.mubr.bf16.mxu0 %v3141
    %3966 = vmatmul.mubr.bf16.gmra.mxu0 %v3140
    %v3967 = vpop.f32.mrf.mxu0
    %v3968 = vadd.f32 %v3615, %v3967
    %v3969 = vpop.f32.mrf.mxu0
    %v3970 = vadd.f32 %v3617, %v3969
    %v3971 = vpop.f32.mrf.mxu0
    %v3972 = vadd.f32 %v3619, %v3971
    %v3973 = vpop.f32.mrf.mxu0
    %v3974 = vadd.f32 %v3621, %v3973
    %3975 = vdwg.mxu0
    %3976 = vmatprep.subr.bf16.mxu0 %v2149
    %3977 = vmatpush1.bf16.msra.mxu0 %v2148
    %3978 = vmatprep.subr.bf16.mxu0 %v2145
    %3979 = vmatpush1.bf16.msra.mxu0 %v2144
    %3980 = vmatprep.subr.bf16.mxu0 %v2141
    %3981 = vmatpush1.bf16.msra.mxu0 %v2140
    %3982 = vmatprep.subr.bf16.mxu0 %v2137
    %3983 = vmatpush1.bf16.msra.mxu0 %v2136
    %3984 = vmatprep.subr.bf16.mxu0 %v2133
    %3985 = vmatpush1.bf16.msra.mxu0 %v2132
    %3986 = vmatprep.subr.bf16.mxu0 %v2129
    %3987 = vmatpush1.bf16.msra.mxu0 %v2128
    %3988 = vmatprep.subr.bf16.mxu0 %v2125
    %3989 = vmatpush1.bf16.msra.mxu0 %v2124
    %3990 = vmatprep.subr.bf16.mxu0 %v2121
    %3991 = vmatpush1.bf16.msra.mxu0 %v2120
    %3992 = vmatprep.subr.bf16.mxu0 %v2181
    %3993 = vmatpush2.bf16.msra.mxu0 %v2180
    %3994 = vmatprep.subr.bf16.mxu0 %v2177
    %3995 = vmatpush2.bf16.msra.mxu0 %v2176
    %3996 = vmatprep.subr.bf16.mxu0 %v2173
    %3997 = vmatpush2.bf16.msra.mxu0 %v2172
    %3998 = vmatprep.subr.bf16.mxu0 %v2169
    %3999 = vmatpush2.bf16.msra.mxu0 %v2168
    %4000 = vmatprep.subr.bf16.mxu0 %v2165
    %4001 = vmatpush2.bf16.msra.mxu0 %v2164
    %4002 = vmatprep.subr.bf16.mxu0 %v2161
    %4003 = vmatpush2.bf16.msra.mxu0 %v2160
    %4004 = vmatprep.subr.bf16.mxu0 %v2157
    %4005 = vmatpush2.bf16.msra.mxu0 %v2156
    %4006 = vmatprep.subr.bf16.mxu0 %v2153
    %4007 = vmatpush2.bf16.msra.mxu0 %v2152
    %4008 = vmatprep.mubr.bf16.mxu0 %v3015
    %4009 = vmatmul.mubr.bf16.gmra.mxu0 %v3014
    %v4010 = vpop.f32.mrf.mxu0
    %v4011 = vadd.f32 %v2313, %v4010
    %v4012 = vpop.f32.mrf.mxu0
    %v4013 = vadd.f32 %v2313, %v4012
    %v4014 = vpop.f32.mrf.mxu0
    %v4015 = vadd.f32 %v2318, %v4014
    %v4016 = vpop.f32.mrf.mxu0
    %v4017 = vadd.f32 %v2318, %v4016
    %4018 = vmatprep.mubr.bf16.mxu0 %v3019
    %4019 = vmatmul.mubr.bf16.gmra.mxu0 %v3018
    %v4020 = vpop.f32.mrf.mxu0
    %v4021 = vadd.f32 %v2323, %v4020
    %v4022 = vpop.f32.mrf.mxu0
    %v4023 = vadd.f32 %v2323, %v4022
    %v4024 = vpop.f32.mrf.mxu0
    %v4025 = vadd.f32 %v2328, %v4024
    %v4026 = vpop.f32.mrf.mxu0
    %v4027 = vadd.f32 %v2328, %v4026
    %4028 = vmatprep.mubr.bf16.mxu0 %v3023
    %4029 = vmatmul.mubr.bf16.gmra.mxu0 %v3022
    %v4030 = vpop.f32.mrf.mxu0
    %v4031 = vadd.f32 %v2333, %v4030
    %v4032 = vpop.f32.mrf.mxu0
    %v4033 = vadd.f32 %v2333, %v4032
    %v4034 = vpop.f32.mrf.mxu0
    %v4035 = vadd.f32 %v2338, %v4034
    %v4036 = vpop.f32.mrf.mxu0
    %v4037 = vadd.f32 %v2338, %v4036
    %4038 = vmatprep.mubr.bf16.mxu0 %v3027
    %4039 = vmatmul.mubr.bf16.gmra.mxu0 %v3026
    %v4040 = vpop.f32.mrf.mxu0
    %v4041 = vadd.f32 %v2343, %v4040
    %v4042 = vpop.f32.mrf.mxu0
    %v4043 = vadd.f32 %v2343, %v4042
    %v4044 = vpop.f32.mrf.mxu0
    %v4045 = vadd.f32 %v2348, %v4044
    %v4046 = vpop.f32.mrf.mxu0
    %v4047 = vadd.f32 %v2348, %v4046
    %4048 = vmatprep.mubr.bf16.mxu0 %v3031
    %4049 = vmatmul.mubr.bf16.gmra.mxu0 %v3030
    %v4050 = vpop.f32.mrf.mxu0
    %v4051 = vadd.f32 %v2353, %v4050
    %v4052 = vpop.f32.mrf.mxu0
    %v4053 = vadd.f32 %v2353, %v4052
    %v4054 = vpop.f32.mrf.mxu0
    %v4055 = vadd.f32 %v2358, %v4054
    %v4056 = vpop.f32.mrf.mxu0
    %v4057 = vadd.f32 %v2358, %v4056
    %4058 = vmatprep.mubr.bf16.mxu0 %v3035
    %4059 = vmatmul.mubr.bf16.gmra.mxu0 %v3034
    %v4060 = vpop.f32.mrf.mxu0
    %v4061 = vadd.f32 %v2363, %v4060
    %v4062 = vpop.f32.mrf.mxu0
    %v4063 = vadd.f32 %v2363, %v4062
    %v4064 = vpop.f32.mrf.mxu0
    %v4065 = vadd.f32 %v2368, %v4064
    %v4066 = vpop.f32.mrf.mxu0
    %v4067 = vadd.f32 %v2368, %v4066
    %4068 = vmatprep.mubr.bf16.mxu0 %v3039
    %4069 = vmatmul.mubr.bf16.gmra.mxu0 %v3038
    %v4070 = vpop.f32.mrf.mxu0
    %v4071 = vadd.f32 %v2373, %v4070
    %v4072 = vpop.f32.mrf.mxu0
    %v4073 = vadd.f32 %v2373, %v4072
    %v4074 = vpop.f32.mrf.mxu0
    %v4075 = vadd.f32 %v2378, %v4074
    %v4076 = vpop.f32.mrf.mxu0
    %v4077 = vadd.f32 %v2378, %v4076
    %4078 = vmatprep.mubr.bf16.mxu0 %v3043
    %4079 = vmatmul.mubr.bf16.gmra.mxu0 %v3042
    %v4080 = vpop.f32.mrf.mxu0
    %v4081 = vadd.f32 %v2383, %v4080
    %v4082 = vpop.f32.mrf.mxu0
    %v4083 = vadd.f32 %v2383, %v4082
    %v4084 = vpop.f32.mrf.mxu0
    %v4085 = vadd.f32 %v2388, %v4084
    %v4086 = vpop.f32.mrf.mxu0
    %v4087 = vadd.f32 %v2388, %v4086
    %4088 = vmatprep.mubr.bf16.mxu0 %v3047
    %4089 = vmatmul.mubr.bf16.gmra.mxu0 %v3046
    %v4090 = vpop.f32.mrf.mxu0
    %v4091 = vadd.f32 %v2393, %v4090
    %v4092 = vpop.f32.mrf.mxu0
    %v4093 = vadd.f32 %v2393, %v4092
    %v4094 = vpop.f32.mrf.mxu0
    %v4095 = vadd.f32 %v2398, %v4094
    %v4096 = vpop.f32.mrf.mxu0
    %v4097 = vadd.f32 %v2398, %v4096
    %4098 = vmatprep.mubr.bf16.mxu0 %v3051
    %4099 = vmatmul.mubr.bf16.gmra.mxu0 %v3050
    %v4100 = vpop.f32.mrf.mxu0
    %v4101 = vadd.f32 %v2403, %v4100
    %v4102 = vpop.f32.mrf.mxu0
    %v4103 = vadd.f32 %v2403, %v4102
    %v4104 = vpop.f32.mrf.mxu0
    %v4105 = vadd.f32 %v2408, %v4104
    %v4106 = vpop.f32.mrf.mxu0
    %v4107 = vadd.f32 %v2408, %v4106
    %4108 = vmatprep.mubr.bf16.mxu0 %v3055
    %4109 = vmatmul.mubr.bf16.gmra.mxu0 %v3054
    %v4110 = vpop.f32.mrf.mxu0
    %v4111 = vadd.f32 %v2413, %v4110
    %v4112 = vpop.f32.mrf.mxu0
    %v4113 = vadd.f32 %v2413, %v4112
    %v4114 = vpop.f32.mrf.mxu0
    %v4115 = vadd.f32 %v2418, %v4114
    %v4116 = vpop.f32.mrf.mxu0
    %v4117 = vadd.f32 %v2418, %v4116
    %4118 = vmatprep.mubr.bf16.mxu0 %v3059
    %4119 = vmatmul.mubr.bf16.gmra.mxu0 %v3058
    %v4120 = vpop.f32.mrf.mxu0
    %v4121 = vadd.f32 %v2423, %v4120
    %v4122 = vpop.f32.mrf.mxu0
    %v4123 = vadd.f32 %v2423, %v4122
    %v4124 = vpop.f32.mrf.mxu0
    %v4125 = vadd.f32 %v2428, %v4124
    %v4126 = vpop.f32.mrf.mxu0
    %v4127 = vadd.f32 %v2428, %v4126
    %4128 = vmatprep.mubr.bf16.mxu0 %v3063
    %4129 = vmatmul.mubr.bf16.gmra.mxu0 %v3062
    %v4130 = vpop.f32.mrf.mxu0
    %v4131 = vadd.f32 %v2433, %v4130
    %v4132 = vpop.f32.mrf.mxu0
    %v4133 = vadd.f32 %v2433, %v4132
    %v4134 = vpop.f32.mrf.mxu0
    %v4135 = vadd.f32 %v2438, %v4134
    %v4136 = vpop.f32.mrf.mxu0
    %v4137 = vadd.f32 %v2438, %v4136
    %4138 = vmatprep.mubr.bf16.mxu0 %v3067
    %4139 = vmatmul.mubr.bf16.gmra.mxu0 %v3066
    %v4140 = vpop.f32.mrf.mxu0
    %v4141 = vadd.f32 %v2443, %v4140
    %v4142 = vpop.f32.mrf.mxu0
    %v4143 = vadd.f32 %v2443, %v4142
    %v4144 = vpop.f32.mrf.mxu0
    %v4145 = vadd.f32 %v2448, %v4144
    %v4146 = vpop.f32.mrf.mxu0
    %v4147 = vadd.f32 %v2448, %v4146
    %4148 = vmatprep.mubr.bf16.mxu0 %v3071
    %4149 = vmatmul.mubr.bf16.gmra.mxu0 %v3070
    %v4150 = vpop.f32.mrf.mxu0
    %v4151 = vadd.f32 %v2453, %v4150
    %v4152 = vpop.f32.mrf.mxu0
    %v4153 = vadd.f32 %v2453, %v4152
    %v4154 = vpop.f32.mrf.mxu0
    %v4155 = vadd.f32 %v2458, %v4154
    %v4156 = vpop.f32.mrf.mxu0
    %v4157 = vadd.f32 %v2458, %v4156
    %4158 = vmatprep.mubr.bf16.mxu0 %v3075
    %4159 = vmatmul.mubr.bf16.gmra.mxu0 %v3074
    %v4160 = vpop.f32.mrf.mxu0
    %v4161 = vadd.f32 %v2463, %v4160
    %v4162 = vpop.f32.mrf.mxu0
    %v4163 = vadd.f32 %v2463, %v4162
    %v4164 = vpop.f32.mrf.mxu0
    %v4165 = vadd.f32 %v2468, %v4164
    %v4166 = vpop.f32.mrf.mxu0
    %v4167 = vadd.f32 %v2468, %v4166
    %4168 = vmatprep.mubr.bf16.mxu0 %v3079
    %4169 = vmatmul.mubr.bf16.gmra.mxu0 %v3078
    %v4170 = vpop.f32.mrf.mxu0
    %v4171 = vadd.f32 %v2473, %v4170
    %v4172 = vpop.f32.mrf.mxu0
    %v4173 = vadd.f32 %v2473, %v4172
    %v4174 = vpop.f32.mrf.mxu0
    %v4175 = vadd.f32 %v2478, %v4174
    %v4176 = vpop.f32.mrf.mxu0
    %v4177 = vadd.f32 %v2478, %v4176
    %4178 = vmatprep.mubr.bf16.mxu0 %v3083
    %4179 = vmatmul.mubr.bf16.gmra.mxu0 %v3082
    %v4180 = vpop.f32.mrf.mxu0
    %v4181 = vadd.f32 %v2483, %v4180
    %v4182 = vpop.f32.mrf.mxu0
    %v4183 = vadd.f32 %v2483, %v4182
    %v4184 = vpop.f32.mrf.mxu0
    %v4185 = vadd.f32 %v2488, %v4184
    %v4186 = vpop.f32.mrf.mxu0
    %v4187 = vadd.f32 %v2488, %v4186
    %4188 = vmatprep.mubr.bf16.mxu0 %v3087
    %4189 = vmatmul.mubr.bf16.gmra.mxu0 %v3086
    %v4190 = vpop.f32.mrf.mxu0
    %v4191 = vadd.f32 %v2493, %v4190
    %v4192 = vpop.f32.mrf.mxu0
    %v4193 = vadd.f32 %v2493, %v4192
    %v4194 = vpop.f32.mrf.mxu0
    %v4195 = vadd.f32 %v2498, %v4194
    %v4196 = vpop.f32.mrf.mxu0
    %v4197 = vadd.f32 %v2498, %v4196
    %4198 = vmatprep.mubr.bf16.mxu0 %v3091
    %4199 = vmatmul.mubr.bf16.gmra.mxu0 %v3090
    %v4200 = vpop.f32.mrf.mxu0
    %v4201 = vadd.f32 %v2503, %v4200
    %v4202 = vpop.f32.mrf.mxu0
    %v4203 = vadd.f32 %v2503, %v4202
    %v4204 = vpop.f32.mrf.mxu0
    %v4205 = vadd.f32 %v2508, %v4204
    %v4206 = vpop.f32.mrf.mxu0
    %v4207 = vadd.f32 %v2508, %v4206
    %4208 = vmatprep.mubr.bf16.mxu0 %v3095
    %4209 = vmatmul.mubr.bf16.gmra.mxu0 %v3094
    %v4210 = vpop.f32.mrf.mxu0
    %v4211 = vadd.f32 %v2513, %v4210
    %v4212 = vpop.f32.mrf.mxu0
    %v4213 = vadd.f32 %v2513, %v4212
    %v4214 = vpop.f32.mrf.mxu0
    %v4215 = vadd.f32 %v2518, %v4214
    %v4216 = vpop.f32.mrf.mxu0
    %v4217 = vadd.f32 %v2518, %v4216
    %4218 = vmatprep.mubr.bf16.mxu0 %v3099
    %4219 = vmatmul.mubr.bf16.gmra.mxu0 %v3098
    %v4220 = vpop.f32.mrf.mxu0
    %v4221 = vadd.f32 %v2523, %v4220
    %v4222 = vpop.f32.mrf.mxu0
    %v4223 = vadd.f32 %v2523, %v4222
    %v4224 = vpop.f32.mrf.mxu0
    %v4225 = vadd.f32 %v2528, %v4224
    %v4226 = vpop.f32.mrf.mxu0
    %v4227 = vadd.f32 %v2528, %v4226
    %4228 = vmatprep.mubr.bf16.mxu0 %v3103
    %4229 = vmatmul.mubr.bf16.gmra.mxu0 %v3102
    %v4230 = vpop.f32.mrf.mxu0
    %v4231 = vadd.f32 %v2533, %v4230
    %v4232 = vpop.f32.mrf.mxu0
    %v4233 = vadd.f32 %v2533, %v4232
    %v4234 = vpop.f32.mrf.mxu0
    %v4235 = vadd.f32 %v2538, %v4234
    %v4236 = vpop.f32.mrf.mxu0
    %v4237 = vadd.f32 %v2538, %v4236
    %4238 = vmatprep.mubr.bf16.mxu0 %v3107
    %4239 = vmatmul.mubr.bf16.gmra.mxu0 %v3106
    %v4240 = vpop.f32.mrf.mxu0
    %v4241 = vadd.f32 %v2543, %v4240
    %v4242 = vpop.f32.mrf.mxu0
    %v4243 = vadd.f32 %v2543, %v4242
    %v4244 = vpop.f32.mrf.mxu0
    %v4245 = vadd.f32 %v2548, %v4244
    %v4246 = vpop.f32.mrf.mxu0
    %v4247 = vadd.f32 %v2548, %v4246
    %4248 = vmatprep.mubr.bf16.mxu0 %v3111
    %4249 = vmatmul.mubr.bf16.gmra.mxu0 %v3110
    %v4250 = vpop.f32.mrf.mxu0
    %v4251 = vadd.f32 %v2553, %v4250
    %v4252 = vpop.f32.mrf.mxu0
    %v4253 = vadd.f32 %v2553, %v4252
    %v4254 = vpop.f32.mrf.mxu0
    %v4255 = vadd.f32 %v2558, %v4254
    %v4256 = vpop.f32.mrf.mxu0
    %v4257 = vadd.f32 %v2558, %v4256
    %4258 = vmatprep.mubr.bf16.mxu0 %v3115
    %4259 = vmatmul.mubr.bf16.gmra.mxu0 %v3114
    %v4260 = vpop.f32.mrf.mxu0
    %v4261 = vadd.f32 %v2563, %v4260
    %v4262 = vpop.f32.mrf.mxu0
    %v4263 = vadd.f32 %v2563, %v4262
    %v4264 = vpop.f32.mrf.mxu0
    %v4265 = vadd.f32 %v2568, %v4264
    %v4266 = vpop.f32.mrf.mxu0
    %v4267 = vadd.f32 %v2568, %v4266
    %4268 = vmatprep.mubr.bf16.mxu0 %v3119
    %4269 = vmatmul.mubr.bf16.gmra.mxu0 %v3118
    %v4270 = vpop.f32.mrf.mxu0
    %v4271 = vadd.f32 %v2573, %v4270
    %v4272 = vpop.f32.mrf.mxu0
    %v4273 = vadd.f32 %v2573, %v4272
    %v4274 = vpop.f32.mrf.mxu0
    %v4275 = vadd.f32 %v2578, %v4274
    %v4276 = vpop.f32.mrf.mxu0
    %v4277 = vadd.f32 %v2578, %v4276
    %4278 = vmatprep.mubr.bf16.mxu0 %v3123
    %4279 = vmatmul.mubr.bf16.gmra.mxu0 %v3122
    %v4280 = vpop.f32.mrf.mxu0
    %v4281 = vadd.f32 %v2583, %v4280
    %v4282 = vpop.f32.mrf.mxu0
    %v4283 = vadd.f32 %v2583, %v4282
    %v4284 = vpop.f32.mrf.mxu0
    %v4285 = vadd.f32 %v2588, %v4284
    %v4286 = vpop.f32.mrf.mxu0
    %v4287 = vadd.f32 %v2588, %v4286
    %4288 = vmatprep.mubr.bf16.mxu0 %v3127
    %4289 = vmatmul.mubr.bf16.gmra.mxu0 %v3126
    %v4290 = vpop.f32.mrf.mxu0
    %v4291 = vadd.f32 %v2593, %v4290
    %v4292 = vpop.f32.mrf.mxu0
    %v4293 = vadd.f32 %v2593, %v4292
    %v4294 = vpop.f32.mrf.mxu0
    %v4295 = vadd.f32 %v2598, %v4294
    %v4296 = vpop.f32.mrf.mxu0
    %v4297 = vadd.f32 %v2598, %v4296
    %4298 = vmatprep.mubr.bf16.mxu0 %v3131
    %4299 = vmatmul.mubr.bf16.gmra.mxu0 %v3130
    %v4300 = vpop.f32.mrf.mxu0
    %v4301 = vadd.f32 %v2603, %v4300
    %v4302 = vpop.f32.mrf.mxu0
    %v4303 = vadd.f32 %v2603, %v4302
    %v4304 = vpop.f32.mrf.mxu0
    %v4305 = vadd.f32 %v2608, %v4304
    %v4306 = vpop.f32.mrf.mxu0
    %v4307 = vadd.f32 %v2608, %v4306
    %4308 = vmatprep.mubr.bf16.mxu0 %v3135
    %4309 = vmatmul.mubr.bf16.gmra.mxu0 %v3134
    %v4310 = vpop.f32.mrf.mxu0
    %v4311 = vadd.f32 %v2613, %v4310
    %v4312 = vpop.f32.mrf.mxu0
    %v4313 = vadd.f32 %v2613, %v4312
    %v4314 = vpop.f32.mrf.mxu0
    %v4315 = vadd.f32 %v2618, %v4314
    %v4316 = vpop.f32.mrf.mxu0
    %v4317 = vadd.f32 %v2618, %v4316
    %4318 = vmatprep.mubr.bf16.mxu0 %v3139
    %4319 = vmatmul.mubr.bf16.gmra.mxu0 %v3138
    %v4320 = vpop.f32.mrf.mxu0
    %v4321 = vadd.f32 %v2623, %v4320
    %v4322 = vpop.f32.mrf.mxu0
    %v4323 = vadd.f32 %v2623, %v4322
    %v4324 = vpop.f32.mrf.mxu0
    %v4325 = vadd.f32 %v2628, %v4324
    %v4326 = vpop.f32.mrf.mxu0
    %v4327 = vadd.f32 %v2628, %v4326
    %4328 = vdwg.mxu0
    %4329 = vmatprep.subr.bf16.mxu0 %v2213
    %4330 = vmatpush1.bf16.msra.mxu0 %v2212
    %4331 = vmatprep.subr.bf16.mxu0 %v2209
    %4332 = vmatpush1.bf16.msra.mxu0 %v2208
    %4333 = vmatprep.subr.bf16.mxu0 %v2205
    %4334 = vmatpush1.bf16.msra.mxu0 %v2204
    %4335 = vmatprep.subr.bf16.mxu0 %v2201
    %4336 = vmatpush1.bf16.msra.mxu0 %v2200
    %4337 = vmatprep.subr.bf16.mxu0 %v2197
    %4338 = vmatpush1.bf16.msra.mxu0 %v2196
    %4339 = vmatprep.subr.bf16.mxu0 %v2193
    %4340 = vmatpush1.bf16.msra.mxu0 %v2192
    %4341 = vmatprep.subr.bf16.mxu0 %v2189
    %4342 = vmatpush1.bf16.msra.mxu0 %v2188
    %4343 = vmatprep.subr.bf16.mxu0 %v2185
    %4344 = vmatpush1.bf16.msra.mxu0 %v2184
    %4345 = vmatprep.subr.bf16.mxu0 %v2245
    %4346 = vmatpush2.bf16.msra.mxu0 %v2244
    %4347 = vmatprep.subr.bf16.mxu0 %v2241
    %4348 = vmatpush2.bf16.msra.mxu0 %v2240
    %4349 = vmatprep.subr.bf16.mxu0 %v2237
    %4350 = vmatpush2.bf16.msra.mxu0 %v2236
    %4351 = vmatprep.subr.bf16.mxu0 %v2233
    %4352 = vmatpush2.bf16.msra.mxu0 %v2232
    %4353 = vmatprep.subr.bf16.mxu0 %v2229
    %4354 = vmatpush2.bf16.msra.mxu0 %v2228
    %4355 = vmatprep.subr.bf16.mxu0 %v2225
    %4356 = vmatpush2.bf16.msra.mxu0 %v2224
    %4357 = vmatprep.subr.bf16.mxu0 %v2221
    %4358 = vmatpush2.bf16.msra.mxu0 %v2220
    %4359 = vmatprep.subr.bf16.mxu0 %v2217
    %4360 = vmatpush2.bf16.msra.mxu0 %v2216
    %4361 = vmatprep.mubr.bf16.mxu0 %v3017
    %4362 = vmatmul.mubr.bf16.gmra.mxu0 %v3016
    %v4363 = vpop.f32.mrf.mxu0
    %v4364 = vadd.f32 %v4011, %v4363
    %v4365 = vpop.f32.mrf.mxu0
    %v4366 = vadd.f32 %v4013, %v4365
    %v4367 = vpop.f32.mrf.mxu0
    %v4368 = vadd.f32 %v4015, %v4367
    %v4369 = vpop.f32.mrf.mxu0
    %v4370 = vadd.f32 %v4017, %v4369
    %4371 = vmatprep.mubr.bf16.mxu0 %v3021
    %4372 = vmatmul.mubr.bf16.gmra.mxu0 %v3020
    %v4373 = vpop.f32.mrf.mxu0
    %v4374 = vadd.f32 %v4021, %v4373
    %v4375 = vpop.f32.mrf.mxu0
    %v4376 = vadd.f32 %v4023, %v4375
    %v4377 = vpop.f32.mrf.mxu0
    %v4378 = vadd.f32 %v4025, %v4377
    %v4379 = vpop.f32.mrf.mxu0
    %v4380 = vadd.f32 %v4027, %v4379
    %4381 = vmatprep.mubr.bf16.mxu0 %v3025
    %4382 = vmatmul.mubr.bf16.gmra.mxu0 %v3024
    %v4383 = vpop.f32.mrf.mxu0
    %v4384 = vadd.f32 %v4031, %v4383
    %v4385 = vpop.f32.mrf.mxu0
    %v4386 = vadd.f32 %v4033, %v4385
    %v4387 = vpop.f32.mrf.mxu0
    %v4388 = vadd.f32 %v4035, %v4387
    %v4389 = vpop.f32.mrf.mxu0
    %v4390 = vadd.f32 %v4037, %v4389
    %4391 = vmatprep.mubr.bf16.mxu0 %v3029
    %4392 = vmatmul.mubr.bf16.gmra.mxu0 %v3028
    %v4393 = vpop.f32.mrf.mxu0
    %v4394 = vadd.f32 %v4041, %v4393
    %v4395 = vpop.f32.mrf.mxu0
    %v4396 = vadd.f32 %v4043, %v4395
    %v4397 = vpop.f32.mrf.mxu0
    %v4398 = vadd.f32 %v4045, %v4397
    %v4399 = vpop.f32.mrf.mxu0
    %v4400 = vadd.f32 %v4047, %v4399
    %4401 = vmatprep.mubr.bf16.mxu0 %v3033
    %4402 = vmatmul.mubr.bf16.gmra.mxu0 %v3032
    %v4403 = vpop.f32.mrf.mxu0
    %v4404 = vadd.f32 %v4051, %v4403
    %v4405 = vpop.f32.mrf.mxu0
    %v4406 = vadd.f32 %v4053, %v4405
    %v4407 = vpop.f32.mrf.mxu0
    %v4408 = vadd.f32 %v4055, %v4407
    %v4409 = vpop.f32.mrf.mxu0
    %v4410 = vadd.f32 %v4057, %v4409
    %4411 = vmatprep.mubr.bf16.mxu0 %v3037
    %4412 = vmatmul.mubr.bf16.gmra.mxu0 %v3036
    %v4413 = vpop.f32.mrf.mxu0
    %v4414 = vadd.f32 %v4061, %v4413
    %v4415 = vpop.f32.mrf.mxu0
    %v4416 = vadd.f32 %v4063, %v4415
    %v4417 = vpop.f32.mrf.mxu0
    %v4418 = vadd.f32 %v4065, %v4417
    %v4419 = vpop.f32.mrf.mxu0
    %v4420 = vadd.f32 %v4067, %v4419
    %4421 = vmatprep.mubr.bf16.mxu0 %v3041
    %4422 = vmatmul.mubr.bf16.gmra.mxu0 %v3040
    %v4423 = vpop.f32.mrf.mxu0
    %v4424 = vadd.f32 %v4071, %v4423
    %v4425 = vpop.f32.mrf.mxu0
    %v4426 = vadd.f32 %v4073, %v4425
    %v4427 = vpop.f32.mrf.mxu0
    %v4428 = vadd.f32 %v4075, %v4427
    %v4429 = vpop.f32.mrf.mxu0
    %v4430 = vadd.f32 %v4077, %v4429
    %4431 = vmatprep.mubr.bf16.mxu0 %v3045
    %4432 = vmatmul.mubr.bf16.gmra.mxu0 %v3044
    %v4433 = vpop.f32.mrf.mxu0
    %v4434 = vadd.f32 %v4081, %v4433
    %v4435 = vpop.f32.mrf.mxu0
    %v4436 = vadd.f32 %v4083, %v4435
    %v4437 = vpop.f32.mrf.mxu0
    %v4438 = vadd.f32 %v4085, %v4437
    %v4439 = vpop.f32.mrf.mxu0
    %v4440 = vadd.f32 %v4087, %v4439
    %4441 = vmatprep.mubr.bf16.mxu0 %v3049
    %4442 = vmatmul.mubr.bf16.gmra.mxu0 %v3048
    %v4443 = vpop.f32.mrf.mxu0
    %v4444 = vadd.f32 %v4091, %v4443
    %v4445 = vpop.f32.mrf.mxu0
    %v4446 = vadd.f32 %v4093, %v4445
    %v4447 = vpop.f32.mrf.mxu0
    %v4448 = vadd.f32 %v4095, %v4447
    %v4449 = vpop.f32.mrf.mxu0
    %v4450 = vadd.f32 %v4097, %v4449
    %4451 = vmatprep.mubr.bf16.mxu0 %v3053
    %4452 = vmatmul.mubr.bf16.gmra.mxu0 %v3052
    %v4453 = vpop.f32.mrf.mxu0
    %v4454 = vadd.f32 %v4101, %v4453
    %v4455 = vpop.f32.mrf.mxu0
    %v4456 = vadd.f32 %v4103, %v4455
    %v4457 = vpop.f32.mrf.mxu0
    %v4458 = vadd.f32 %v4105, %v4457
    %v4459 = vpop.f32.mrf.mxu0
    %v4460 = vadd.f32 %v4107, %v4459
    %4461 = vmatprep.mubr.bf16.mxu0 %v3057
    %4462 = vmatmul.mubr.bf16.gmra.mxu0 %v3056
    %v4463 = vpop.f32.mrf.mxu0
    %v4464 = vadd.f32 %v4111, %v4463
    %v4465 = vpop.f32.mrf.mxu0
    %v4466 = vadd.f32 %v4113, %v4465
    %v4467 = vpop.f32.mrf.mxu0
    %v4468 = vadd.f32 %v4115, %v4467
    %v4469 = vpop.f32.mrf.mxu0
    %v4470 = vadd.f32 %v4117, %v4469
    %4471 = vmatprep.mubr.bf16.mxu0 %v3061
    %4472 = vmatmul.mubr.bf16.gmra.mxu0 %v3060
    %v4473 = vpop.f32.mrf.mxu0
    %v4474 = vadd.f32 %v4121, %v4473
    %v4475 = vpop.f32.mrf.mxu0
    %v4476 = vadd.f32 %v4123, %v4475
    %v4477 = vpop.f32.mrf.mxu0
    %v4478 = vadd.f32 %v4125, %v4477
    %v4479 = vpop.f32.mrf.mxu0
    %v4480 = vadd.f32 %v4127, %v4479
    %4481 = vmatprep.mubr.bf16.mxu0 %v3065
    %4482 = vmatmul.mubr.bf16.gmra.mxu0 %v3064
    %v4483 = vpop.f32.mrf.mxu0
    %v4484 = vadd.f32 %v4131, %v4483
    %v4485 = vpop.f32.mrf.mxu0
    %v4486 = vadd.f32 %v4133, %v4485
    %v4487 = vpop.f32.mrf.mxu0
    %v4488 = vadd.f32 %v4135, %v4487
    %v4489 = vpop.f32.mrf.mxu0
    %v4490 = vadd.f32 %v4137, %v4489
    %4491 = vmatprep.mubr.bf16.mxu0 %v3069
    %4492 = vmatmul.mubr.bf16.gmra.mxu0 %v3068
    %v4493 = vpop.f32.mrf.mxu0
    %v4494 = vadd.f32 %v4141, %v4493
    %v4495 = vpop.f32.mrf.mxu0
    %v4496 = vadd.f32 %v4143, %v4495
    %v4497 = vpop.f32.mrf.mxu0
    %v4498 = vadd.f32 %v4145, %v4497
    %v4499 = vpop.f32.mrf.mxu0
    %v4500 = vadd.f32 %v4147, %v4499
    %4501 = vmatprep.mubr.bf16.mxu0 %v3073
    %4502 = vmatmul.mubr.bf16.gmra.mxu0 %v3072
    %v4503 = vpop.f32.mrf.mxu0
    %v4504 = vadd.f32 %v4151, %v4503
    %v4505 = vpop.f32.mrf.mxu0
    %v4506 = vadd.f32 %v4153, %v4505
    %v4507 = vpop.f32.mrf.mxu0
    %v4508 = vadd.f32 %v4155, %v4507
    %v4509 = vpop.f32.mrf.mxu0
    %v4510 = vadd.f32 %v4157, %v4509
    %4511 = vmatprep.mubr.bf16.mxu0 %v3077
    %4512 = vmatmul.mubr.bf16.gmra.mxu0 %v3076
    %v4513 = vpop.f32.mrf.mxu0
    %v4514 = vadd.f32 %v4161, %v4513
    %v4515 = vpop.f32.mrf.mxu0
    %v4516 = vadd.f32 %v4163, %v4515
    %v4517 = vpop.f32.mrf.mxu0
    %v4518 = vadd.f32 %v4165, %v4517
    %v4519 = vpop.f32.mrf.mxu0
    %v4520 = vadd.f32 %v4167, %v4519
    %4521 = vmatprep.mubr.bf16.mxu0 %v3081
    %4522 = vmatmul.mubr.bf16.gmra.mxu0 %v3080
    %v4523 = vpop.f32.mrf.mxu0
    %v4524 = vadd.f32 %v4171, %v4523
    %v4525 = vpop.f32.mrf.mxu0
    %v4526 = vadd.f32 %v4173, %v4525
    %v4527 = vpop.f32.mrf.mxu0
    %v4528 = vadd.f32 %v4175, %v4527
    %v4529 = vpop.f32.mrf.mxu0
    %v4530 = vadd.f32 %v4177, %v4529
    %4531 = vmatprep.mubr.bf16.mxu0 %v3085
    %4532 = vmatmul.mubr.bf16.gmra.mxu0 %v3084
    %v4533 = vpop.f32.mrf.mxu0
    %v4534 = vadd.f32 %v4181, %v4533
    %v4535 = vpop.f32.mrf.mxu0
    %v4536 = vadd.f32 %v4183, %v4535
    %v4537 = vpop.f32.mrf.mxu0
    %v4538 = vadd.f32 %v4185, %v4537
    %v4539 = vpop.f32.mrf.mxu0
    %v4540 = vadd.f32 %v4187, %v4539
    %4541 = vmatprep.mubr.bf16.mxu0 %v3089
    %4542 = vmatmul.mubr.bf16.gmra.mxu0 %v3088
    %v4543 = vpop.f32.mrf.mxu0
    %v4544 = vadd.f32 %v4191, %v4543
    %v4545 = vpop.f32.mrf.mxu0
    %v4546 = vadd.f32 %v4193, %v4545
    %v4547 = vpop.f32.mrf.mxu0
    %v4548 = vadd.f32 %v4195, %v4547
    %v4549 = vpop.f32.mrf.mxu0
    %v4550 = vadd.f32 %v4197, %v4549
    %4551 = vmatprep.mubr.bf16.mxu0 %v3093
    %4552 = vmatmul.mubr.bf16.gmra.mxu0 %v3092
    %v4553 = vpop.f32.mrf.mxu0
    %v4554 = vadd.f32 %v4201, %v4553
    %v4555 = vpop.f32.mrf.mxu0
    %v4556 = vadd.f32 %v4203, %v4555
    %v4557 = vpop.f32.mrf.mxu0
    %v4558 = vadd.f32 %v4205, %v4557
    %v4559 = vpop.f32.mrf.mxu0
    %v4560 = vadd.f32 %v4207, %v4559
    %4561 = vmatprep.mubr.bf16.mxu0 %v3097
    %4562 = vmatmul.mubr.bf16.gmra.mxu0 %v3096
    %v4563 = vpop.f32.mrf.mxu0
    %v4564 = vadd.f32 %v4211, %v4563
    %v4565 = vpop.f32.mrf.mxu0
    %v4566 = vadd.f32 %v4213, %v4565
    %v4567 = vpop.f32.mrf.mxu0
    %v4568 = vadd.f32 %v4215, %v4567
    %v4569 = vpop.f32.mrf.mxu0
    %v4570 = vadd.f32 %v4217, %v4569
    %4571 = vmatprep.mubr.bf16.mxu0 %v3101
    %4572 = vmatmul.mubr.bf16.gmra.mxu0 %v3100
    %v4573 = vpop.f32.mrf.mxu0
    %v4574 = vadd.f32 %v4221, %v4573
    %v4575 = vpop.f32.mrf.mxu0
    %v4576 = vadd.f32 %v4223, %v4575
    %v4577 = vpop.f32.mrf.mxu0
    %v4578 = vadd.f32 %v4225, %v4577
    %v4579 = vpop.f32.mrf.mxu0
    %v4580 = vadd.f32 %v4227, %v4579
    %4581 = vmatprep.mubr.bf16.mxu0 %v3105
    %4582 = vmatmul.mubr.bf16.gmra.mxu0 %v3104
    %v4583 = vpop.f32.mrf.mxu0
    %v4584 = vadd.f32 %v4231, %v4583
    %v4585 = vpop.f32.mrf.mxu0
    %v4586 = vadd.f32 %v4233, %v4585
    %v4587 = vpop.f32.mrf.mxu0
    %v4588 = vadd.f32 %v4235, %v4587
    %v4589 = vpop.f32.mrf.mxu0
    %v4590 = vadd.f32 %v4237, %v4589
    %4591 = vmatprep.mubr.bf16.mxu0 %v3109
    %4592 = vmatmul.mubr.bf16.gmra.mxu0 %v3108
    %v4593 = vpop.f32.mrf.mxu0
    %v4594 = vadd.f32 %v4241, %v4593
    %v4595 = vpop.f32.mrf.mxu0
    %v4596 = vadd.f32 %v4243, %v4595
    %v4597 = vpop.f32.mrf.mxu0
    %v4598 = vadd.f32 %v4245, %v4597
    %v4599 = vpop.f32.mrf.mxu0
    %v4600 = vadd.f32 %v4247, %v4599
    %4601 = vmatprep.mubr.bf16.mxu0 %v3113
    %4602 = vmatmul.mubr.bf16.gmra.mxu0 %v3112
    %v4603 = vpop.f32.mrf.mxu0
    %v4604 = vadd.f32 %v4251, %v4603
    %v4605 = vpop.f32.mrf.mxu0
    %v4606 = vadd.f32 %v4253, %v4605
    %v4607 = vpop.f32.mrf.mxu0
    %v4608 = vadd.f32 %v4255, %v4607
    %v4609 = vpop.f32.mrf.mxu0
    %v4610 = vadd.f32 %v4257, %v4609
    %4611 = vmatprep.mubr.bf16.mxu0 %v3117
    %4612 = vmatmul.mubr.bf16.gmra.mxu0 %v3116
    %v4613 = vpop.f32.mrf.mxu0
    %v4614 = vadd.f32 %v4261, %v4613
    %v4615 = vpop.f32.mrf.mxu0
    %v4616 = vadd.f32 %v4263, %v4615
    %v4617 = vpop.f32.mrf.mxu0
    %v4618 = vadd.f32 %v4265, %v4617
    %v4619 = vpop.f32.mrf.mxu0
    %v4620 = vadd.f32 %v4267, %v4619
    %4621 = vmatprep.mubr.bf16.mxu0 %v3121
    %4622 = vmatmul.mubr.bf16.gmra.mxu0 %v3120
    %v4623 = vpop.f32.mrf.mxu0
    %v4624 = vadd.f32 %v4271, %v4623
    %v4625 = vpop.f32.mrf.mxu0
    %v4626 = vadd.f32 %v4273, %v4625
    %v4627 = vpop.f32.mrf.mxu0
    %v4628 = vadd.f32 %v4275, %v4627
    %v4629 = vpop.f32.mrf.mxu0
    %v4630 = vadd.f32 %v4277, %v4629
    %4631 = vmatprep.mubr.bf16.mxu0 %v3125
    %4632 = vmatmul.mubr.bf16.gmra.mxu0 %v3124
    %v4633 = vpop.f32.mrf.mxu0
    %v4634 = vadd.f32 %v4281, %v4633
    %v4635 = vpop.f32.mrf.mxu0
    %v4636 = vadd.f32 %v4283, %v4635
    %v4637 = vpop.f32.mrf.mxu0
    %v4638 = vadd.f32 %v4285, %v4637
    %v4639 = vpop.f32.mrf.mxu0
    %v4640 = vadd.f32 %v4287, %v4639
    %4641 = vmatprep.mubr.bf16.mxu0 %v3129
    %4642 = vmatmul.mubr.bf16.gmra.mxu0 %v3128
    %v4643 = vpop.f32.mrf.mxu0
    %v4644 = vadd.f32 %v4291, %v4643
    %v4645 = vpop.f32.mrf.mxu0
    %v4646 = vadd.f32 %v4293, %v4645
    %v4647 = vpop.f32.mrf.mxu0
    %v4648 = vadd.f32 %v4295, %v4647
    %v4649 = vpop.f32.mrf.mxu0
    %v4650 = vadd.f32 %v4297, %v4649
    %4651 = vmatprep.mubr.bf16.mxu0 %v3133
    %4652 = vmatmul.mubr.bf16.gmra.mxu0 %v3132
    %v4653 = vpop.f32.mrf.mxu0
    %v4654 = vadd.f32 %v4301, %v4653
    %v4655 = vpop.f32.mrf.mxu0
    %v4656 = vadd.f32 %v4303, %v4655
    %v4657 = vpop.f32.mrf.mxu0
    %v4658 = vadd.f32 %v4305, %v4657
    %v4659 = vpop.f32.mrf.mxu0
    %v4660 = vadd.f32 %v4307, %v4659
    %4661 = vmatprep.mubr.bf16.mxu0 %v3137
    %4662 = vmatmul.mubr.bf16.gmra.mxu0 %v3136
    %v4663 = vpop.f32.mrf.mxu0
    %v4664 = vadd.f32 %v4311, %v4663
    %v4665 = vpop.f32.mrf.mxu0
    %v4666 = vadd.f32 %v4313, %v4665
    %v4667 = vpop.f32.mrf.mxu0
    %v4668 = vadd.f32 %v4315, %v4667
    %v4669 = vpop.f32.mrf.mxu0
    %v4670 = vadd.f32 %v4317, %v4669
    %4671 = vmatprep.mubr.bf16.mxu0 %v3141
    %4672 = vmatmul.mubr.bf16.gmra.mxu0 %v3140
    %v4673 = vpop.f32.mrf.mxu0
    %v4674 = vadd.f32 %v4321, %v4673
    %v4675 = vpop.f32.mrf.mxu0
    %v4676 = vadd.f32 %v4323, %v4675
    %v4677 = vpop.f32.mrf.mxu0
    %v4678 = vadd.f32 %v4325, %v4677
    %v4679 = vpop.f32.mrf.mxu0
    %v4680 = vadd.f32 %v4327, %v4679
    %4681 = vdwg.mxu0
    %v4682 = vmax.f32 %v3658, 0.0
    %v4683 = vmax.f32 %v3660, 0.0
    %v4684 = vmax.f32 %v4364, 0.0
    %v4685 = vmax.f32 %v4366, 0.0
    %v4686 = vmax.f32 %v3662, 0.0
    %v4687 = vmax.f32 %v3664, 0.0
    %v4688 = vmax.f32 %v4368, 0.0
    %v4689 = vmax.f32 %v4370, 0.0
    %v4690 = vmax.f32 %v3668, 0.0
    %v4691 = vmax.f32 %v3670, 0.0
    %v4692 = vmax.f32 %v4374, 0.0
    %v4693 = vmax.f32 %v4376, 0.0
    %v4694 = vmax.f32 %v3672, 0.0
    %v4695 = vmax.f32 %v3674, 0.0
    %v4696 = vmax.f32 %v4378, 0.0
    %v4697 = vmax.f32 %v4380, 0.0
    %v4698 = vmax.f32 %v3678, 0.0
    %v4699 = vmax.f32 %v3680, 0.0
    %v4700 = vmax.f32 %v4384, 0.0
    %v4701 = vmax.f32 %v4386, 0.0
    %v4702 = vmax.f32 %v3682, 0.0
    %v4703 = vmax.f32 %v3684, 0.0
    %v4704 = vmax.f32 %v4388, 0.0
    %v4705 = vmax.f32 %v4390, 0.0
    %v4706 = vmax.f32 %v3688, 0.0
    %v4707 = vmax.f32 %v3690, 0.0
    %v4708 = vmax.f32 %v4394, 0.0
    %v4709 = vmax.f32 %v4396, 0.0
    %v4710 = vmax.f32 %v3692, 0.0
    %v4711 = vmax.f32 %v3694, 0.0
    %v4712 = vmax.f32 %v4398, 0.0
    %v4713 = vmax.f32 %v4400, 0.0
    %v4714 = vmax.f32 %v3698, 0.0
    %v4715 = vmax.f32 %v3700, 0.0
    %v4716 = vmax.f32 %v4404, 0.0
    %v4717 = vmax.f32 %v4406, 0.0
    %v4718 = vmax.f32 %v3702, 0.0
    %v4719 = vmax.f32 %v3704, 0.0
    %v4720 = vmax.f32 %v4408, 0.0
    %v4721 = vmax.f32 %v4410, 0.0
    %v4722 = vmax.f32 %v3708, 0.0
    %v4723 = vmax.f32 %v3710, 0.0
    %v4724 = vmax.f32 %v4414, 0.0
    %v4725 = vmax.f32 %v4416, 0.0
    %v4726 = vmax.f32 %v3712, 0.0
    %v4727 = vmax.f32 %v3714, 0.0
    %v4728 = vmax.f32 %v4418, 0.0
    %v4729 = vmax.f32 %v4420, 0.0
    %v4730 = vmax.f32 %v3718, 0.0
    %v4731 = vmax.f32 %v3720, 0.0
    %v4732 = vmax.f32 %v4424, 0.0
    %v4733 = vmax.f32 %v4426, 0.0
    %v4734 = vmax.f32 %v3722, 0.0
    %v4735 = vmax.f32 %v3724, 0.0
    %v4736 = vmax.f32 %v4428, 0.0
    %v4737 = vmax.f32 %v4430, 0.0
    %v4738 = vmax.f32 %v3728, 0.0
    %v4739 = vmax.f32 %v3730, 0.0
    %v4740 = vmax.f32 %v4434, 0.0
    %v4741 = vmax.f32 %v4436, 0.0
    %v4742 = vmax.f32 %v3732, 0.0
    %v4743 = vmax.f32 %v3734, 0.0
    %v4744 = vmax.f32 %v4438, 0.0
    %v4745 = vmax.f32 %v4440, 0.0
    %v4746 = vmax.f32 %v3738, 0.0
    %v4747 = vmax.f32 %v3740, 0.0
    %v4748 = vmax.f32 %v4444, 0.0
    %v4749 = vmax.f32 %v4446, 0.0
    %v4750 = vmax.f32 %v3742, 0.0
    %v4751 = vmax.f32 %v3744, 0.0
    %v4752 = vmax.f32 %v4448, 0.0
    %v4753 = vmax.f32 %v4450, 0.0
    %v4754 = vmax.f32 %v3748, 0.0
    %v4755 = vmax.f32 %v3750, 0.0
    %v4756 = vmax.f32 %v4454, 0.0
    %v4757 = vmax.f32 %v4456, 0.0
    %v4758 = vmax.f32 %v3752, 0.0
    %v4759 = vmax.f32 %v3754, 0.0
    %v4760 = vmax.f32 %v4458, 0.0
    %v4761 = vmax.f32 %v4460, 0.0
    %v4762 = vmax.f32 %v3758, 0.0
    %v4763 = vmax.f32 %v3760, 0.0
    %v4764 = vmax.f32 %v4464, 0.0
    %v4765 = vmax.f32 %v4466, 0.0
    %v4766 = vmax.f32 %v3762, 0.0
    %v4767 = vmax.f32 %v3764, 0.0
    %v4768 = vmax.f32 %v4468, 0.0
    %v4769 = vmax.f32 %v4470, 0.0
    %v4770 = vmax.f32 %v3768, 0.0
    %v4771 = vmax.f32 %v3770, 0.0
    %v4772 = vmax.f32 %v4474, 0.0
    %v4773 = vmax.f32 %v4476, 0.0
    %v4774 = vmax.f32 %v3772, 0.0
    %v4775 = vmax.f32 %v3774, 0.0
    %v4776 = vmax.f32 %v4478, 0.0
    %v4777 = vmax.f32 %v4480, 0.0
    %v4778 = vmax.f32 %v3778, 0.0
    %v4779 = vmax.f32 %v3780, 0.0
    %v4780 = vmax.f32 %v4484, 0.0
    %v4781 = vmax.f32 %v4486, 0.0
    %v4782 = vmax.f32 %v3782, 0.0
    %v4783 = vmax.f32 %v3784, 0.0
    %v4784 = vmax.f32 %v4488, 0.0
    %v4785 = vmax.f32 %v4490, 0.0
    %v4786 = vmax.f32 %v3788, 0.0
    %v4787 = vmax.f32 %v3790, 0.0
    %v4788 = vmax.f32 %v4494, 0.0
    %v4789 = vmax.f32 %v4496, 0.0
    %v4790 = vmax.f32 %v3792, 0.0
    %v4791 = vmax.f32 %v3794, 0.0
    %v4792 = vmax.f32 %v4498, 0.0
    %v4793 = vmax.f32 %v4500, 0.0
    %v4794 = vmax.f32 %v3798, 0.0
    %v4795 = vmax.f32 %v3800, 0.0
    %v4796 = vmax.f32 %v4504, 0.0
    %v4797 = vmax.f32 %v4506, 0.0
    %v4798 = vmax.f32 %v3802, 0.0
    %v4799 = vmax.f32 %v3804, 0.0
    %v4800 = vmax.f32 %v4508, 0.0
    %v4801 = vmax.f32 %v4510, 0.0
    %v4802 = vmax.f32 %v3808, 0.0
    %v4803 = vmax.f32 %v3810, 0.0
    %v4804 = vmax.f32 %v4514, 0.0
    %v4805 = vmax.f32 %v4516, 0.0
    %v4806 = vmax.f32 %v3812, 0.0
    %v4807 = vmax.f32 %v3814, 0.0
    %v4808 = vmax.f32 %v4518, 0.0
    %v4809 = vmax.f32 %v4520, 0.0
    %v4810 = vmax.f32 %v3818, 0.0
    %v4811 = vmax.f32 %v3820, 0.0
    %v4812 = vmax.f32 %v4524, 0.0
    %v4813 = vmax.f32 %v4526, 0.0
    %v4814 = vmax.f32 %v3822, 0.0
    %v4815 = vmax.f32 %v3824, 0.0
    %v4816 = vmax.f32 %v4528, 0.0
    %v4817 = vmax.f32 %v4530, 0.0
    %v4818 = vmax.f32 %v3828, 0.0
    %v4819 = vmax.f32 %v3830, 0.0
    %v4820 = vmax.f32 %v4534, 0.0
    %v4821 = vmax.f32 %v4536, 0.0
    %v4822 = vmax.f32 %v3832, 0.0
    %v4823 = vmax.f32 %v3834, 0.0
    %v4824 = vmax.f32 %v4538, 0.0
    %v4825 = vmax.f32 %v4540, 0.0
    %v4826 = vmax.f32 %v3838, 0.0
    %v4827 = vmax.f32 %v3840, 0.0
    %v4828 = vmax.f32 %v4544, 0.0
    %v4829 = vmax.f32 %v4546, 0.0
    %v4830 = vmax.f32 %v3842, 0.0
    %v4831 = vmax.f32 %v3844, 0.0
    %v4832 = vmax.f32 %v4548, 0.0
    %v4833 = vmax.f32 %v4550, 0.0
    %v4834 = vmax.f32 %v3848, 0.0
    %v4835 = vmax.f32 %v3850, 0.0
    %v4836 = vmax.f32 %v4554, 0.0
    %v4837 = vmax.f32 %v4556, 0.0
    %v4838 = vmax.f32 %v3852, 0.0
    %v4839 = vmax.f32 %v3854, 0.0
    %v4840 = vmax.f32 %v4558, 0.0
    %v4841 = vmax.f32 %v4560, 0.0
    %v4842 = vmax.f32 %v3858, 0.0
    %v4843 = vmax.f32 %v3860, 0.0
    %v4844 = vmax.f32 %v4564, 0.0
    %v4845 = vmax.f32 %v4566, 0.0
    %v4846 = vmax.f32 %v3862, 0.0
    %v4847 = vmax.f32 %v3864, 0.0
    %v4848 = vmax.f32 %v4568, 0.0
    %v4849 = vmax.f32 %v4570, 0.0
    %v4850 = vmax.f32 %v3868, 0.0
    %v4851 = vmax.f32 %v3870, 0.0
    %v4852 = vmax.f32 %v4574, 0.0
    %v4853 = vmax.f32 %v4576, 0.0
    %v4854 = vmax.f32 %v3872, 0.0
    %v4855 = vmax.f32 %v3874, 0.0
    %v4856 = vmax.f32 %v4578, 0.0
    %v4857 = vmax.f32 %v4580, 0.0
    %v4858 = vmax.f32 %v3878, 0.0
    %v4859 = vmax.f32 %v3880, 0.0
    %v4860 = vmax.f32 %v4584, 0.0
    %v4861 = vmax.f32 %v4586, 0.0
    %v4862 = vmax.f32 %v3882, 0.0
    %v4863 = vmax.f32 %v3884, 0.0
    %v4864 = vmax.f32 %v4588, 0.0
    %v4865 = vmax.f32 %v4590, 0.0
    %v4866 = vmax.f32 %v3888, 0.0
    %v4867 = vmax.f32 %v3890, 0.0
    %v4868 = vmax.f32 %v4594, 0.0
    %v4869 = vmax.f32 %v4596, 0.0
    %v4870 = vmax.f32 %v3892, 0.0
    %v4871 = vmax.f32 %v3894, 0.0
    %v4872 = vmax.f32 %v4598, 0.0
    %v4873 = vmax.f32 %v4600, 0.0
    %v4874 = vmax.f32 %v3898, 0.0
    %v4875 = vmax.f32 %v3900, 0.0
    %v4876 = vmax.f32 %v4604, 0.0
    %v4877 = vmax.f32 %v4606, 0.0
    %v4878 = vmax.f32 %v3902, 0.0
    %v4879 = vmax.f32 %v3904, 0.0
    %v4880 = vmax.f32 %v4608, 0.0
    %v4881 = vmax.f32 %v4610, 0.0
    %v4882 = vmax.f32 %v3908, 0.0
    %v4883 = vmax.f32 %v3910, 0.0
    %v4884 = vmax.f32 %v4614, 0.0
    %v4885 = vmax.f32 %v4616, 0.0
    %v4886 = vmax.f32 %v3912, 0.0
    %v4887 = vmax.f32 %v3914, 0.0
    %v4888 = vmax.f32 %v4618, 0.0
    %v4889 = vmax.f32 %v4620, 0.0
    %v4890 = vmax.f32 %v3918, 0.0
    %v4891 = vmax.f32 %v3920, 0.0
    %v4892 = vmax.f32 %v4624, 0.0
    %v4893 = vmax.f32 %v4626, 0.0
    %v4894 = vmax.f32 %v3922, 0.0
    %v4895 = vmax.f32 %v3924, 0.0
    %v4896 = vmax.f32 %v4628, 0.0
    %v4897 = vmax.f32 %v4630, 0.0
    %v4898 = vmax.f32 %v3928, 0.0
    %v4899 = vmax.f32 %v3930, 0.0
    %v4900 = vmax.f32 %v4634, 0.0
    %v4901 = vmax.f32 %v4636, 0.0
    %v4902 = vmax.f32 %v3932, 0.0
    %v4903 = vmax.f32 %v3934, 0.0
    %v4904 = vmax.f32 %v4638, 0.0
    %v4905 = vmax.f32 %v4640, 0.0
    %v4906 = vmax.f32 %v3938, 0.0
    %v4907 = vmax.f32 %v3940, 0.0
    %v4908 = vmax.f32 %v4644, 0.0
    %v4909 = vmax.f32 %v4646, 0.0
    %v4910 = vmax.f32 %v3942, 0.0
    %v4911 = vmax.f32 %v3944, 0.0
    %v4912 = vmax.f32 %v4648, 0.0
    %v4913 = vmax.f32 %v4650, 0.0
    %v4914 = vmax.f32 %v3948, 0.0
    %v4915 = vmax.f32 %v3950, 0.0
    %v4916 = vmax.f32 %v4654, 0.0
    %v4917 = vmax.f32 %v4656, 0.0
    %v4918 = vmax.f32 %v3952, 0.0
    %v4919 = vmax.f32 %v3954, 0.0
    %v4920 = vmax.f32 %v4658, 0.0
    %v4921 = vmax.f32 %v4660, 0.0
    %v4922 = vmax.f32 %v3958, 0.0
    %v4923 = vmax.f32 %v3960, 0.0
    %v4924 = vmax.f32 %v4664, 0.0
    %v4925 = vmax.f32 %v4666, 0.0
    %v4926 = vmax.f32 %v3962, 0.0
    %v4927 = vmax.f32 %v3964, 0.0
    %v4928 = vmax.f32 %v4668, 0.0
    %v4929 = vmax.f32 %v4670, 0.0
    %v4930 = vmax.f32 %v3968, 0.0
    %v4931 = vmax.f32 %v3970, 0.0
    %v4932 = vmax.f32 %v4674, 0.0
    %v4933 = vmax.f32 %v4676, 0.0
    %v4934 = vmax.f32 %v3972, 0.0
    %v4935 = vmax.f32 %v3974, 0.0
    %v4936 = vmax.f32 %v4678, 0.0
    %v4937 = vmax.f32 %v4680, 0.0
    %v4938 = vpack.c.bf16 %v4686, %v4682
    %v4939 = vpack.c.bf16 %v4687, %v4683
    %v4940 = vpack.c.bf16 %v4688, %v4684
    %v4941 = vpack.c.bf16 %v4689, %v4685
    %v4942 = vpack.c.bf16 %v4694, %v4690
    %v4943 = vpack.c.bf16 %v4695, %v4691
    %v4944 = vpack.c.bf16 %v4696, %v4692
    %v4945 = vpack.c.bf16 %v4697, %v4693
    %v4946 = vpack.c.bf16 %v4702, %v4698
    %v4947 = vpack.c.bf16 %v4703, %v4699
    %v4948 = vpack.c.bf16 %v4704, %v4700
    %v4949 = vpack.c.bf16 %v4705, %v4701
    %v4950 = vpack.c.bf16 %v4710, %v4706
    %v4951 = vpack.c.bf16 %v4711, %v4707
    %v4952 = vpack.c.bf16 %v4712, %v4708
    %v4953 = vpack.c.bf16 %v4713, %v4709
    %v4954 = vpack.c.bf16 %v4718, %v4714
    %v4955 = vpack.c.bf16 %v4719, %v4715
    %v4956 = vpack.c.bf16 %v4720, %v4716
    %v4957 = vpack.c.bf16 %v4721, %v4717
    %v4958 = vpack.c.bf16 %v4726, %v4722
    %v4959 = vpack.c.bf16 %v4727, %v4723
    %v4960 = vpack.c.bf16 %v4728, %v4724
    %v4961 = vpack.c.bf16 %v4729, %v4725
    %v4962 = vpack.c.bf16 %v4734, %v4730
    %v4963 = vpack.c.bf16 %v4735, %v4731
    %v4964 = vpack.c.bf16 %v4736, %v4732
    %v4965 = vpack.c.bf16 %v4737, %v4733
    %v4966 = vpack.c.bf16 %v4742, %v4738
    %v4967 = vpack.c.bf16 %v4743, %v4739
    %v4968 = vpack.c.bf16 %v4744, %v4740
    %v4969 = vpack.c.bf16 %v4745, %v4741
    %v4970 = vpack.c.bf16 %v4750, %v4746
    %v4971 = vpack.c.bf16 %v4751, %v4747
    %v4972 = vpack.c.bf16 %v4752, %v4748
    %v4973 = vpack.c.bf16 %v4753, %v4749
    %v4974 = vpack.c.bf16 %v4758, %v4754
    %v4975 = vpack.c.bf16 %v4759, %v4755
    %v4976 = vpack.c.bf16 %v4760, %v4756
    %v4977 = vpack.c.bf16 %v4761, %v4757
    %v4978 = vpack.c.bf16 %v4766, %v4762
    %v4979 = vpack.c.bf16 %v4767, %v4763
    %v4980 = vpack.c.bf16 %v4768, %v4764
    %v4981 = vpack.c.bf16 %v4769, %v4765
    %v4982 = vpack.c.bf16 %v4774, %v4770
    %v4983 = vpack.c.bf16 %v4775, %v4771
    %v4984 = vpack.c.bf16 %v4776, %v4772
    %v4985 = vpack.c.bf16 %v4777, %v4773
    %v4986 = vpack.c.bf16 %v4782, %v4778
    %v4987 = vpack.c.bf16 %v4783, %v4779
    %v4988 = vpack.c.bf16 %v4784, %v4780
    %v4989 = vpack.c.bf16 %v4785, %v4781
    %v4990 = vpack.c.bf16 %v4790, %v4786
    %v4991 = vpack.c.bf16 %v4791, %v4787
    %v4992 = vpack.c.bf16 %v4792, %v4788
    %v4993 = vpack.c.bf16 %v4793, %v4789
    %v4994 = vpack.c.bf16 %v4798, %v4794
    %v4995 = vpack.c.bf16 %v4799, %v4795
    %v4996 = vpack.c.bf16 %v4800, %v4796
    %v4997 = vpack.c.bf16 %v4801, %v4797
    %v4998 = vpack.c.bf16 %v4806, %v4802
    %v4999 = vpack.c.bf16 %v4807, %v4803
    %v5000 = vpack.c.bf16 %v4808, %v4804
    %v5001 = vpack.c.bf16 %v4809, %v4805
    %v5002 = vpack.c.bf16 %v4814, %v4810
    %v5003 = vpack.c.bf16 %v4815, %v4811
    %v5004 = vpack.c.bf16 %v4816, %v4812
    %v5005 = vpack.c.bf16 %v4817, %v4813
    %v5006 = vpack.c.bf16 %v4822, %v4818
    %v5007 = vpack.c.bf16 %v4823, %v4819
    %v5008 = vpack.c.bf16 %v4824, %v4820
    %v5009 = vpack.c.bf16 %v4825, %v4821
    %v5010 = vpack.c.bf16 %v4830, %v4826
    %v5011 = vpack.c.bf16 %v4831, %v4827
    %v5012 = vpack.c.bf16 %v4832, %v4828
    %v5013 = vpack.c.bf16 %v4833, %v4829
    %v5014 = vpack.c.bf16 %v4838, %v4834
    %v5015 = vpack.c.bf16 %v4839, %v4835
    %v5016 = vpack.c.bf16 %v4840, %v4836
    %v5017 = vpack.c.bf16 %v4841, %v4837
    %v5018 = vpack.c.bf16 %v4846, %v4842
    %v5019 = vpack.c.bf16 %v4847, %v4843
    %v5020 = vpack.c.bf16 %v4848, %v4844
    %v5021 = vpack.c.bf16 %v4849, %v4845
    %v5022 = vpack.c.bf16 %v4854, %v4850
    %v5023 = vpack.c.bf16 %v4855, %v4851
    %v5024 = vpack.c.bf16 %v4856, %v4852
    %v5025 = vpack.c.bf16 %v4857, %v4853
    %v5026 = vpack.c.bf16 %v4862, %v4858
    %v5027 = vpack.c.bf16 %v4863, %v4859
    %v5028 = vpack.c.bf16 %v4864, %v4860
    %v5029 = vpack.c.bf16 %v4865, %v4861
    %v5030 = vpack.c.bf16 %v4870, %v4866
    %v5031 = vpack.c.bf16 %v4871, %v4867
    %v5032 = vpack.c.bf16 %v4872, %v4868
    %v5033 = vpack.c.bf16 %v4873, %v4869
    %v5034 = vpack.c.bf16 %v4878, %v4874
    %v5035 = vpack.c.bf16 %v4879, %v4875
    %v5036 = vpack.c.bf16 %v4880, %v4876
    %v5037 = vpack.c.bf16 %v4881, %v4877
    %v5038 = vpack.c.bf16 %v4886, %v4882
    %v5039 = vpack.c.bf16 %v4887, %v4883
    %v5040 = vpack.c.bf16 %v4888, %v4884
    %v5041 = vpack.c.bf16 %v4889, %v4885
    %v5042 = vpack.c.bf16 %v4894, %v4890
    %v5043 = vpack.c.bf16 %v4895, %v4891
    %v5044 = vpack.c.bf16 %v4896, %v4892
    %v5045 = vpack.c.bf16 %v4897, %v4893
    %v5046 = vpack.c.bf16 %v4902, %v4898
    %v5047 = vpack.c.bf16 %v4903, %v4899
    %v5048 = vpack.c.bf16 %v4904, %v4900
    %v5049 = vpack.c.bf16 %v4905, %v4901
    %v5050 = vpack.c.bf16 %v4910, %v4906
    %v5051 = vpack.c.bf16 %v4911, %v4907
    %v5052 = vpack.c.bf16 %v4912, %v4908
    %v5053 = vpack.c.bf16 %v4913, %v4909
    %v5054 = vpack.c.bf16 %v4918, %v4914
    %v5055 = vpack.c.bf16 %v4919, %v4915
    %v5056 = vpack.c.bf16 %v4920, %v4916
    %v5057 = vpack.c.bf16 %v4921, %v4917
    %v5058 = vpack.c.bf16 %v4926, %v4922
    %v5059 = vpack.c.bf16 %v4927, %v4923
    %v5060 = vpack.c.bf16 %v4928, %v4924
    %v5061 = vpack.c.bf16 %v4929, %v4925
    %v5062 = vpack.c.bf16 %v4934, %v4930
    %v5063 = vpack.c.bf16 %v4935, %v4931
    %v5064 = vpack.c.bf16 %v4936, %v4932
    %v5065 = vpack.c.bf16 %v4937, %v4933
    %v5066 = vld [vmem:[#allocation7] sm:$0xff]
    %v5067 = vld [vmem:[#allocation7 + $0x8] sm:$0xff]
    %v5068 = vld [vmem:[#allocation7 + $0x10] sm:$0xff]
    %v5069 = vld [vmem:[#allocation7 + $0x18] sm:$0xff]
    %v5070 = vld [vmem:[#allocation7 + $0x20] sm:$0xff]
    %v5071 = vld [vmem:[#allocation7 + $0x28] sm:$0xff]
    %v5072 = vld [vmem:[#allocation7 + $0x30] sm:$0xff]
    %v5073 = vld [vmem:[#allocation7 + $0x38] sm:$0xff]
    %v5074 = vld [vmem:[#allocation7 + $0x40] sm:$0xff]
    %v5075 = vld [vmem:[#allocation7 + $0x48] sm:$0xff]
    %v5076 = vld [vmem:[#allocation7 + $0x50] sm:$0xff]
    %v5077 = vld [vmem:[#allocation7 + $0x58] sm:$0xff]
    %v5078 = vld [vmem:[#allocation7 + $0x60] sm:$0xff]
    %v5079 = vld [vmem:[#allocation7 + $0x68] sm:$0xff]
    %v5080 = vld [vmem:[#allocation7 + $0x70] sm:$0xff]
    %v5081 = vld [vmem:[#allocation7 + $0x78] sm:$0xff]
    %v5082 = vld [vmem:[#allocation7 + $0x80] sm:$0xff]
    %v5083 = vld [vmem:[#allocation7 + $0x88] sm:$0xff]
    %v5084 = vld [vmem:[#allocation7 + $0x90] sm:$0xff]
    %v5085 = vld [vmem:[#allocation7 + $0x98] sm:$0xff]
    %v5086 = vld [vmem:[#allocation7 + $0xa0] sm:$0xff]
    %v5087 = vld [vmem:[#allocation7 + $0xa8] sm:$0xff]
    %v5088 = vld [vmem:[#allocation7 + $0xb0] sm:$0xff]
    %v5089 = vld [vmem:[#allocation7 + $0xb8] sm:$0xff]
    %v5090 = vld [vmem:[#allocation7 + $0xc0] sm:$0xff]
    %v5091 = vld [vmem:[#allocation7 + $0xc8] sm:$0xff]
    %v5092 = vld [vmem:[#allocation7 + $0xd0] sm:$0xff]
    %v5093 = vld [vmem:[#allocation7 + $0xd8] sm:$0xff]
    %v5094 = vld [vmem:[#allocation7 + $0xe0] sm:$0xff]
    %v5095 = vld [vmem:[#allocation7 + $0xe8] sm:$0xff]
    %v5096 = vld [vmem:[#allocation7 + $0xf0] sm:$0xff]
    %v5097 = vld [vmem:[#allocation7 + $0xf8] sm:$0xff]
    %v5098 = vld [vmem:[#allocation7 + $0x100] sm:$0xff]
    %v5099 = vld [vmem:[#allocation7 + $0x108] sm:$0xff]
    %v5100 = vld [vmem:[#allocation7 + $0x110] sm:$0xff]
    %v5101 = vld [vmem:[#allocation7 + $0x118] sm:$0xff]
    %v5102 = vld [vmem:[#allocation7 + $0x120] sm:$0xff]
    %v5103 = vld [vmem:[#allocation7 + $0x128] sm:$0xff]
    %v5104 = vld [vmem:[#allocation7 + $0x130] sm:$0xff]
    %v5105 = vld [vmem:[#allocation7 + $0x138] sm:$0xff]
    %v5106 = vld [vmem:[#allocation7 + $0x140] sm:$0xff]
    %v5107 = vld [vmem:[#allocation7 + $0x148] sm:$0xff]
    %v5108 = vld [vmem:[#allocation7 + $0x150] sm:$0xff]
    %v5109 = vld [vmem:[#allocation7 + $0x158] sm:$0xff]
    %v5110 = vld [vmem:[#allocation7 + $0x160] sm:$0xff]
    %v5111 = vld [vmem:[#allocation7 + $0x168] sm:$0xff]
    %v5112 = vld [vmem:[#allocation7 + $0x170] sm:$0xff]
    %v5113 = vld [vmem:[#allocation7 + $0x178] sm:$0xff]
    %v5114 = vld [vmem:[#allocation7 + $0x180] sm:$0xff]
    %v5115 = vld [vmem:[#allocation7 + $0x188] sm:$0xff]
    %v5116 = vld [vmem:[#allocation7 + $0x190] sm:$0xff]
    %v5117 = vld [vmem:[#allocation7 + $0x198] sm:$0xff]
    %v5118 = vld [vmem:[#allocation7 + $0x1a0] sm:$0xff]
    %v5119 = vld [vmem:[#allocation7 + $0x1a8] sm:$0xff]
    %v5120 = vld [vmem:[#allocation7 + $0x1b0] sm:$0xff]
    %v5121 = vld [vmem:[#allocation7 + $0x1b8] sm:$0xff]
    %v5122 = vld [vmem:[#allocation7 + $0x1c0] sm:$0xff]
    %v5123 = vld [vmem:[#allocation7 + $0x1c8] sm:$0xff]
    %v5124 = vld [vmem:[#allocation7 + $0x1d0] sm:$0xff]
    %v5125 = vld [vmem:[#allocation7 + $0x1d8] sm:$0xff]
    %v5126 = vld [vmem:[#allocation7 + $0x1e0] sm:$0xff]
    %v5127 = vld [vmem:[#allocation7 + $0x1e8] sm:$0xff]
    %v5128 = vld [vmem:[#allocation7 + $0x1f0] sm:$0xff]
    %v5129 = vld [vmem:[#allocation7 + $0x1f8] sm:$0xff]
    %v5130 = vld [vmem:[%s6] sm:$0xff]
    %v5131 = vld [vmem:[%s6 + $0x8] sm:$0xff]
    %v5132 = vld [vmem:[%s6 + $0x10] sm:$0xff]
    %v5133 = vld [vmem:[%s6 + $0x18] sm:$0xff]
    %v5134 = vld [vmem:[%s6 + $0x20] sm:$0xff]
    %v5135 = vld [vmem:[%s6 + $0x28] sm:$0xff]
    %v5136 = vld [vmem:[%s6 + $0x30] sm:$0xff]
    %v5137 = vld [vmem:[%s6 + $0x38] sm:$0xff]
    %v5138 = vld [vmem:[%s6 + $0x40] sm:$0xff]
    %v5139 = vld [vmem:[%s6 + $0x48] sm:$0xff]
    %v5140 = vld [vmem:[%s6 + $0x50] sm:$0xff]
    %v5141 = vld [vmem:[%s6 + $0x58] sm:$0xff]
    %v5142 = vld [vmem:[%s6 + $0x60] sm:$0xff]
    %v5143 = vld [vmem:[%s6 + $0x68] sm:$0xff]
    %v5144 = vld [vmem:[%s6 + $0x70] sm:$0xff]
    %v5145 = vld [vmem:[%s6 + $0x78] sm:$0xff]
    %v5146 = vld [vmem:[%s6 + $0x80] sm:$0xff]
    %v5147 = vld [vmem:[%s6 + $0x88] sm:$0xff]
    %v5148 = vld [vmem:[%s6 + $0x90] sm:$0xff]
    %v5149 = vld [vmem:[%s6 + $0x98] sm:$0xff]
    %v5150 = vld [vmem:[%s6 + $0xa0] sm:$0xff]
    %v5151 = vld [vmem:[%s6 + $0xa8] sm:$0xff]
    %v5152 = vld [vmem:[%s6 + $0xb0] sm:$0xff]
    %v5153 = vld [vmem:[%s6 + $0xb8] sm:$0xff]
    %v5154 = vld [vmem:[%s6 + $0xc0] sm:$0xff]
    %v5155 = vld [vmem:[%s6 + $0xc8] sm:$0xff]
    %v5156 = vld [vmem:[%s6 + $0xd0] sm:$0xff]
    %v5157 = vld [vmem:[%s6 + $0xd8] sm:$0xff]
    %v5158 = vld [vmem:[%s6 + $0xe0] sm:$0xff]
    %v5159 = vld [vmem:[%s6 + $0xe8] sm:$0xff]
    %v5160 = vld [vmem:[%s6 + $0xf0] sm:$0xff]
    %v5161 = vld [vmem:[%s6 + $0xf8] sm:$0xff]
    %5163 = vset.pattern.permute.xlu0 0
    %5164 = vperm.xlu0 %5163, %v5130
    %v5165 = vpop.permute.xlu0 %5164
    %5168 = vset.pattern.permute.xlu0 0
    %5169 = vperm.xlu0 %5168, %v5131
    %v5170 = vpop.permute.xlu0 %5169
    %5173 = vset.pattern.permute.xlu0 0
    %5174 = vperm.xlu0 %5173, %v5132
    %v5175 = vpop.permute.xlu0 %5174
    %5178 = vset.pattern.permute.xlu0 0
    %5179 = vperm.xlu0 %5178, %v5133
    %v5180 = vpop.permute.xlu0 %5179
    %5183 = vset.pattern.permute.xlu0 0
    %5184 = vperm.xlu0 %5183, %v5134
    %v5185 = vpop.permute.xlu0 %5184
    %5188 = vset.pattern.permute.xlu0 0
    %5189 = vperm.xlu0 %5188, %v5135
    %v5190 = vpop.permute.xlu0 %5189
    %5193 = vset.pattern.permute.xlu0 0
    %5194 = vperm.xlu0 %5193, %v5136
    %v5195 = vpop.permute.xlu0 %5194
    %5198 = vset.pattern.permute.xlu0 0
    %5199 = vperm.xlu0 %5198, %v5137
    %v5200 = vpop.permute.xlu0 %5199
    %5203 = vset.pattern.permute.xlu0 0
    %5204 = vperm.xlu0 %5203, %v5138
    %v5205 = vpop.permute.xlu0 %5204
    %5208 = vset.pattern.permute.xlu0 0
    %5209 = vperm.xlu0 %5208, %v5139
    %v5210 = vpop.permute.xlu0 %5209
    %5213 = vset.pattern.permute.xlu0 0
    %5214 = vperm.xlu0 %5213, %v5140
    %v5215 = vpop.permute.xlu0 %5214
    %5218 = vset.pattern.permute.xlu0 0
    %5219 = vperm.xlu0 %5218, %v5141
    %v5220 = vpop.permute.xlu0 %5219
    %5223 = vset.pattern.permute.xlu0 0
    %5224 = vperm.xlu0 %5223, %v5142
    %v5225 = vpop.permute.xlu0 %5224
    %5228 = vset.pattern.permute.xlu0 0
    %5229 = vperm.xlu0 %5228, %v5143
    %v5230 = vpop.permute.xlu0 %5229
    %5233 = vset.pattern.permute.xlu0 0
    %5234 = vperm.xlu0 %5233, %v5144
    %v5235 = vpop.permute.xlu0 %5234
    %5238 = vset.pattern.permute.xlu0 0
    %5239 = vperm.xlu0 %5238, %v5145
    %v5240 = vpop.permute.xlu0 %5239
    %5243 = vset.pattern.permute.xlu0 0
    %5244 = vperm.xlu0 %5243, %v5146
    %v5245 = vpop.permute.xlu0 %5244
    %5248 = vset.pattern.permute.xlu0 0
    %5249 = vperm.xlu0 %5248, %v5147
    %v5250 = vpop.permute.xlu0 %5249
    %5253 = vset.pattern.permute.xlu0 0
    %5254 = vperm.xlu0 %5253, %v5148
    %v5255 = vpop.permute.xlu0 %5254
    %5258 = vset.pattern.permute.xlu0 0
    %5259 = vperm.xlu0 %5258, %v5149
    %v5260 = vpop.permute.xlu0 %5259
    %5263 = vset.pattern.permute.xlu0 0
    %5264 = vperm.xlu0 %5263, %v5150
    %v5265 = vpop.permute.xlu0 %5264
    %5268 = vset.pattern.permute.xlu0 0
    %5269 = vperm.xlu0 %5268, %v5151
    %v5270 = vpop.permute.xlu0 %5269
    %5273 = vset.pattern.permute.xlu0 0
    %5274 = vperm.xlu0 %5273, %v5152
    %v5275 = vpop.permute.xlu0 %5274
    %5278 = vset.pattern.permute.xlu0 0
    %5279 = vperm.xlu0 %5278, %v5153
    %v5280 = vpop.permute.xlu0 %5279
    %5283 = vset.pattern.permute.xlu0 0
    %5284 = vperm.xlu0 %5283, %v5154
    %v5285 = vpop.permute.xlu0 %5284
    %5288 = vset.pattern.permute.xlu0 0
    %5289 = vperm.xlu0 %5288, %v5155
    %v5290 = vpop.permute.xlu0 %5289
    %5293 = vset.pattern.permute.xlu0 0
    %5294 = vperm.xlu0 %5293, %v5156
    %v5295 = vpop.permute.xlu0 %5294
    %5298 = vset.pattern.permute.xlu0 0
    %5299 = vperm.xlu0 %5298, %v5157
    %v5300 = vpop.permute.xlu0 %5299
    %5303 = vset.pattern.permute.xlu0 0
    %5304 = vperm.xlu0 %5303, %v5158
    %v5305 = vpop.permute.xlu0 %5304
    %5308 = vset.pattern.permute.xlu0 0
    %5309 = vperm.xlu0 %5308, %v5159
    %v5310 = vpop.permute.xlu0 %5309
    %5313 = vset.pattern.permute.xlu0 0
    %5314 = vperm.xlu0 %5313, %v5160
    %v5315 = vpop.permute.xlu0 %5314
    %5318 = vset.pattern.permute.xlu0 0
    %5319 = vperm.xlu0 %5318, %v5161
    %v5320 = vpop.permute.xlu0 %5319
    %v5386 = vunpack.c.l.b16 %v5066
    %v5387 = vunpack.c.h.b16 %v5066
    %v5388 = vunpack.c.l.b16 %v5067
    %v5389 = vunpack.c.h.b16 %v5067
    %v5390 = vunpack.c.l.b16 %v5068
    %v5391 = vunpack.c.h.b16 %v5068
    %v5392 = vunpack.c.l.b16 %v5069
    %v5393 = vunpack.c.h.b16 %v5069
    %v5394 = vunpack.c.l.b16 %v5070
    %v5395 = vunpack.c.h.b16 %v5070
    %v5396 = vunpack.c.l.b16 %v5071
    %v5397 = vunpack.c.h.b16 %v5071
    %v5398 = vunpack.c.l.b16 %v5072
    %v5399 = vunpack.c.h.b16 %v5072
    %v5400 = vunpack.c.l.b16 %v5073
    %v5401 = vunpack.c.h.b16 %v5073
    %v5402 = vunpack.c.l.b16 %v5074
    %v5403 = vunpack.c.h.b16 %v5074
    %v5404 = vunpack.c.l.b16 %v5075
    %v5405 = vunpack.c.h.b16 %v5075
    %v5406 = vunpack.c.l.b16 %v5076
    %v5407 = vunpack.c.h.b16 %v5076
    %v5408 = vunpack.c.l.b16 %v5077
    %v5409 = vunpack.c.h.b16 %v5077
    %v5410 = vunpack.c.l.b16 %v5078
    %v5411 = vunpack.c.h.b16 %v5078
    %v5412 = vunpack.c.l.b16 %v5079
    %v5413 = vunpack.c.h.b16 %v5079
    %v5414 = vunpack.c.l.b16 %v5080
    %v5415 = vunpack.c.h.b16 %v5080
    %v5416 = vunpack.c.l.b16 %v5081
    %v5417 = vunpack.c.h.b16 %v5081
    %v5418 = vunpack.c.l.b16 %v5082
    %v5419 = vunpack.c.h.b16 %v5082
    %v5420 = vunpack.c.l.b16 %v5083
    %v5421 = vunpack.c.h.b16 %v5083
    %v5422 = vunpack.c.l.b16 %v5084
    %v5423 = vunpack.c.h.b16 %v5084
    %v5424 = vunpack.c.l.b16 %v5085
    %v5425 = vunpack.c.h.b16 %v5085
    %v5426 = vunpack.c.l.b16 %v5086
    %v5427 = vunpack.c.h.b16 %v5086
    %v5428 = vunpack.c.l.b16 %v5087
    %v5429 = vunpack.c.h.b16 %v5087
    %v5430 = vunpack.c.l.b16 %v5088
    %v5431 = vunpack.c.h.b16 %v5088
    %v5432 = vunpack.c.l.b16 %v5089
    %v5433 = vunpack.c.h.b16 %v5089
    %v5434 = vunpack.c.l.b16 %v5090
    %v5435 = vunpack.c.h.b16 %v5090
    %v5436 = vunpack.c.l.b16 %v5091
    %v5437 = vunpack.c.h.b16 %v5091
    %v5438 = vunpack.c.l.b16 %v5092
    %v5439 = vunpack.c.h.b16 %v5092
    %v5440 = vunpack.c.l.b16 %v5093
    %v5441 = vunpack.c.h.b16 %v5093
    %v5442 = vunpack.c.l.b16 %v5094
    %v5443 = vunpack.c.h.b16 %v5094
    %v5444 = vunpack.c.l.b16 %v5095
    %v5445 = vunpack.c.h.b16 %v5095
    %v5446 = vunpack.c.l.b16 %v5096
    %v5447 = vunpack.c.h.b16 %v5096
    %v5448 = vunpack.c.l.b16 %v5097
    %v5449 = vunpack.c.h.b16 %v5097
    %v5450 = vunpack.c.l.b16 %v5098
    %v5451 = vunpack.c.h.b16 %v5098
    %v5452 = vunpack.c.l.b16 %v5099
    %v5453 = vunpack.c.h.b16 %v5099
    %v5454 = vunpack.c.l.b16 %v5100
    %v5455 = vunpack.c.h.b16 %v5100
    %v5456 = vunpack.c.l.b16 %v5101
    %v5457 = vunpack.c.h.b16 %v5101
    %v5458 = vunpack.c.l.b16 %v5102
    %v5459 = vunpack.c.h.b16 %v5102
    %v5460 = vunpack.c.l.b16 %v5103
    %v5461 = vunpack.c.h.b16 %v5103
    %v5462 = vunpack.c.l.b16 %v5104
    %v5463 = vunpack.c.h.b16 %v5104
    %v5464 = vunpack.c.l.b16 %v5105
    %v5465 = vunpack.c.h.b16 %v5105
    %v5466 = vunpack.c.l.b16 %v5106
    %v5467 = vunpack.c.h.b16 %v5106
    %v5468 = vunpack.c.l.b16 %v5107
    %v5469 = vunpack.c.h.b16 %v5107
    %v5470 = vunpack.c.l.b16 %v5108
    %v5471 = vunpack.c.h.b16 %v5108
    %v5472 = vunpack.c.l.b16 %v5109
    %v5473 = vunpack.c.h.b16 %v5109
    %v5474 = vunpack.c.l.b16 %v5110
    %v5475 = vunpack.c.h.b16 %v5110
    %v5476 = vunpack.c.l.b16 %v5111
    %v5477 = vunpack.c.h.b16 %v5111
    %v5478 = vunpack.c.l.b16 %v5112
    %v5479 = vunpack.c.h.b16 %v5112
    %v5480 = vunpack.c.l.b16 %v5113
    %v5481 = vunpack.c.h.b16 %v5113
    %v5482 = vunpack.c.l.b16 %v5114
    %v5483 = vunpack.c.h.b16 %v5114
    %v5484 = vunpack.c.l.b16 %v5115
    %v5485 = vunpack.c.h.b16 %v5115
    %v5486 = vunpack.c.l.b16 %v5116
    %v5487 = vunpack.c.h.b16 %v5116
    %v5488 = vunpack.c.l.b16 %v5117
    %v5489 = vunpack.c.h.b16 %v5117
    %v5490 = vunpack.c.l.b16 %v5118
    %v5491 = vunpack.c.h.b16 %v5118
    %v5492 = vunpack.c.l.b16 %v5119
    %v5493 = vunpack.c.h.b16 %v5119
    %v5494 = vunpack.c.l.b16 %v5120
    %v5495 = vunpack.c.h.b16 %v5120
    %v5496 = vunpack.c.l.b16 %v5121
    %v5497 = vunpack.c.h.b16 %v5121
    %v5498 = vunpack.c.l.b16 %v5122
    %v5499 = vunpack.c.h.b16 %v5122
    %v5500 = vunpack.c.l.b16 %v5123
    %v5501 = vunpack.c.h.b16 %v5123
    %v5502 = vunpack.c.l.b16 %v5124
    %v5503 = vunpack.c.h.b16 %v5124
    %v5504 = vunpack.c.l.b16 %v5125
    %v5505 = vunpack.c.h.b16 %v5125
    %v5506 = vunpack.c.l.b16 %v5126
    %v5507 = vunpack.c.h.b16 %v5126
    %v5508 = vunpack.c.l.b16 %v5127
    %v5509 = vunpack.c.h.b16 %v5127
    %v5510 = vunpack.c.l.b16 %v5128
    %v5511 = vunpack.c.h.b16 %v5128
    %v5512 = vunpack.c.l.b16 %v5129
    %v5513 = vunpack.c.h.b16 %v5129
    %v5514 = vpack.c.b16 %v5390, %v5386
    %v5515 = vpack.c.b16 %v5391, %v5387
    %v5516 = vpack.c.b16 %v5392, %v5388
    %v5517 = vpack.c.b16 %v5393, %v5389
    %v5518 = vpack.c.b16 %v5398, %v5394
    %v5519 = vpack.c.b16 %v5399, %v5395
    %v5520 = vpack.c.b16 %v5400, %v5396
    %v5521 = vpack.c.b16 %v5401, %v5397
    %v5522 = vpack.c.b16 %v5406, %v5402
    %v5523 = vpack.c.b16 %v5407, %v5403
    %v5524 = vpack.c.b16 %v5408, %v5404
    %v5525 = vpack.c.b16 %v5409, %v5405
    %v5526 = vpack.c.b16 %v5414, %v5410
    %v5527 = vpack.c.b16 %v5415, %v5411
    %v5528 = vpack.c.b16 %v5416, %v5412
    %v5529 = vpack.c.b16 %v5417, %v5413
    %v5530 = vpack.c.b16 %v5422, %v5418
    %v5531 = vpack.c.b16 %v5423, %v5419
    %v5532 = vpack.c.b16 %v5424, %v5420
    %v5533 = vpack.c.b16 %v5425, %v5421
    %v5534 = vpack.c.b16 %v5430, %v5426
    %v5535 = vpack.c.b16 %v5431, %v5427
    %v5536 = vpack.c.b16 %v5432, %v5428
    %v5537 = vpack.c.b16 %v5433, %v5429
    %v5538 = vpack.c.b16 %v5438, %v5434
    %v5539 = vpack.c.b16 %v5439, %v5435
    %v5540 = vpack.c.b16 %v5440, %v5436
    %v5541 = vpack.c.b16 %v5441, %v5437
    %v5542 = vpack.c.b16 %v5446, %v5442
    %v5543 = vpack.c.b16 %v5447, %v5443
    %v5544 = vpack.c.b16 %v5448, %v5444
    %v5545 = vpack.c.b16 %v5449, %v5445
    %v5546 = vpack.c.b16 %v5454, %v5450
    %v5547 = vpack.c.b16 %v5455, %v5451
    %v5548 = vpack.c.b16 %v5456, %v5452
    %v5549 = vpack.c.b16 %v5457, %v5453
    %v5550 = vpack.c.b16 %v5462, %v5458
    %v5551 = vpack.c.b16 %v5463, %v5459
    %v5552 = vpack.c.b16 %v5464, %v5460
    %v5553 = vpack.c.b16 %v5465, %v5461
    %v5554 = vpack.c.b16 %v5470, %v5466
    %v5555 = vpack.c.b16 %v5471, %v5467
    %v5556 = vpack.c.b16 %v5472, %v5468
    %v5557 = vpack.c.b16 %v5473, %v5469
    %v5558 = vpack.c.b16 %v5478, %v5474
    %v5559 = vpack.c.b16 %v5479, %v5475
    %v5560 = vpack.c.b16 %v5480, %v5476
    %v5561 = vpack.c.b16 %v5481, %v5477
    %v5562 = vpack.c.b16 %v5486, %v5482
    %v5563 = vpack.c.b16 %v5487, %v5483
    %v5564 = vpack.c.b16 %v5488, %v5484
    %v5565 = vpack.c.b16 %v5489, %v5485
    %v5566 = vpack.c.b16 %v5494, %v5490
    %v5567 = vpack.c.b16 %v5495, %v5491
    %v5568 = vpack.c.b16 %v5496, %v5492
    %v5569 = vpack.c.b16 %v5497, %v5493
    %v5570 = vpack.c.b16 %v5502, %v5498
    %v5571 = vpack.c.b16 %v5503, %v5499
    %v5572 = vpack.c.b16 %v5504, %v5500
    %v5573 = vpack.c.b16 %v5505, %v5501
    %v5574 = vpack.c.b16 %v5510, %v5506
    %v5575 = vpack.c.b16 %v5511, %v5507
    %v5576 = vpack.c.b16 %v5512, %v5508
    %v5577 = vpack.c.b16 %v5513, %v5509
    %5642 = vmatprep.subr.bf16.mxu0 %v4967
    %5643 = vmatpush1.bf16.msra.mxu0 %v4966
    %5644 = vmatprep.subr.bf16.mxu0 %v4963
    %5645 = vmatpush1.bf16.msra.mxu0 %v4962
    %5646 = vmatprep.subr.bf16.mxu0 %v4959
    %5647 = vmatpush1.bf16.msra.mxu0 %v4958
    %5648 = vmatprep.subr.bf16.mxu0 %v4955
    %5649 = vmatpush1.bf16.msra.mxu0 %v4954
    %5650 = vmatprep.subr.bf16.mxu0 %v4951
    %5651 = vmatpush1.bf16.msra.mxu0 %v4950
    %5652 = vmatprep.subr.bf16.mxu0 %v4947
    %5653 = vmatpush1.bf16.msra.mxu0 %v4946
    %5654 = vmatprep.subr.bf16.mxu0 %v4943
    %5655 = vmatpush1.bf16.msra.mxu0 %v4942
    %5656 = vmatprep.subr.bf16.mxu0 %v4939
    %5657 = vmatpush1.bf16.msra.mxu0 %v4938
    %5658 = vmatprep.subr.bf16.mxu0 %v4999
    %5659 = vmatpush2.bf16.msra.mxu0 %v4998
    %5660 = vmatprep.subr.bf16.mxu0 %v4995
    %5661 = vmatpush2.bf16.msra.mxu0 %v4994
    %5662 = vmatprep.subr.bf16.mxu0 %v4991
    %5663 = vmatpush2.bf16.msra.mxu0 %v4990
    %5664 = vmatprep.subr.bf16.mxu0 %v4987
    %5665 = vmatpush2.bf16.msra.mxu0 %v4986
    %5666 = vmatprep.subr.bf16.mxu0 %v4983
    %5667 = vmatpush2.bf16.msra.mxu0 %v4982
    %5668 = vmatprep.subr.bf16.mxu0 %v4979
    %5669 = vmatpush2.bf16.msra.mxu0 %v4978
    %5670 = vmatprep.subr.bf16.mxu0 %v4975
    %5671 = vmatpush2.bf16.msra.mxu0 %v4974
    %5672 = vmatprep.subr.bf16.mxu0 %v4971
    %5673 = vmatpush2.bf16.msra.mxu0 %v4970
    %5674 = vmatprep.mubr.bf16.mxu0 %v5515
    %5675 = vmatmul.mubr.bf16.gmra.mxu0 %v5514
    %v5676 = vpop.f32.mrf.mxu0
    %v5677 = vadd.f32 %v5165, %v5676
    %v5678 = vpop.f32.mrf.mxu0
    %v5679 = vadd.f32 %v5165, %v5678
    %v5680 = vpop.f32.mrf.mxu0
    %v5681 = vadd.f32 %v5170, %v5680
    %v5682 = vpop.f32.mrf.mxu0
    %v5683 = vadd.f32 %v5170, %v5682
    %5684 = vmatprep.mubr.bf16.mxu0 %v5519
    %5685 = vmatmul.mubr.bf16.gmra.mxu0 %v5518
    %v5686 = vpop.f32.mrf.mxu0
    %v5687 = vadd.f32 %v5175, %v5686
    %v5688 = vpop.f32.mrf.mxu0
    %v5689 = vadd.f32 %v5175, %v5688
    %v5690 = vpop.f32.mrf.mxu0
    %v5691 = vadd.f32 %v5180, %v5690
    %v5692 = vpop.f32.mrf.mxu0
    %v5693 = vadd.f32 %v5180, %v5692
    %5694 = vmatprep.mubr.bf16.mxu0 %v5523
    %5695 = vmatmul.mubr.bf16.gmra.mxu0 %v5522
    %v5696 = vpop.f32.mrf.mxu0
    %v5697 = vadd.f32 %v5185, %v5696
    %v5698 = vpop.f32.mrf.mxu0
    %v5699 = vadd.f32 %v5185, %v5698
    %v5700 = vpop.f32.mrf.mxu0
    %v5701 = vadd.f32 %v5190, %v5700
    %v5702 = vpop.f32.mrf.mxu0
    %v5703 = vadd.f32 %v5190, %v5702
    %5704 = vmatprep.mubr.bf16.mxu0 %v5527
    %5705 = vmatmul.mubr.bf16.gmra.mxu0 %v5526
    %v5706 = vpop.f32.mrf.mxu0
    %v5707 = vadd.f32 %v5195, %v5706
    %v5708 = vpop.f32.mrf.mxu0
    %v5709 = vadd.f32 %v5195, %v5708
    %v5710 = vpop.f32.mrf.mxu0
    %v5711 = vadd.f32 %v5200, %v5710
    %v5712 = vpop.f32.mrf.mxu0
    %v5713 = vadd.f32 %v5200, %v5712
    %5714 = vmatprep.mubr.bf16.mxu0 %v5531
    %5715 = vmatmul.mubr.bf16.gmra.mxu0 %v5530
    %v5716 = vpop.f32.mrf.mxu0
    %v5717 = vadd.f32 %v5205, %v5716
    %v5718 = vpop.f32.mrf.mxu0
    %v5719 = vadd.f32 %v5205, %v5718
    %v5720 = vpop.f32.mrf.mxu0
    %v5721 = vadd.f32 %v5210, %v5720
    %v5722 = vpop.f32.mrf.mxu0
    %v5723 = vadd.f32 %v5210, %v5722
    %5724 = vmatprep.mubr.bf16.mxu0 %v5535
    %5725 = vmatmul.mubr.bf16.gmra.mxu0 %v5534
    %v5726 = vpop.f32.mrf.mxu0
    %v5727 = vadd.f32 %v5215, %v5726
    %v5728 = vpop.f32.mrf.mxu0
    %v5729 = vadd.f32 %v5215, %v5728
    %v5730 = vpop.f32.mrf.mxu0
    %v5731 = vadd.f32 %v5220, %v5730
    %v5732 = vpop.f32.mrf.mxu0
    %v5733 = vadd.f32 %v5220, %v5732
    %5734 = vmatprep.mubr.bf16.mxu0 %v5539
    %5735 = vmatmul.mubr.bf16.gmra.mxu0 %v5538
    %v5736 = vpop.f32.mrf.mxu0
    %v5737 = vadd.f32 %v5225, %v5736
    %v5738 = vpop.f32.mrf.mxu0
    %v5739 = vadd.f32 %v5225, %v5738
    %v5740 = vpop.f32.mrf.mxu0
    %v5741 = vadd.f32 %v5230, %v5740
    %v5742 = vpop.f32.mrf.mxu0
    %v5743 = vadd.f32 %v5230, %v5742
    %5744 = vmatprep.mubr.bf16.mxu0 %v5543
    %5745 = vmatmul.mubr.bf16.gmra.mxu0 %v5542
    %v5746 = vpop.f32.mrf.mxu0
    %v5747 = vadd.f32 %v5235, %v5746
    %v5748 = vpop.f32.mrf.mxu0
    %v5749 = vadd.f32 %v5235, %v5748
    %v5750 = vpop.f32.mrf.mxu0
    %v5751 = vadd.f32 %v5240, %v5750
    %v5752 = vpop.f32.mrf.mxu0
    %v5753 = vadd.f32 %v5240, %v5752
    %5754 = vmatprep.mubr.bf16.mxu0 %v5547
    %5755 = vmatmul.mubr.bf16.gmra.mxu0 %v5546
    %v5756 = vpop.f32.mrf.mxu0
    %v5757 = vadd.f32 %v5245, %v5756
    %v5758 = vpop.f32.mrf.mxu0
    %v5759 = vadd.f32 %v5245, %v5758
    %v5760 = vpop.f32.mrf.mxu0
    %v5761 = vadd.f32 %v5250, %v5760
    %v5762 = vpop.f32.mrf.mxu0
    %v5763 = vadd.f32 %v5250, %v5762
    %5764 = vmatprep.mubr.bf16.mxu0 %v5551
    %5765 = vmatmul.mubr.bf16.gmra.mxu0 %v5550
    %v5766 = vpop.f32.mrf.mxu0
    %v5767 = vadd.f32 %v5255, %v5766
    %v5768 = vpop.f32.mrf.mxu0
    %v5769 = vadd.f32 %v5255, %v5768
    %v5770 = vpop.f32.mrf.mxu0
    %v5771 = vadd.f32 %v5260, %v5770
    %v5772 = vpop.f32.mrf.mxu0
    %v5773 = vadd.f32 %v5260, %v5772
    %5774 = vmatprep.mubr.bf16.mxu0 %v5555
    %5775 = vmatmul.mubr.bf16.gmra.mxu0 %v5554
    %v5776 = vpop.f32.mrf.mxu0
    %v5777 = vadd.f32 %v5265, %v5776
    %v5778 = vpop.f32.mrf.mxu0
    %v5779 = vadd.f32 %v5265, %v5778
    %v5780 = vpop.f32.mrf.mxu0
    %v5781 = vadd.f32 %v5270, %v5780
    %v5782 = vpop.f32.mrf.mxu0
    %v5783 = vadd.f32 %v5270, %v5782
    %5784 = vmatprep.mubr.bf16.mxu0 %v5559
    %5785 = vmatmul.mubr.bf16.gmra.mxu0 %v5558
    %v5786 = vpop.f32.mrf.mxu0
    %v5787 = vadd.f32 %v5275, %v5786
    %v5788 = vpop.f32.mrf.mxu0
    %v5789 = vadd.f32 %v5275, %v5788
    %v5790 = vpop.f32.mrf.mxu0
    %v5791 = vadd.f32 %v5280, %v5790
    %v5792 = vpop.f32.mrf.mxu0
    %v5793 = vadd.f32 %v5280, %v5792
    %5794 = vmatprep.mubr.bf16.mxu0 %v5563
    %5795 = vmatmul.mubr.bf16.gmra.mxu0 %v5562
    %v5796 = vpop.f32.mrf.mxu0
    %v5797 = vadd.f32 %v5285, %v5796
    %v5798 = vpop.f32.mrf.mxu0
    %v5799 = vadd.f32 %v5285, %v5798
    %v5800 = vpop.f32.mrf.mxu0
    %v5801 = vadd.f32 %v5290, %v5800
    %v5802 = vpop.f32.mrf.mxu0
    %v5803 = vadd.f32 %v5290, %v5802
    %5804 = vmatprep.mubr.bf16.mxu0 %v5567
    %5805 = vmatmul.mubr.bf16.gmra.mxu0 %v5566
    %v5806 = vpop.f32.mrf.mxu0
    %v5807 = vadd.f32 %v5295, %v5806
    %v5808 = vpop.f32.mrf.mxu0
    %v5809 = vadd.f32 %v5295, %v5808
    %v5810 = vpop.f32.mrf.mxu0
    %v5811 = vadd.f32 %v5300, %v5810
    %v5812 = vpop.f32.mrf.mxu0
    %v5813 = vadd.f32 %v5300, %v5812
    %5814 = vmatprep.mubr.bf16.mxu0 %v5571
    %5815 = vmatmul.mubr.bf16.gmra.mxu0 %v5570
    %v5816 = vpop.f32.mrf.mxu0
    %v5817 = vadd.f32 %v5305, %v5816
    %v5818 = vpop.f32.mrf.mxu0
    %v5819 = vadd.f32 %v5305, %v5818
    %v5820 = vpop.f32.mrf.mxu0
    %v5821 = vadd.f32 %v5310, %v5820
    %v5822 = vpop.f32.mrf.mxu0
    %v5823 = vadd.f32 %v5310, %v5822
    %5824 = vmatprep.mubr.bf16.mxu0 %v5575
    %5825 = vmatmul.mubr.bf16.gmra.mxu0 %v5574
    %v5826 = vpop.f32.mrf.mxu0
    %v5827 = vadd.f32 %v5315, %v5826
    %v5828 = vpop.f32.mrf.mxu0
    %v5829 = vadd.f32 %v5315, %v5828
    %v5830 = vpop.f32.mrf.mxu0
    %v5831 = vadd.f32 %v5320, %v5830
    %v5832 = vpop.f32.mrf.mxu0
    %v5833 = vadd.f32 %v5320, %v5832
    %5834 = vdwg.mxu0
    %5835 = vmatprep.subr.bf16.mxu0 %v5031
    %5836 = vmatpush1.bf16.msra.mxu0 %v5030
    %5837 = vmatprep.subr.bf16.mxu0 %v5027
    %5838 = vmatpush1.bf16.msra.mxu0 %v5026
    %5839 = vmatprep.subr.bf16.mxu0 %v5023
    %5840 = vmatpush1.bf16.msra.mxu0 %v5022
    %5841 = vmatprep.subr.bf16.mxu0 %v5019
    %5842 = vmatpush1.bf16.msra.mxu0 %v5018
    %5843 = vmatprep.subr.bf16.mxu0 %v5015
    %5844 = vmatpush1.bf16.msra.mxu0 %v5014
    %5845 = vmatprep.subr.bf16.mxu0 %v5011
    %5846 = vmatpush1.bf16.msra.mxu0 %v5010
    %5847 = vmatprep.subr.bf16.mxu0 %v5007
    %5848 = vmatpush1.bf16.msra.mxu0 %v5006
    %5849 = vmatprep.subr.bf16.mxu0 %v5003
    %5850 = vmatpush1.bf16.msra.mxu0 %v5002
    %5851 = vmatprep.subr.bf16.mxu0 %v5063
    %5852 = vmatpush2.bf16.msra.mxu0 %v5062
    %5853 = vmatprep.subr.bf16.mxu0 %v5059
    %5854 = vmatpush2.bf16.msra.mxu0 %v5058
    %5855 = vmatprep.subr.bf16.mxu0 %v5055
    %5856 = vmatpush2.bf16.msra.mxu0 %v5054
    %5857 = vmatprep.subr.bf16.mxu0 %v5051
    %5858 = vmatpush2.bf16.msra.mxu0 %v5050
    %5859 = vmatprep.subr.bf16.mxu0 %v5047
    %5860 = vmatpush2.bf16.msra.mxu0 %v5046
    %5861 = vmatprep.subr.bf16.mxu0 %v5043
    %5862 = vmatpush2.bf16.msra.mxu0 %v5042
    %5863 = vmatprep.subr.bf16.mxu0 %v5039
    %5864 = vmatpush2.bf16.msra.mxu0 %v5038
    %5865 = vmatprep.subr.bf16.mxu0 %v5035
    %5866 = vmatpush2.bf16.msra.mxu0 %v5034
    %5867 = vmatprep.mubr.bf16.mxu0 %v5517
    %5868 = vmatmul.mubr.bf16.gmra.mxu0 %v5516
    %v5869 = vpop.f32.mrf.mxu0
    %v5870 = vadd.f32 %v5677, %v5869
    %v5871 = vpop.f32.mrf.mxu0
    %v5872 = vadd.f32 %v5679, %v5871
    %v5873 = vpop.f32.mrf.mxu0
    %v5874 = vadd.f32 %v5681, %v5873
    %v5875 = vpop.f32.mrf.mxu0
    %v5876 = vadd.f32 %v5683, %v5875
    %5877 = vmatprep.mubr.bf16.mxu0 %v5521
    %5878 = vmatmul.mubr.bf16.gmra.mxu0 %v5520
    %v5879 = vpop.f32.mrf.mxu0
    %v5880 = vadd.f32 %v5687, %v5879
    %v5881 = vpop.f32.mrf.mxu0
    %v5882 = vadd.f32 %v5689, %v5881
    %v5883 = vpop.f32.mrf.mxu0
    %v5884 = vadd.f32 %v5691, %v5883
    %v5885 = vpop.f32.mrf.mxu0
    %v5886 = vadd.f32 %v5693, %v5885
    %5887 = vmatprep.mubr.bf16.mxu0 %v5525
    %5888 = vmatmul.mubr.bf16.gmra.mxu0 %v5524
    %v5889 = vpop.f32.mrf.mxu0
    %v5890 = vadd.f32 %v5697, %v5889
    %v5891 = vpop.f32.mrf.mxu0
    %v5892 = vadd.f32 %v5699, %v5891
    %v5893 = vpop.f32.mrf.mxu0
    %v5894 = vadd.f32 %v5701, %v5893
    %v5895 = vpop.f32.mrf.mxu0
    %v5896 = vadd.f32 %v5703, %v5895
    %5897 = vmatprep.mubr.bf16.mxu0 %v5529
    %5898 = vmatmul.mubr.bf16.gmra.mxu0 %v5528
    %v5899 = vpop.f32.mrf.mxu0
    %v5900 = vadd.f32 %v5707, %v5899
    %v5901 = vpop.f32.mrf.mxu0
    %v5902 = vadd.f32 %v5709, %v5901
    %v5903 = vpop.f32.mrf.mxu0
    %v5904 = vadd.f32 %v5711, %v5903
    %v5905 = vpop.f32.mrf.mxu0
    %v5906 = vadd.f32 %v5713, %v5905
    %5907 = vmatprep.mubr.bf16.mxu0 %v5533
    %5908 = vmatmul.mubr.bf16.gmra.mxu0 %v5532
    %v5909 = vpop.f32.mrf.mxu0
    %v5910 = vadd.f32 %v5717, %v5909
    %v5911 = vpop.f32.mrf.mxu0
    %v5912 = vadd.f32 %v5719, %v5911
    %v5913 = vpop.f32.mrf.mxu0
    %v5914 = vadd.f32 %v5721, %v5913
    %v5915 = vpop.f32.mrf.mxu0
    %v5916 = vadd.f32 %v5723, %v5915
    %5917 = vmatprep.mubr.bf16.mxu0 %v5537
    %5918 = vmatmul.mubr.bf16.gmra.mxu0 %v5536
    %v5919 = vpop.f32.mrf.mxu0
    %v5920 = vadd.f32 %v5727, %v5919
    %v5921 = vpop.f32.mrf.mxu0
    %v5922 = vadd.f32 %v5729, %v5921
    %v5923 = vpop.f32.mrf.mxu0
    %v5924 = vadd.f32 %v5731, %v5923
    %v5925 = vpop.f32.mrf.mxu0
    %v5926 = vadd.f32 %v5733, %v5925
    %5927 = vmatprep.mubr.bf16.mxu0 %v5541
    %5928 = vmatmul.mubr.bf16.gmra.mxu0 %v5540
    %v5929 = vpop.f32.mrf.mxu0
    %v5930 = vadd.f32 %v5737, %v5929
    %v5931 = vpop.f32.mrf.mxu0
    %v5932 = vadd.f32 %v5739, %v5931
    %v5933 = vpop.f32.mrf.mxu0
    %v5934 = vadd.f32 %v5741, %v5933
    %v5935 = vpop.f32.mrf.mxu0
    %v5936 = vadd.f32 %v5743, %v5935
    %5937 = vmatprep.mubr.bf16.mxu0 %v5545
    %5938 = vmatmul.mubr.bf16.gmra.mxu0 %v5544
    %v5939 = vpop.f32.mrf.mxu0
    %v5940 = vadd.f32 %v5747, %v5939
    %v5941 = vpop.f32.mrf.mxu0
    %v5942 = vadd.f32 %v5749, %v5941
    %v5943 = vpop.f32.mrf.mxu0
    %v5944 = vadd.f32 %v5751, %v5943
    %v5945 = vpop.f32.mrf.mxu0
    %v5946 = vadd.f32 %v5753, %v5945
    %5947 = vmatprep.mubr.bf16.mxu0 %v5549
    %5948 = vmatmul.mubr.bf16.gmra.mxu0 %v5548
    %v5949 = vpop.f32.mrf.mxu0
    %v5950 = vadd.f32 %v5757, %v5949
    %v5951 = vpop.f32.mrf.mxu0
    %v5952 = vadd.f32 %v5759, %v5951
    %v5953 = vpop.f32.mrf.mxu0
    %v5954 = vadd.f32 %v5761, %v5953
    %v5955 = vpop.f32.mrf.mxu0
    %v5956 = vadd.f32 %v5763, %v5955
    %5957 = vmatprep.mubr.bf16.mxu0 %v5553
    %5958 = vmatmul.mubr.bf16.gmra.mxu0 %v5552
    %v5959 = vpop.f32.mrf.mxu0
    %v5960 = vadd.f32 %v5767, %v5959
    %v5961 = vpop.f32.mrf.mxu0
    %v5962 = vadd.f32 %v5769, %v5961
    %v5963 = vpop.f32.mrf.mxu0
    %v5964 = vadd.f32 %v5771, %v5963
    %v5965 = vpop.f32.mrf.mxu0
    %v5966 = vadd.f32 %v5773, %v5965
    %5967 = vmatprep.mubr.bf16.mxu0 %v5557
    %5968 = vmatmul.mubr.bf16.gmra.mxu0 %v5556
    %v5969 = vpop.f32.mrf.mxu0
    %v5970 = vadd.f32 %v5777, %v5969
    %v5971 = vpop.f32.mrf.mxu0
    %v5972 = vadd.f32 %v5779, %v5971
    %v5973 = vpop.f32.mrf.mxu0
    %v5974 = vadd.f32 %v5781, %v5973
    %v5975 = vpop.f32.mrf.mxu0
    %v5976 = vadd.f32 %v5783, %v5975
    %5977 = vmatprep.mubr.bf16.mxu0 %v5561
    %5978 = vmatmul.mubr.bf16.gmra.mxu0 %v5560
    %v5979 = vpop.f32.mrf.mxu0
    %v5980 = vadd.f32 %v5787, %v5979
    %v5981 = vpop.f32.mrf.mxu0
    %v5982 = vadd.f32 %v5789, %v5981
    %v5983 = vpop.f32.mrf.mxu0
    %v5984 = vadd.f32 %v5791, %v5983
    %v5985 = vpop.f32.mrf.mxu0
    %v5986 = vadd.f32 %v5793, %v5985
    %5987 = vmatprep.mubr.bf16.mxu0 %v5565
    %5988 = vmatmul.mubr.bf16.gmra.mxu0 %v5564
    %v5989 = vpop.f32.mrf.mxu0
    %v5990 = vadd.f32 %v5797, %v5989
    %v5991 = vpop.f32.mrf.mxu0
    %v5992 = vadd.f32 %v5799, %v5991
    %v5993 = vpop.f32.mrf.mxu0
    %v5994 = vadd.f32 %v5801, %v5993
    %v5995 = vpop.f32.mrf.mxu0
    %v5996 = vadd.f32 %v5803, %v5995
    %5997 = vmatprep.mubr.bf16.mxu0 %v5569
    %5998 = vmatmul.mubr.bf16.gmra.mxu0 %v5568
    %v5999 = vpop.f32.mrf.mxu0
    %v6000 = vadd.f32 %v5807, %v5999
    %v6001 = vpop.f32.mrf.mxu0
    %v6002 = vadd.f32 %v5809, %v6001
    %v6003 = vpop.f32.mrf.mxu0
    %v6004 = vadd.f32 %v5811, %v6003
    %v6005 = vpop.f32.mrf.mxu0
    %v6006 = vadd.f32 %v5813, %v6005
    %6007 = vmatprep.mubr.bf16.mxu0 %v5573
    %6008 = vmatmul.mubr.bf16.gmra.mxu0 %v5572
    %v6009 = vpop.f32.mrf.mxu0
    %v6010 = vadd.f32 %v5817, %v6009
    %v6011 = vpop.f32.mrf.mxu0
    %v6012 = vadd.f32 %v5819, %v6011
    %v6013 = vpop.f32.mrf.mxu0
    %v6014 = vadd.f32 %v5821, %v6013
    %v6015 = vpop.f32.mrf.mxu0
    %v6016 = vadd.f32 %v5823, %v6015
    %6017 = vmatprep.mubr.bf16.mxu0 %v5577
    %6018 = vmatmul.mubr.bf16.gmra.mxu0 %v5576
    %v6019 = vpop.f32.mrf.mxu0
    %v6020 = vadd.f32 %v5827, %v6019
    %v6021 = vpop.f32.mrf.mxu0
    %v6022 = vadd.f32 %v5829, %v6021
    %v6023 = vpop.f32.mrf.mxu0
    %v6024 = vadd.f32 %v5831, %v6023
    %v6025 = vpop.f32.mrf.mxu0
    %v6026 = vadd.f32 %v5833, %v6025
    %6027 = vdwg.mxu0
    %6028 = vmatprep.subr.bf16.mxu0 %v4969
    %6029 = vmatpush1.bf16.msra.mxu0 %v4968
    %6030 = vmatprep.subr.bf16.mxu0 %v4965
    %6031 = vmatpush1.bf16.msra.mxu0 %v4964
    %6032 = vmatprep.subr.bf16.mxu0 %v4961
    %6033 = vmatpush1.bf16.msra.mxu0 %v4960
    %6034 = vmatprep.subr.bf16.mxu0 %v4957
    %6035 = vmatpush1.bf16.msra.mxu0 %v4956
    %6036 = vmatprep.subr.bf16.mxu0 %v4953
    %6037 = vmatpush1.bf16.msra.mxu0 %v4952
    %6038 = vmatprep.subr.bf16.mxu0 %v4949
    %6039 = vmatpush1.bf16.msra.mxu0 %v4948
    %6040 = vmatprep.subr.bf16.mxu0 %v4945
    %6041 = vmatpush1.bf16.msra.mxu0 %v4944
    %6042 = vmatprep.subr.bf16.mxu0 %v4941
    %6043 = vmatpush1.bf16.msra.mxu0 %v4940
    %6044 = vmatprep.subr.bf16.mxu0 %v5001
    %6045 = vmatpush2.bf16.msra.mxu0 %v5000
    %6046 = vmatprep.subr.bf16.mxu0 %v4997
    %6047 = vmatpush2.bf16.msra.mxu0 %v4996
    %6048 = vmatprep.subr.bf16.mxu0 %v4993
    %6049 = vmatpush2.bf16.msra.mxu0 %v4992
    %6050 = vmatprep.subr.bf16.mxu0 %v4989
    %6051 = vmatpush2.bf16.msra.mxu0 %v4988
    %6052 = vmatprep.subr.bf16.mxu0 %v4985
    %6053 = vmatpush2.bf16.msra.mxu0 %v4984
    %6054 = vmatprep.subr.bf16.mxu0 %v4981
    %6055 = vmatpush2.bf16.msra.mxu0 %v4980
    %6056 = vmatprep.subr.bf16.mxu0 %v4977
    %6057 = vmatpush2.bf16.msra.mxu0 %v4976
    %6058 = vmatprep.subr.bf16.mxu0 %v4973
    %6059 = vmatpush2.bf16.msra.mxu0 %v4972
    %6060 = vmatprep.mubr.bf16.mxu0 %v5515
    %6061 = vmatmul.mubr.bf16.gmra.mxu0 %v5514
    %v6062 = vpop.f32.mrf.mxu0
    %v6063 = vadd.f32 %v5165, %v6062
    %v6064 = vpop.f32.mrf.mxu0
    %v6065 = vadd.f32 %v5165, %v6064
    %v6066 = vpop.f32.mrf.mxu0
    %v6067 = vadd.f32 %v5170, %v6066
    %v6068 = vpop.f32.mrf.mxu0
    %v6069 = vadd.f32 %v5170, %v6068
    %6070 = vmatprep.mubr.bf16.mxu0 %v5519
    %6071 = vmatmul.mubr.bf16.gmra.mxu0 %v5518
    %v6072 = vpop.f32.mrf.mxu0
    %v6073 = vadd.f32 %v5175, %v6072
    %v6074 = vpop.f32.mrf.mxu0
    %v6075 = vadd.f32 %v5175, %v6074
    %v6076 = vpop.f32.mrf.mxu0
    %v6077 = vadd.f32 %v5180, %v6076
    %v6078 = vpop.f32.mrf.mxu0
    %v6079 = vadd.f32 %v5180, %v6078
    %6080 = vmatprep.mubr.bf16.mxu0 %v5523
    %6081 = vmatmul.mubr.bf16.gmra.mxu0 %v5522
    %v6082 = vpop.f32.mrf.mxu0
    %v6083 = vadd.f32 %v5185, %v6082
    %v6084 = vpop.f32.mrf.mxu0
    %v6085 = vadd.f32 %v5185, %v6084
    %v6086 = vpop.f32.mrf.mxu0
    %v6087 = vadd.f32 %v5190, %v6086
    %v6088 = vpop.f32.mrf.mxu0
    %v6089 = vadd.f32 %v5190, %v6088
    %6090 = vmatprep.mubr.bf16.mxu0 %v5527
    %6091 = vmatmul.mubr.bf16.gmra.mxu0 %v5526
    %v6092 = vpop.f32.mrf.mxu0
    %v6093 = vadd.f32 %v5195, %v6092
    %v6094 = vpop.f32.mrf.mxu0
    %v6095 = vadd.f32 %v5195, %v6094
    %v6096 = vpop.f32.mrf.mxu0
    %v6097 = vadd.f32 %v5200, %v6096
    %v6098 = vpop.f32.mrf.mxu0
    %v6099 = vadd.f32 %v5200, %v6098
    %6100 = vmatprep.mubr.bf16.mxu0 %v5531
    %6101 = vmatmul.mubr.bf16.gmra.mxu0 %v5530
    %v6102 = vpop.f32.mrf.mxu0
    %v6103 = vadd.f32 %v5205, %v6102
    %v6104 = vpop.f32.mrf.mxu0
    %v6105 = vadd.f32 %v5205, %v6104
    %v6106 = vpop.f32.mrf.mxu0
    %v6107 = vadd.f32 %v5210, %v6106
    %v6108 = vpop.f32.mrf.mxu0
    %v6109 = vadd.f32 %v5210, %v6108
    %6110 = vmatprep.mubr.bf16.mxu0 %v5535
    %6111 = vmatmul.mubr.bf16.gmra.mxu0 %v5534
    %v6112 = vpop.f32.mrf.mxu0
    %v6113 = vadd.f32 %v5215, %v6112
    %v6114 = vpop.f32.mrf.mxu0
    %v6115 = vadd.f32 %v5215, %v6114
    %v6116 = vpop.f32.mrf.mxu0
    %v6117 = vadd.f32 %v5220, %v6116
    %v6118 = vpop.f32.mrf.mxu0
    %v6119 = vadd.f32 %v5220, %v6118
    %6120 = vmatprep.mubr.bf16.mxu0 %v5539
    %6121 = vmatmul.mubr.bf16.gmra.mxu0 %v5538
    %v6122 = vpop.f32.mrf.mxu0
    %v6123 = vadd.f32 %v5225, %v6122
    %v6124 = vpop.f32.mrf.mxu0
    %v6125 = vadd.f32 %v5225, %v6124
    %v6126 = vpop.f32.mrf.mxu0
    %v6127 = vadd.f32 %v5230, %v6126
    %v6128 = vpop.f32.mrf.mxu0
    %v6129 = vadd.f32 %v5230, %v6128
    %6130 = vmatprep.mubr.bf16.mxu0 %v5543
    %6131 = vmatmul.mubr.bf16.gmra.mxu0 %v5542
    %v6132 = vpop.f32.mrf.mxu0
    %v6133 = vadd.f32 %v5235, %v6132
    %v6134 = vpop.f32.mrf.mxu0
    %v6135 = vadd.f32 %v5235, %v6134
    %v6136 = vpop.f32.mrf.mxu0
    %v6137 = vadd.f32 %v5240, %v6136
    %v6138 = vpop.f32.mrf.mxu0
    %v6139 = vadd.f32 %v5240, %v6138
    %6140 = vmatprep.mubr.bf16.mxu0 %v5547
    %6141 = vmatmul.mubr.bf16.gmra.mxu0 %v5546
    %v6142 = vpop.f32.mrf.mxu0
    %v6143 = vadd.f32 %v5245, %v6142
    %v6144 = vpop.f32.mrf.mxu0
    %v6145 = vadd.f32 %v5245, %v6144
    %v6146 = vpop.f32.mrf.mxu0
    %v6147 = vadd.f32 %v5250, %v6146
    %v6148 = vpop.f32.mrf.mxu0
    %v6149 = vadd.f32 %v5250, %v6148
    %6150 = vmatprep.mubr.bf16.mxu0 %v5551
    %6151 = vmatmul.mubr.bf16.gmra.mxu0 %v5550
    %v6152 = vpop.f32.mrf.mxu0
    %v6153 = vadd.f32 %v5255, %v6152
    %v6154 = vpop.f32.mrf.mxu0
    %v6155 = vadd.f32 %v5255, %v6154
    %v6156 = vpop.f32.mrf.mxu0
    %v6157 = vadd.f32 %v5260, %v6156
    %v6158 = vpop.f32.mrf.mxu0
    %v6159 = vadd.f32 %v5260, %v6158
    %6160 = vmatprep.mubr.bf16.mxu0 %v5555
    %6161 = vmatmul.mubr.bf16.gmra.mxu0 %v5554
    %v6162 = vpop.f32.mrf.mxu0
    %v6163 = vadd.f32 %v5265, %v6162
    %v6164 = vpop.f32.mrf.mxu0
    %v6165 = vadd.f32 %v5265, %v6164
    %v6166 = vpop.f32.mrf.mxu0
    %v6167 = vadd.f32 %v5270, %v6166
    %v6168 = vpop.f32.mrf.mxu0
    %v6169 = vadd.f32 %v5270, %v6168
    %6170 = vmatprep.mubr.bf16.mxu0 %v5559
    %6171 = vmatmul.mubr.bf16.gmra.mxu0 %v5558
    %v6172 = vpop.f32.mrf.mxu0
    %v6173 = vadd.f32 %v5275, %v6172
    %v6174 = vpop.f32.mrf.mxu0
    %v6175 = vadd.f32 %v5275, %v6174
    %v6176 = vpop.f32.mrf.mxu0
    %v6177 = vadd.f32 %v5280, %v6176
    %v6178 = vpop.f32.mrf.mxu0
    %v6179 = vadd.f32 %v5280, %v6178
    %6180 = vmatprep.mubr.bf16.mxu0 %v5563
    %6181 = vmatmul.mubr.bf16.gmra.mxu0 %v5562
    %v6182 = vpop.f32.mrf.mxu0
    %v6183 = vadd.f32 %v5285, %v6182
    %v6184 = vpop.f32.mrf.mxu0
    %v6185 = vadd.f32 %v5285, %v6184
    %v6186 = vpop.f32.mrf.mxu0
    %v6187 = vadd.f32 %v5290, %v6186
    %v6188 = vpop.f32.mrf.mxu0
    %v6189 = vadd.f32 %v5290, %v6188
    %6190 = vmatprep.mubr.bf16.mxu0 %v5567
    %6191 = vmatmul.mubr.bf16.gmra.mxu0 %v5566
    %v6192 = vpop.f32.mrf.mxu0
    %v6193 = vadd.f32 %v5295, %v6192
    %v6194 = vpop.f32.mrf.mxu0
    %v6195 = vadd.f32 %v5295, %v6194
    %v6196 = vpop.f32.mrf.mxu0
    %v6197 = vadd.f32 %v5300, %v6196
    %v6198 = vpop.f32.mrf.mxu0
    %v6199 = vadd.f32 %v5300, %v6198
    %6200 = vmatprep.mubr.bf16.mxu0 %v5571
    %6201 = vmatmul.mubr.bf16.gmra.mxu0 %v5570
    %v6202 = vpop.f32.mrf.mxu0
    %v6203 = vadd.f32 %v5305, %v6202
    %v6204 = vpop.f32.mrf.mxu0
    %v6205 = vadd.f32 %v5305, %v6204
    %v6206 = vpop.f32.mrf.mxu0
    %v6207 = vadd.f32 %v5310, %v6206
    %v6208 = vpop.f32.mrf.mxu0
    %v6209 = vadd.f32 %v5310, %v6208
    %6210 = vmatprep.mubr.bf16.mxu0 %v5575
    %6211 = vmatmul.mubr.bf16.gmra.mxu0 %v5574
    %v6212 = vpop.f32.mrf.mxu0
    %v6213 = vadd.f32 %v5315, %v6212
    %v6214 = vpop.f32.mrf.mxu0
    %v6215 = vadd.f32 %v5315, %v6214
    %v6216 = vpop.f32.mrf.mxu0
    %v6217 = vadd.f32 %v5320, %v6216
    %v6218 = vpop.f32.mrf.mxu0
    %v6219 = vadd.f32 %v5320, %v6218
    %6220 = vdwg.mxu0
    %6221 = vmatprep.subr.bf16.mxu0 %v5033
    %6222 = vmatpush1.bf16.msra.mxu0 %v5032
    %6223 = vmatprep.subr.bf16.mxu0 %v5029
    %6224 = vmatpush1.bf16.msra.mxu0 %v5028
    %6225 = vmatprep.subr.bf16.mxu0 %v5025
    %6226 = vmatpush1.bf16.msra.mxu0 %v5024
    %6227 = vmatprep.subr.bf16.mxu0 %v5021
    %6228 = vmatpush1.bf16.msra.mxu0 %v5020
    %6229 = vmatprep.subr.bf16.mxu0 %v5017
    %6230 = vmatpush1.bf16.msra.mxu0 %v5016
    %6231 = vmatprep.subr.bf16.mxu0 %v5013
    %6232 = vmatpush1.bf16.msra.mxu0 %v5012
    %6233 = vmatprep.subr.bf16.mxu0 %v5009
    %6234 = vmatpush1.bf16.msra.mxu0 %v5008
    %6235 = vmatprep.subr.bf16.mxu0 %v5005
    %6236 = vmatpush1.bf16.msra.mxu0 %v5004
    %6237 = vmatprep.subr.bf16.mxu0 %v5065
    %6238 = vmatpush2.bf16.msra.mxu0 %v5064
    %6239 = vmatprep.subr.bf16.mxu0 %v5061
    %6240 = vmatpush2.bf16.msra.mxu0 %v5060
    %6241 = vmatprep.subr.bf16.mxu0 %v5057
    %6242 = vmatpush2.bf16.msra.mxu0 %v5056
    %6243 = vmatprep.subr.bf16.mxu0 %v5053
    %6244 = vmatpush2.bf16.msra.mxu0 %v5052
    %6245 = vmatprep.subr.bf16.mxu0 %v5049
    %6246 = vmatpush2.bf16.msra.mxu0 %v5048
    %6247 = vmatprep.subr.bf16.mxu0 %v5045
    %6248 = vmatpush2.bf16.msra.mxu0 %v5044
    %6249 = vmatprep.subr.bf16.mxu0 %v5041
    %6250 = vmatpush2.bf16.msra.mxu0 %v5040
    %6251 = vmatprep.subr.bf16.mxu0 %v5037
    %6252 = vmatpush2.bf16.msra.mxu0 %v5036
    %6253 = vmatprep.mubr.bf16.mxu0 %v5517
    %6254 = vmatmul.mubr.bf16.gmra.mxu0 %v5516
    %v6255 = vpop.f32.mrf.mxu0
    %v6256 = vadd.f32 %v6063, %v6255
    %v6257 = vpop.f32.mrf.mxu0
    %v6258 = vadd.f32 %v6065, %v6257
    %v6259 = vpop.f32.mrf.mxu0
    %v6260 = vadd.f32 %v6067, %v6259
    %v6261 = vpop.f32.mrf.mxu0
    %v6262 = vadd.f32 %v6069, %v6261
    %6263 = vmatprep.mubr.bf16.mxu0 %v5521
    %6264 = vmatmul.mubr.bf16.gmra.mxu0 %v5520
    %v6265 = vpop.f32.mrf.mxu0
    %v6266 = vadd.f32 %v6073, %v6265
    %v6267 = vpop.f32.mrf.mxu0
    %v6268 = vadd.f32 %v6075, %v6267
    %v6269 = vpop.f32.mrf.mxu0
    %v6270 = vadd.f32 %v6077, %v6269
    %v6271 = vpop.f32.mrf.mxu0
    %v6272 = vadd.f32 %v6079, %v6271
    %6273 = vmatprep.mubr.bf16.mxu0 %v5525
    %6274 = vmatmul.mubr.bf16.gmra.mxu0 %v5524
    %v6275 = vpop.f32.mrf.mxu0
    %v6276 = vadd.f32 %v6083, %v6275
    %v6277 = vpop.f32.mrf.mxu0
    %v6278 = vadd.f32 %v6085, %v6277
    %v6279 = vpop.f32.mrf.mxu0
    %v6280 = vadd.f32 %v6087, %v6279
    %v6281 = vpop.f32.mrf.mxu0
    %v6282 = vadd.f32 %v6089, %v6281
    %6283 = vmatprep.mubr.bf16.mxu0 %v5529
    %6284 = vmatmul.mubr.bf16.gmra.mxu0 %v5528
    %v6285 = vpop.f32.mrf.mxu0
    %v6286 = vadd.f32 %v6093, %v6285
    %v6287 = vpop.f32.mrf.mxu0
    %v6288 = vadd.f32 %v6095, %v6287
    %v6289 = vpop.f32.mrf.mxu0
    %v6290 = vadd.f32 %v6097, %v6289
    %v6291 = vpop.f32.mrf.mxu0
    %v6292 = vadd.f32 %v6099, %v6291
    %6293 = vmatprep.mubr.bf16.mxu0 %v5533
    %6294 = vmatmul.mubr.bf16.gmra.mxu0 %v5532
    %v6295 = vpop.f32.mrf.mxu0
    %v6296 = vadd.f32 %v6103, %v6295
    %v6297 = vpop.f32.mrf.mxu0
    %v6298 = vadd.f32 %v6105, %v6297
    %v6299 = vpop.f32.mrf.mxu0
    %v6300 = vadd.f32 %v6107, %v6299
    %v6301 = vpop.f32.mrf.mxu0
    %v6302 = vadd.f32 %v6109, %v6301
    %6303 = vmatprep.mubr.bf16.mxu0 %v5537
    %6304 = vmatmul.mubr.bf16.gmra.mxu0 %v5536
    %v6305 = vpop.f32.mrf.mxu0
    %v6306 = vadd.f32 %v6113, %v6305
    %v6307 = vpop.f32.mrf.mxu0
    %v6308 = vadd.f32 %v6115, %v6307
    %v6309 = vpop.f32.mrf.mxu0
    %v6310 = vadd.f32 %v6117, %v6309
    %v6311 = vpop.f32.mrf.mxu0
    %v6312 = vadd.f32 %v6119, %v6311
    %6313 = vmatprep.mubr.bf16.mxu0 %v5541
    %6314 = vmatmul.mubr.bf16.gmra.mxu0 %v5540
    %v6315 = vpop.f32.mrf.mxu0
    %v6316 = vadd.f32 %v6123, %v6315
    %v6317 = vpop.f32.mrf.mxu0
    %v6318 = vadd.f32 %v6125, %v6317
    %v6319 = vpop.f32.mrf.mxu0
    %v6320 = vadd.f32 %v6127, %v6319
    %v6321 = vpop.f32.mrf.mxu0
    %v6322 = vadd.f32 %v6129, %v6321
    %6323 = vmatprep.mubr.bf16.mxu0 %v5545
    %6324 = vmatmul.mubr.bf16.gmra.mxu0 %v5544
    %v6325 = vpop.f32.mrf.mxu0
    %v6326 = vadd.f32 %v6133, %v6325
    %v6327 = vpop.f32.mrf.mxu0
    %v6328 = vadd.f32 %v6135, %v6327
    %v6329 = vpop.f32.mrf.mxu0
    %v6330 = vadd.f32 %v6137, %v6329
    %v6331 = vpop.f32.mrf.mxu0
    %v6332 = vadd.f32 %v6139, %v6331
    %6333 = vmatprep.mubr.bf16.mxu0 %v5549
    %6334 = vmatmul.mubr.bf16.gmra.mxu0 %v5548
    %v6335 = vpop.f32.mrf.mxu0
    %v6336 = vadd.f32 %v6143, %v6335
    %v6337 = vpop.f32.mrf.mxu0
    %v6338 = vadd.f32 %v6145, %v6337
    %v6339 = vpop.f32.mrf.mxu0
    %v6340 = vadd.f32 %v6147, %v6339
    %v6341 = vpop.f32.mrf.mxu0
    %v6342 = vadd.f32 %v6149, %v6341
    %6343 = vmatprep.mubr.bf16.mxu0 %v5553
    %6344 = vmatmul.mubr.bf16.gmra.mxu0 %v5552
    %v6345 = vpop.f32.mrf.mxu0
    %v6346 = vadd.f32 %v6153, %v6345
    %v6347 = vpop.f32.mrf.mxu0
    %v6348 = vadd.f32 %v6155, %v6347
    %v6349 = vpop.f32.mrf.mxu0
    %v6350 = vadd.f32 %v6157, %v6349
    %v6351 = vpop.f32.mrf.mxu0
    %v6352 = vadd.f32 %v6159, %v6351
    %6353 = vmatprep.mubr.bf16.mxu0 %v5557
    %6354 = vmatmul.mubr.bf16.gmra.mxu0 %v5556
    %v6355 = vpop.f32.mrf.mxu0
    %v6356 = vadd.f32 %v6163, %v6355
    %v6357 = vpop.f32.mrf.mxu0
    %v6358 = vadd.f32 %v6165, %v6357
    %v6359 = vpop.f32.mrf.mxu0
    %v6360 = vadd.f32 %v6167, %v6359
    %v6361 = vpop.f32.mrf.mxu0
    %v6362 = vadd.f32 %v6169, %v6361
    %6363 = vmatprep.mubr.bf16.mxu0 %v5561
    %6364 = vmatmul.mubr.bf16.gmra.mxu0 %v5560
    %v6365 = vpop.f32.mrf.mxu0
    %v6366 = vadd.f32 %v6173, %v6365
    %v6367 = vpop.f32.mrf.mxu0
    %v6368 = vadd.f32 %v6175, %v6367
    %v6369 = vpop.f32.mrf.mxu0
    %v6370 = vadd.f32 %v6177, %v6369
    %v6371 = vpop.f32.mrf.mxu0
    %v6372 = vadd.f32 %v6179, %v6371
    %6373 = vmatprep.mubr.bf16.mxu0 %v5565
    %6374 = vmatmul.mubr.bf16.gmra.mxu0 %v5564
    %v6375 = vpop.f32.mrf.mxu0
    %v6376 = vadd.f32 %v6183, %v6375
    %v6377 = vpop.f32.mrf.mxu0
    %v6378 = vadd.f32 %v6185, %v6377
    %v6379 = vpop.f32.mrf.mxu0
    %v6380 = vadd.f32 %v6187, %v6379
    %v6381 = vpop.f32.mrf.mxu0
    %v6382 = vadd.f32 %v6189, %v6381
    %6383 = vmatprep.mubr.bf16.mxu0 %v5569
    %6384 = vmatmul.mubr.bf16.gmra.mxu0 %v5568
    %v6385 = vpop.f32.mrf.mxu0
    %v6386 = vadd.f32 %v6193, %v6385
    %v6387 = vpop.f32.mrf.mxu0
    %v6388 = vadd.f32 %v6195, %v6387
    %v6389 = vpop.f32.mrf.mxu0
    %v6390 = vadd.f32 %v6197, %v6389
    %v6391 = vpop.f32.mrf.mxu0
    %v6392 = vadd.f32 %v6199, %v6391
    %6393 = vmatprep.mubr.bf16.mxu0 %v5573
    %6394 = vmatmul.mubr.bf16.gmra.mxu0 %v5572
    %v6395 = vpop.f32.mrf.mxu0
    %v6396 = vadd.f32 %v6203, %v6395
    %v6397 = vpop.f32.mrf.mxu0
    %v6398 = vadd.f32 %v6205, %v6397
    %v6399 = vpop.f32.mrf.mxu0
    %v6400 = vadd.f32 %v6207, %v6399
    %v6401 = vpop.f32.mrf.mxu0
    %v6402 = vadd.f32 %v6209, %v6401
    %6403 = vmatprep.mubr.bf16.mxu0 %v5577
    %6404 = vmatmul.mubr.bf16.gmra.mxu0 %v5576
    %v6405 = vpop.f32.mrf.mxu0
    %v6406 = vadd.f32 %v6213, %v6405
    %v6407 = vpop.f32.mrf.mxu0
    %v6408 = vadd.f32 %v6215, %v6407
    %v6409 = vpop.f32.mrf.mxu0
    %v6410 = vadd.f32 %v6217, %v6409
    %v6411 = vpop.f32.mrf.mxu0
    %v6412 = vadd.f32 %v6219, %v6411
    %6413 = vdwg.mxu0
    %v6414 = vtanh.pop %v5870
    %v6415 = vtanh.pop %v5872
    %v6416 = vtanh.pop %v6256
    %v6417 = vtanh.pop %v6258
    %v6418 = vtanh.pop %v5874
    %v6419 = vtanh.pop %v5876
    %v6420 = vtanh.pop %v6260
    %v6421 = vtanh.pop %v6262
    %v6422 = vtanh.pop %v5880
    %v6423 = vtanh.pop %v5882
    %v6424 = vtanh.pop %v6266
    %v6425 = vtanh.pop %v6268
    %v6426 = vtanh.pop %v5884
    %v6427 = vtanh.pop %v5886
    %v6428 = vtanh.pop %v6270
    %v6429 = vtanh.pop %v6272
    %v6430 = vtanh.pop %v5890
    %v6431 = vtanh.pop %v5892
    %v6432 = vtanh.pop %v6276
    %v6433 = vtanh.pop %v6278
    %v6434 = vtanh.pop %v5894
    %v6435 = vtanh.pop %v5896
    %v6436 = vtanh.pop %v6280
    %v6437 = vtanh.pop %v6282
    %v6438 = vtanh.pop %v5900
    %v6439 = vtanh.pop %v5902
    %v6440 = vtanh.pop %v6286
    %v6441 = vtanh.pop %v6288
    %v6442 = vtanh.pop %v5904
    %v6443 = vtanh.pop %v5906
    %v6444 = vtanh.pop %v6290
    %v6445 = vtanh.pop %v6292
    %v6446 = vtanh.pop %v5910
    %v6447 = vtanh.pop %v5912
    %v6448 = vtanh.pop %v6296
    %v6449 = vtanh.pop %v6298
    %v6450 = vtanh.pop %v5914
    %v6451 = vtanh.pop %v5916
    %v6452 = vtanh.pop %v6300
    %v6453 = vtanh.pop %v6302
    %v6454 = vtanh.pop %v5920
    %v6455 = vtanh.pop %v5922
    %v6456 = vtanh.pop %v6306
    %v6457 = vtanh.pop %v6308
    %v6458 = vtanh.pop %v5924
    %v6459 = vtanh.pop %v5926
    %v6460 = vtanh.pop %v6310
    %v6461 = vtanh.pop %v6312
    %v6462 = vtanh.pop %v5930
    %v6463 = vtanh.pop %v5932
    %v6464 = vtanh.pop %v6316
    %v6465 = vtanh.pop %v6318
    %v6466 = vtanh.pop %v5934
    %v6467 = vtanh.pop %v5936
    %v6468 = vtanh.pop %v6320
    %v6469 = vtanh.pop %v6322
    %v6470 = vtanh.pop %v5940
    %v6471 = vtanh.pop %v5942
    %v6472 = vtanh.pop %v6326
    %v6473 = vtanh.pop %v6328
    %v6474 = vtanh.pop %v5944
    %v6475 = vtanh.pop %v5946
    %v6476 = vtanh.pop %v6330
    %v6477 = vtanh.pop %v6332
    %v6478 = vtanh.pop %v5950
    %v6479 = vtanh.pop %v5952
    %v6480 = vtanh.pop %v6336
    %v6481 = vtanh.pop %v6338
    %v6482 = vtanh.pop %v5954
    %v6483 = vtanh.pop %v5956
    %v6484 = vtanh.pop %v6340
    %v6485 = vtanh.pop %v6342
    %v6486 = vtanh.pop %v5960
    %v6487 = vtanh.pop %v5962
    %v6488 = vtanh.pop %v6346
    %v6489 = vtanh.pop %v6348
    %v6490 = vtanh.pop %v5964
    %v6491 = vtanh.pop %v5966
    %v6492 = vtanh.pop %v6350
    %v6493 = vtanh.pop %v6352
    %v6494 = vtanh.pop %v5970
    %v6495 = vtanh.pop %v5972
    %v6496 = vtanh.pop %v6356
    %v6497 = vtanh.pop %v6358
    %v6498 = vtanh.pop %v5974
    %v6499 = vtanh.pop %v5976
    %v6500 = vtanh.pop %v6360
    %v6501 = vtanh.pop %v6362
    %v6502 = vtanh.pop %v5980
    %v6503 = vtanh.pop %v5982
    %v6504 = vtanh.pop %v6366
    %v6505 = vtanh.pop %v6368
    %v6506 = vtanh.pop %v5984
    %v6507 = vtanh.pop %v5986
    %v6508 = vtanh.pop %v6370
    %v6509 = vtanh.pop %v6372
    %v6510 = vtanh.pop %v5990
    %v6511 = vtanh.pop %v5992
    %v6512 = vtanh.pop %v6376
    %v6513 = vtanh.pop %v6378
    %v6514 = vtanh.pop %v5994
    %v6515 = vtanh.pop %v5996
    %v6516 = vtanh.pop %v6380
    %v6517 = vtanh.pop %v6382
    %v6518 = vtanh.pop %v6000
    %v6519 = vtanh.pop %v6002
    %v6520 = vtanh.pop %v6386
    %v6521 = vtanh.pop %v6388
    %v6522 = vtanh.pop %v6004
    %v6523 = vtanh.pop %v6006
    %v6524 = vtanh.pop %v6390
    %v6525 = vtanh.pop %v6392
    %v6526 = vtanh.pop %v6010
    %v6527 = vtanh.pop %v6012
    %v6528 = vtanh.pop %v6396
    %v6529 = vtanh.pop %v6398
    %v6530 = vtanh.pop %v6014
    %v6531 = vtanh.pop %v6016
    %v6532 = vtanh.pop %v6400
    %v6533 = vtanh.pop %v6402
    %v6534 = vtanh.pop %v6020
    %v6535 = vtanh.pop %v6022
    %v6536 = vtanh.pop %v6406
    %v6537 = vtanh.pop %v6408
    %v6538 = vtanh.pop %v6024
    %v6539 = vtanh.pop %v6026
    %v6540 = vtanh.pop %v6410
    %v6541 = vtanh.pop %v6412
    %6542 = vst [vmem:[#allocation8] sm:$0xff] %v6414
    %6543 = vst [vmem:[#allocation8 + $0x8] sm:$0xff] %v6415
    %6544 = vst [vmem:[#allocation8 + $0x10] sm:$0xff] %v6416
    %6545 = vst [vmem:[#allocation8 + $0x18] sm:$0xff] %v6417
    %6546 = vst [vmem:[#allocation8 + $0x20] sm:$0xff] %v6418
    %6547 = vst [vmem:[#allocation8 + $0x28] sm:$0xff] %v6419
    %6548 = vst [vmem:[#allocation8 + $0x30] sm:$0xff] %v6420
    %6549 = vst [vmem:[#allocation8 + $0x38] sm:$0xff] %v6421
    %6550 = vst [vmem:[#allocation8 + $0x40] sm:$0xff] %v6422
    %6551 = vst [vmem:[#allocation8 + $0x48] sm:$0xff] %v6423
    %6552 = vst [vmem:[#allocation8 + $0x50] sm:$0xff] %v6424
    %6553 = vst [vmem:[#allocation8 + $0x58] sm:$0xff] %v6425
    %6554 = vst [vmem:[#allocation8 + $0x60] sm:$0xff] %v6426
    %6555 = vst [vmem:[#allocation8 + $0x68] sm:$0xff] %v6427
    %6556 = vst [vmem:[#allocation8 + $0x70] sm:$0xff] %v6428
    %6557 = vst [vmem:[#allocation8 + $0x78] sm:$0xff] %v6429
    %6558 = vst [vmem:[#allocation8 + $0x80] sm:$0xff] %v6430
    %6559 = vst [vmem:[#allocation8 + $0x88] sm:$0xff] %v6431
    %6560 = vst [vmem:[#allocation8 + $0x90] sm:$0xff] %v6432
    %6561 = vst [vmem:[#allocation8 + $0x98] sm:$0xff] %v6433
    %6562 = vst [vmem:[#allocation8 + $0xa0] sm:$0xff] %v6434
    %6563 = vst [vmem:[#allocation8 + $0xa8] sm:$0xff] %v6435
    %6564 = vst [vmem:[#allocation8 + $0xb0] sm:$0xff] %v6436
    %6565 = vst [vmem:[#allocation8 + $0xb8] sm:$0xff] %v6437
    %6566 = vst [vmem:[#allocation8 + $0xc0] sm:$0xff] %v6438
    %6567 = vst [vmem:[#allocation8 + $0xc8] sm:$0xff] %v6439
    %6568 = vst [vmem:[#allocation8 + $0xd0] sm:$0xff] %v6440
    %6569 = vst [vmem:[#allocation8 + $0xd8] sm:$0xff] %v6441
    %6570 = vst [vmem:[#allocation8 + $0xe0] sm:$0xff] %v6442
    %6571 = vst [vmem:[#allocation8 + $0xe8] sm:$0xff] %v6443
    %6572 = vst [vmem:[#allocation8 + $0xf0] sm:$0xff] %v6444
    %6573 = vst [vmem:[#allocation8 + $0xf8] sm:$0xff] %v6445
    %6574 = vst [vmem:[#allocation8 + $0x100] sm:$0xff] %v6446
    %6575 = vst [vmem:[#allocation8 + $0x108] sm:$0xff] %v6447
    %6576 = vst [vmem:[#allocation8 + $0x110] sm:$0xff] %v6448
    %6577 = vst [vmem:[#allocation8 + $0x118] sm:$0xff] %v6449
    %6578 = vst [vmem:[#allocation8 + $0x120] sm:$0xff] %v6450
    %6579 = vst [vmem:[#allocation8 + $0x128] sm:$0xff] %v6451
    %6580 = vst [vmem:[#allocation8 + $0x130] sm:$0xff] %v6452
    %6581 = vst [vmem:[#allocation8 + $0x138] sm:$0xff] %v6453
    %6582 = vst [vmem:[#allocation8 + $0x140] sm:$0xff] %v6454
    %6583 = vst [vmem:[#allocation8 + $0x148] sm:$0xff] %v6455
    %6584 = vst [vmem:[#allocation8 + $0x150] sm:$0xff] %v6456
    %6585 = vst [vmem:[#allocation8 + $0x158] sm:$0xff] %v6457
    %6586 = vst [vmem:[#allocation8 + $0x160] sm:$0xff] %v6458
    %6587 = vst [vmem:[#allocation8 + $0x168] sm:$0xff] %v6459
    %6588 = vst [vmem:[#allocation8 + $0x170] sm:$0xff] %v6460
    %6589 = vst [vmem:[#allocation8 + $0x178] sm:$0xff] %v6461
    %6590 = vst [vmem:[#allocation8 + $0x180] sm:$0xff] %v6462
    %6591 = vst [vmem:[#allocation8 + $0x188] sm:$0xff] %v6463
    %6592 = vst [vmem:[#allocation8 + $0x190] sm:$0xff] %v6464
    %6593 = vst [vmem:[#allocation8 + $0x198] sm:$0xff] %v6465
    %6594 = vst [vmem:[#allocation8 + $0x1a0] sm:$0xff] %v6466
    %6595 = vst [vmem:[#allocation8 + $0x1a8] sm:$0xff] %v6467
    %6596 = vst [vmem:[#allocation8 + $0x1b0] sm:$0xff] %v6468
    %6597 = vst [vmem:[#allocation8 + $0x1b8] sm:$0xff] %v6469
    %6598 = vst [vmem:[#allocation8 + $0x1c0] sm:$0xff] %v6470
    %6599 = vst [vmem:[#allocation8 + $0x1c8] sm:$0xff] %v6471
    %6600 = vst [vmem:[#allocation8 + $0x1d0] sm:$0xff] %v6472
    %6601 = vst [vmem:[#allocation8 + $0x1d8] sm:$0xff] %v6473
    %6602 = vst [vmem:[#allocation8 + $0x1e0] sm:$0xff] %v6474
    %6603 = vst [vmem:[#allocation8 + $0x1e8] sm:$0xff] %v6475
    %6604 = vst [vmem:[#allocation8 + $0x1f0] sm:$0xff] %v6476
    %6605 = vst [vmem:[#allocation8 + $0x1f8] sm:$0xff] %v6477
    %6606 = vst [vmem:[#allocation8 + $0x200] sm:$0xff] %v6478
    %6607 = vst [vmem:[#allocation8 + $0x208] sm:$0xff] %v6479
    %6608 = vst [vmem:[#allocation8 + $0x210] sm:$0xff] %v6480
    %6609 = vst [vmem:[#allocation8 + $0x218] sm:$0xff] %v6481
    %6610 = vst [vmem:[#allocation8 + $0x220] sm:$0xff] %v6482
    %6611 = vst [vmem:[#allocation8 + $0x228] sm:$0xff] %v6483
    %6612 = vst [vmem:[#allocation8 + $0x230] sm:$0xff] %v6484
    %6613 = vst [vmem:[#allocation8 + $0x238] sm:$0xff] %v6485
    %6614 = vst [vmem:[#allocation8 + $0x240] sm:$0xff] %v6486
    %6615 = vst [vmem:[#allocation8 + $0x248] sm:$0xff] %v6487
    %6616 = vst [vmem:[#allocation8 + $0x250] sm:$0xff] %v6488
    %6617 = vst [vmem:[#allocation8 + $0x258] sm:$0xff] %v6489
    %6618 = vst [vmem:[#allocation8 + $0x260] sm:$0xff] %v6490
    %6619 = vst [vmem:[#allocation8 + $0x268] sm:$0xff] %v6491
    %6620 = vst [vmem:[#allocation8 + $0x270] sm:$0xff] %v6492
    %6621 = vst [vmem:[#allocation8 + $0x278] sm:$0xff] %v6493
    %6622 = vst [vmem:[#allocation8 + $0x280] sm:$0xff] %v6494
    %6623 = vst [vmem:[#allocation8 + $0x288] sm:$0xff] %v6495
    %6624 = vst [vmem:[#allocation8 + $0x290] sm:$0xff] %v6496
    %6625 = vst [vmem:[#allocation8 + $0x298] sm:$0xff] %v6497
    %6626 = vst [vmem:[#allocation8 + $0x2a0] sm:$0xff] %v6498
    %6627 = vst [vmem:[#allocation8 + $0x2a8] sm:$0xff] %v6499
    %6628 = vst [vmem:[#allocation8 + $0x2b0] sm:$0xff] %v6500
    %6629 = vst [vmem:[#allocation8 + $0x2b8] sm:$0xff] %v6501
    %6630 = vst [vmem:[#allocation8 + $0x2c0] sm:$0xff] %v6502
    %6631 = vst [vmem:[#allocation8 + $0x2c8] sm:$0xff] %v6503
    %6632 = vst [vmem:[#allocation8 + $0x2d0] sm:$0xff] %v6504
    %6633 = vst [vmem:[#allocation8 + $0x2d8] sm:$0xff] %v6505
    %6634 = vst [vmem:[#allocation8 + $0x2e0] sm:$0xff] %v6506
    %6635 = vst [vmem:[#allocation8 + $0x2e8] sm:$0xff] %v6507
    %6636 = vst [vmem:[#allocation8 + $0x2f0] sm:$0xff] %v6508
    %6637 = vst [vmem:[#allocation8 + $0x2f8] sm:$0xff] %v6509
    %6638 = vst [vmem:[#allocation8 + $0x300] sm:$0xff] %v6510
    %6639 = vst [vmem:[#allocation8 + $0x308] sm:$0xff] %v6511
    %6640 = vst [vmem:[#allocation8 + $0x310] sm:$0xff] %v6512
    %6641 = vst [vmem:[#allocation8 + $0x318] sm:$0xff] %v6513
    %6642 = vst [vmem:[#allocation8 + $0x320] sm:$0xff] %v6514
    %6643 = vst [vmem:[#allocation8 + $0x328] sm:$0xff] %v6515
    %6644 = vst [vmem:[#allocation8 + $0x330] sm:$0xff] %v6516
    %6645 = vst [vmem:[#allocation8 + $0x338] sm:$0xff] %v6517
    %6646 = vst [vmem:[#allocation8 + $0x340] sm:$0xff] %v6518
    %6647 = vst [vmem:[#allocation8 + $0x348] sm:$0xff] %v6519
    %6648 = vst [vmem:[#allocation8 + $0x350] sm:$0xff] %v6520
    %6649 = vst [vmem:[#allocation8 + $0x358] sm:$0xff] %v6521
    %6650 = vst [vmem:[#allocation8 + $0x360] sm:$0xff] %v6522
    %6651 = vst [vmem:[#allocation8 + $0x368] sm:$0xff] %v6523
    %6652 = vst [vmem:[#allocation8 + $0x370] sm:$0xff] %v6524
    %6653 = vst [vmem:[#allocation8 + $0x378] sm:$0xff] %v6525
    %6654 = vst [vmem:[#allocation8 + $0x380] sm:$0xff] %v6526
    %6655 = vst [vmem:[#allocation8 + $0x388] sm:$0xff] %v6527
    %6656 = vst [vmem:[#allocation8 + $0x390] sm:$0xff] %v6528
    %6657 = vst [vmem:[#allocation8 + $0x398] sm:$0xff] %v6529
    %6658 = vst [vmem:[#allocation8 + $0x3a0] sm:$0xff] %v6530
    %6659 = vst [vmem:[#allocation8 + $0x3a8] sm:$0xff] %v6531
    %6660 = vst [vmem:[#allocation8 + $0x3b0] sm:$0xff] %v6532
    %6661 = vst [vmem:[#allocation8 + $0x3b8] sm:$0xff] %v6533
    %6662 = vst [vmem:[#allocation8 + $0x3c0] sm:$0xff] %v6534
    %6663 = vst [vmem:[#allocation8 + $0x3c8] sm:$0xff] %v6535
    %6664 = vst [vmem:[#allocation8 + $0x3d0] sm:$0xff] %v6536
    %6665 = vst [vmem:[#allocation8 + $0x3d8] sm:$0xff] %v6537
    %6666 = vst [vmem:[#allocation8 + $0x3e0] sm:$0xff] %v6538
    %6667 = vst [vmem:[#allocation8 + $0x3e8] sm:$0xff] %v6539
    %6668 = vst [vmem:[#allocation8 + $0x3f0] sm:$0xff] %v6540
    %6669 = vst [vmem:[#allocation8 + $0x3f8] sm:$0xff] %v6541
    // Predicated region
    $region42: #{tpu_custom_call.1} parent=1 // pred_check
      _
    $region43: #{tpu_custom_call.1} parent=1 // pred_check_branch
      %6671 = sbr.rel (0) target = $region45
    $region44: #{tpu_custom_call.1} parent=1 // pred_region
      %s6673 = ssub.s32 16384, 16384
      %6674 = vsyncadd [#allocation4], %s6673
      %s6675 = sshll.u32 [#allocation8], 4
      %s6676 = int_to_ptr.vmem [resolvable:$true] %s6675
      %6681 = dma.vmem_to_hbm [thread:$0]  %s6676, 16384, %s7, [#allocation4], 512, 512, 32
    $region45: #{tpu_custom_call.1} parent=1 // pred_fallthru
      _
    // Predicated region
    $region46: #{tpu_custom_call.1} parent=1 // pred_check
      _
    $region47: #{tpu_custom_call.1} parent=1 // pred_check_branch
      %6683 = sbr.rel (0) target = $region49
    $region48: #{tpu_custom_call.1} parent=1 // pred_region
      %6684 = dma.done [#allocation4], 16384
    $region49: #{tpu_custom_call.1} parent=1 // pred_fallthru
      _
    %6685 = vsyncpa [#allocation3], 1
    %6686 = vsyncpa [#allocation6], 1
    %6687 = vsyncpa [#allocation4], 1

</llo_original>
